<compile_context>
chip_gen: v7x
topology: tpu7x:2x2x1
jax: 0.10.0
libtpu: 0.0.40
codegen_flags: <defaults>
</compile_context>

<pallas_src>
import functools

import jax
import jax.numpy as jnp
from jax.experimental import pallas as pl
from jax.experimental.pallas import tpu as pltpu

D = 512          # model width (Linear(512,...), LayerNorm(512))
LN_EPS = 1e-5    # PyTorch nn.LayerNorm default eps


def _round_up(x, m):
    return ((x + m - 1) // m) * m


def _layernorm_fused(x, gamma, beta):
    # Single-pass LayerNorm: var = E[x^2] - mu^2 (one fewer full-tile f32
    # temporary and lane reduction than the two-pass (x - mu) form).
    mu = jnp.mean(x, axis=-1, keepdims=True)
    var = jnp.maximum(jnp.mean(x * x, axis=-1, keepdims=True) - mu * mu, 0.0)
    return (x - mu) * jax.lax.rsqrt(var + LN_EPS) * gamma + beta


def gsfusion_kernel(
    ax_ref, vx_ref, dense_ref,
    w1a_ref, w1v_ref, b1_ref,          # gate Linear(1024 -> 512), split into ax/vx halves (bf16)
    w2_ref, b2_ref,                    # gate Linear(512 -> 512)                       (bf16)
    wp_ref, bp_ref, alpha_ref,         # projection Linear(512 -> 512) (bf16) + PReLU alpha (SMEM)
    gp_ref, betap_ref,                 # projection LayerNorm (f32)
    go_ref, betao_ref,                 # final LayerNorm (f32)
    ax_out_ref, dense_out_ref,
):
    # Load each row stream exactly once; derive both precisions from that load.
    ax_in = ax_ref[...]
    vx_in = vx_ref[...]
    ax_bf = ax_in.astype(jnp.bfloat16)          # MXU operand
    vx_bf = vx_in.astype(jnp.bfloat16)          # MXU operand (only use of vx)
    ax = ax_in.astype(jnp.float32)              # f32 elementwise / residual path
    dense = dense_ref[...].astype(jnp.float32)

    # gate: sigmoid(W2 @ relu(W1 @ cat([ax, vx]) + b1) + b2); cat + matmul is
    # computed as two matmuls against the split weight halves (f32 accumulate).
    h = (jnp.dot(ax_bf, w1a_ref[...], preferred_element_type=jnp.float32)
         + jnp.dot(vx_bf, w1v_ref[...], preferred_element_type=jnp.float32)
         + b1_ref[...])
    h = jnp.maximum(h, 0.0)
    g = (jnp.dot(h.astype(jnp.bfloat16), w2_ref[...],
                 preferred_element_type=jnp.float32)
         + b2_ref[...])
    g = jax.nn.sigmoid(g)

    # dense_audio = dense_audio + ax ; ax = ax * gate   (pure f32)
    dense_new = dense + ax
    axg = ax * g

    # projection_block: Linear -> PReLU -> LayerNorm
    p = (jnp.dot(axg.astype(jnp.bfloat16), wp_ref[...],
                 preferred_element_type=jnp.float32)
         + bp_ref[...])
    alpha = alpha_ref[0, 0]                     # scalar from SMEM
    p = jnp.where(p >= 0.0, p, alpha * p)       # PReLU (single shared alpha)
    p = _layernorm_fused(p, gp_ref[...], betap_ref[...])

    # ax = layernorm(projection(ax) + dense_audio)
    out = _layernorm_fused(p + dense_new, go_ref[...], betao_ref[...])

    ax_out_ref[...] = out.astype(ax_out_ref.dtype)
    dense_out_ref[...] = dense_new.astype(dense_out_ref.dtype)


@functools.lru_cache(maxsize=None)
def _hw_defaults():
    """(row tile, scoped-VMEM budget, split-for-two-cores) per TPU generation.

    v5e / v6e (128 MiB VMEM, 1 TC): tm=512, 48 MiB.
    v7x (64 MiB VMEM, 2 TCs) or unknown: tm=256, 32 MiB, and ensure the
    "parallel" grid axis has >= 2 steps so both TensorCores get work.
    """
    try:
        cap = int(pltpu.get_tpu_info().vmem_capacity_bytes)
    except Exception:
        cap = 0
    if cap >= 100 * 1024 * 1024:
        return 512, 48 * 1024 * 1024, False
    return 256, 32 * 1024 * 1024, True


def _pick_tile(BT, tm_hw, split_for_cores):
    bt8 = _round_up(max(BT, 1), 8)
    tm = min(tm_hw, bt8)
    if split_for_cores and bt8 >= 16:
        # Cap so the grid has >= 2 steps -> both v7x TensorCores are fed.
        tm = min(tm, _round_up(pl.cdiv(bt8, 2), 8))
    return max(tm, 8)


@functools.partial(jax.jit, static_argnames=("tm", "vmem_limit_bytes"))
def _gsfusion_call(vx, ax, dense_audio, kparams, tm, vmem_limit_bytes):
    B, T, d = ax.shape
    assert d == D
    BT = B * T

    ax2 = ax.reshape(BT, D)
    vx2 = vx.reshape(BT, D)
    de2 = dense_audio.reshape(BT, D)

    row_spec = pl.BlockSpec((tm, D), lambda i: (i, 0))
    full_mat = pl.BlockSpec((D, D), lambda i: (0, 0))       # grid-invariant: DMA'd once
    full_vec = pl.BlockSpec((1, D), lambda i: (0, 0))
    smem_scalar = pl.BlockSpec(memory_space=pltpu.MemorySpace.SMEM)

    ax_out, dense_out = pl.pallas_call(
        gsfusion_kernel,
        out_shape=(
            jax.ShapeDtypeStruct((BT, D), ax.dtype),           # bf16 when ax is bf16
            jax.ShapeDtypeStruct((BT, D), dense_audio.dtype),  # f32 residual stream
        ),
        grid_spec=pltpu.PrefetchScalarGridSpec(
            num_scalar_prefetch=0,
            grid=(pl.cdiv(BT, tm),),                           # partial last block handled by Pallas
            in_specs=[
                row_spec, row_spec, row_spec,                  # ax, vx, dense
                full_mat, full_mat, full_vec,                  # w1a, w1v, b1
                full_mat, full_vec,                            # w2, b2
                full_mat, full_vec, smem_scalar,               # wp, bp, prelu alpha (SMEM)
                full_vec, full_vec,                            # proj LN gamma/beta
                full_vec, full_vec,                            # final LN gamma/beta
            ],
            out_specs=[row_spec, row_spec],
        ),
        compiler_params=pltpu.CompilerParams(
            dimension_semantics=("parallel",),
            vmem_limit_bytes=vmem_limit_bytes,
        ),
    )(
        ax2, vx2, de2,
        kparams["w1a"], kparams["w1v"], kparams["b1"],
        kparams["w2"], kparams["b2"],
        kparams["wp"], kparams["bp"], kparams["alpha"],
        kparams["gp"], kparams["betap"],
        kparams["go"], kparams["betao"],
    )
    return ax_out.reshape(B, T, D), dense_out.reshape(B, T, D)


def gsfusion_pallas(vx, ax, dense_audio, kparams, tm=None):
    """x = (vx, ax); returns (ax_out, dense_audio_out) like GSFusion.forward."""
    BT = ax.shape[0] * ax.shape[1]
    tm_hw, vmem, split_cores = _hw_defaults()
    if tm is None:
        tm = _pick_tile(BT, tm_hw, split_cores)
    else:
        tm = max(8, _round_up(min(tm, _round_up(BT, 8)), 8))
    return _gsfusion_call(vx, ax, dense_audio, kparams, tm, vmem)


# ----------------------------- reference & params ---------------------------

def _layernorm_ref(x, gamma, beta):
    mu = jnp.mean(x, axis=-1, keepdims=True)
    var = jnp.mean((x - mu) * (x - mu), axis=-1, keepdims=True)
    return (x - mu) * jax.lax.rsqrt(var + LN_EPS) * gamma + beta


def gsfusion_reference(vx, ax, dense_audio, params):
    """Pure-JAX f32 reference matching the PyTorch forward semantics."""
    vx = vx.astype(jnp.float32)
    ax = ax.astype(jnp.float32)
    dense_audio = dense_audio.astype(jnp.float32)
    cat = jnp.concatenate([ax, vx], axis=2)                       # [B, T, 1024]
    w1 = jnp.concatenate([params["w1a"], params["w1v"]], axis=0)  # [1024, 512]
    h = jnp.maximum(cat @ w1 + params["b1"], 0.0)
    g = jax.nn.sigmoid(h @ params["w2"] + params["b2"])
    dense_new = dense_audio + ax
    axg = ax * g
    p = axg @ params["wp"] + params["bp"]
    p = jnp.where(p >= 0.0, p, params["alpha"][0, 0] * p)
    p = _layernorm_ref(p, params["gp"], params["betap"])
    out = _layernorm_ref(p + dense_new, params["go"], params["betao"])
    return out, dense_new


def init_params(key):
    ks = jax.random.split(key, 6)
    scale = 0.02
    # Weights stored as [in, out] (already transposed vs. torch's [out, in]).
    w1 = jax.random.normal(ks[0], (2 * D, D), jnp.float32) * scale   # gate Linear(1024, 512)
    return {
        "w1a": w1[:D, :],                                             # applied to ax (cat is [ax, vx])
        "w1v": w1[D:, :],                                             # applied to vx
        "b1": jax.random.normal(ks[1], (1, D), jnp.float32) * scale,
        "w2": jax.random.normal(ks[2], (D, D), jnp.float32) * scale,  # gate Linear(512, 512)
        "b2": jax.random.normal(ks[3], (1, D), jnp.float32) * scale,
        "wp": jax.random.normal(ks[4], (D, D), jnp.float32) * scale,  # projection Linear(512, 512)
        "bp": jax.random.normal(ks[5], (1, D), jnp.float32) * scale,
        "alpha": jnp.full((1, 1), 0.25, jnp.float32),                 # PReLU default init
        "gp": jnp.ones((1, D), jnp.float32),
        "betap": jnp.zeros((1, D), jnp.float32),
        "go": jnp.ones((1, D), jnp.float32),
        "betao": jnp.zeros((1, D), jnp.float32),
    }


def prepare_params(params):
    """One-time conversion to kernel-ready form: MXU weights pre-cast to bf16
    (outside the per-call path); biases / LN params / alpha stay f32."""
    kp = dict(params)
    for name in ("w1a", "w1v", "w2", "wp"):
        kp[name] = params[name].astype(jnp.bfloat16)
    return kp


# ---------------------------------- test ------------------------------------

if __name__ == "__main__":
    root = jax.random.PRNGKey(0)
    kparam_key, kdata = jax.random.split(root)

    params = init_params(kparam_key)      # f32 master copy (reference)
    kparams = prepare_params(params)      # kernel-ready (bf16 MXU weights), cast once

    def check(B, T, name, data_key):
        kvx, kax, kde = jax.random.split(data_key, 3)
        # Activations arrive as bf16 (narrow I/O); dense residual stream stays f32.
        vx = jax.random.normal(kvx, (B, T, D), jnp.float32).astype(jnp.bfloat16)
        ax = jax.random.normal(kax, (B, T, D), jnp.float32).astype(jnp.bfloat16)
        dense = jax.random.normal(kde, (B, T, D), jnp.float32)

        ax_out, dense_out = gsfusion_pallas(vx, ax, dense, kparams)
        jax.block_until_ready((ax_out, dense_out))

        ax_ref, dense_ref = gsfusion_reference(vx, ax, dense, params)
        # bf16 MXU operands / bf16 ax_out loosen the ax tolerance; dense path is
        # identical f32 adds on both sides and stays tight.
        assert jnp.allclose(ax_out.astype(jnp.float32), ax_ref, atol=3e-2, rtol=3e-2), \
            f"{name}: ax mismatch"
        assert jnp.allclose(dense_out, dense_ref, atol=1e-5, rtol=1e-5), \
            f"{name}: dense mismatch"

    k_small, k_ragged = jax.random.split(kdata)
    # Small primary example (B=2, T=8, D=512).
    check(2, 8, "small", k_small)
    # Multi-step grid with a partial last block (no wrapper-side pad/slice).
    check(2, 300, "ragged", k_ragged)

    print("KERNEL_OK")
</pallas_src>

<mosaic_0001>
module attributes {stable_mosaic.version = 11 : i64} {
  func.func @gsfusion_kernel(%arg0: i32, %arg1: memref<8x512xbf16, #tpu.memory_space<vmem>>, %arg2: memref<8x512xbf16, #tpu.memory_space<vmem>>, %arg3: memref<8x512xf32, #tpu.memory_space<vmem>>, %arg4: memref<512x512xbf16, #tpu.memory_space<vmem>>, %arg5: memref<512x512xbf16, #tpu.memory_space<vmem>>, %arg6: memref<1x512xf32, #tpu.memory_space<vmem>>, %arg7: memref<512x512xbf16, #tpu.memory_space<vmem>>, %arg8: memref<1x512xf32, #tpu.memory_space<vmem>>, %arg9: memref<512x512xbf16, #tpu.memory_space<vmem>>, %arg10: memref<1x512xf32, #tpu.memory_space<vmem>>, %arg11: memref<1x1xf32, #tpu.memory_space<smem>>, %arg12: memref<1x512xf32, #tpu.memory_space<vmem>>, %arg13: memref<1x512xf32, #tpu.memory_space<vmem>>, %arg14: memref<1x512xf32, #tpu.memory_space<vmem>>, %arg15: memref<1x512xf32, #tpu.memory_space<vmem>>, %arg16: memref<8x512xbf16, #tpu.memory_space<vmem>>, %arg17: memref<8x512xf32, #tpu.memory_space<vmem>>) attributes {dimension_semantics = [#tpu.dimension_semantics<parallel>], iteration_bounds = array<i64: 2>, scalar_prefetch = 0 : i64, scratch_operands = 0 : i64, tpu.core_type = #tpu.core_type<tc>, window_params = [{transform_indices = @transform_0, window_bounds = array<i64: 8, 512>}, {transform_indices = @transform_1, window_bounds = array<i64: 8, 512>}, {transform_indices = @transform_2, window_bounds = array<i64: 8, 512>}, {pipeline_mode = #tpu.pipeline_mode<synchronous>, transform_indices = @transform_3, window_bounds = array<i64: 512, 512>}, {pipeline_mode = #tpu.pipeline_mode<synchronous>, transform_indices = @transform_4, window_bounds = array<i64: 512, 512>}, {pipeline_mode = #tpu.pipeline_mode<synchronous>, transform_indices = @transform_5, window_bounds = array<i64: 1, 512>}, {pipeline_mode = #tpu.pipeline_mode<synchronous>, transform_indices = @transform_6, window_bounds = array<i64: 512, 512>}, {pipeline_mode = #tpu.pipeline_mode<synchronous>, transform_indices = @transform_7, window_bounds = array<i64: 1, 512>}, {pipeline_mode = #tpu.pipeline_mode<synchronous>, transform_indices = @transform_8, window_bounds = array<i64: 512, 512>}, {pipeline_mode = #tpu.pipeline_mode<synchronous>, transform_indices = @transform_9, window_bounds = array<i64: 1, 512>}, {transform_indices = @transform_10, window_bounds = array<i64: 1, 1>}, {pipeline_mode = #tpu.pipeline_mode<synchronous>, transform_indices = @transform_11, window_bounds = array<i64: 1, 512>}, {pipeline_mode = #tpu.pipeline_mode<synchronous>, transform_indices = @transform_12, window_bounds = array<i64: 1, 512>}, {pipeline_mode = #tpu.pipeline_mode<synchronous>, transform_indices = @transform_13, window_bounds = array<i64: 1, 512>}, {pipeline_mode = #tpu.pipeline_mode<synchronous>, transform_indices = @transform_14, window_bounds = array<i64: 1, 512>}, {transform_indices = @transform_15, window_bounds = array<i64: 8, 512>}, {transform_indices = @transform_16, window_bounds = array<i64: 8, 512>}]} {
    %c0 = arith.constant 0 : index
    %c0_0 = arith.constant 0 : index
    %0 = vector.load %arg1[%c0, %c0_0] : memref<8x512xbf16, #tpu.memory_space<vmem>>, vector<8x512xbf16>
    %c0_1 = arith.constant 0 : index
    %c0_2 = arith.constant 0 : index
    %1 = vector.load %arg2[%c0_1, %c0_2] : memref<8x512xbf16, #tpu.memory_space<vmem>>, vector<8x512xbf16>
    %2 = arith.extf %0 : vector<8x512xbf16> to vector<8x512xf32>
    %c0_3 = arith.constant 0 : index
    %c0_4 = arith.constant 0 : index
    %3 = vector.load %arg3[%c0_3, %c0_4] : memref<8x512xf32, #tpu.memory_space<vmem>>, vector<8x512xf32>
    %c0_5 = arith.constant 0 : index
    %c0_6 = arith.constant 0 : index
    %4 = vector.load %arg4[%c0_5, %c0_6] : memref<512x512xbf16, #tpu.memory_space<vmem>>, vector<512x512xbf16>
    %cst = arith.constant dense<0.000000e+00> : vector<8x512xf32>
    %5 = tpu.matmul %0, %4, %cst {dimension_numbers = #tpu.dot_dimension_numbers<[1], [0], [0], [1], [0, 0, 1, 1], [], []>} : vector<8x512xbf16>, vector<512x512xbf16>, vector<8x512xf32> -> vector<8x512xf32>
    %c0_7 = arith.constant 0 : index
    %c0_8 = arith.constant 0 : index
    %6 = vector.load %arg5[%c0_7, %c0_8] : memref<512x512xbf16, #tpu.memory_space<vmem>>, vector<512x512xbf16>
    %cst_9 = arith.constant dense<0.000000e+00> : vector<8x512xf32>
    %7 = tpu.matmul %1, %6, %cst_9 {dimension_numbers = #tpu.dot_dimension_numbers<[1], [0], [0], [1], [0, 0, 1, 1], [], []>} : vector<8x512xbf16>, vector<512x512xbf16>, vector<8x512xf32> -> vector<8x512xf32>
    %8 = arith.addf %5, %7 : vector<8x512xf32>
    %c0_10 = arith.constant 0 : index
    %c0_11 = arith.constant 0 : index
    %9 = vector.load %arg6[%c0_10, %c0_11] : memref<1x512xf32, #tpu.memory_space<vmem>>, vector<1x512xf32>
    %10 = vector.broadcast %9 : vector<1x512xf32> to vector<8x512xf32>
    %11 = arith.addf %8, %10 : vector<8x512xf32>
    %cst_12 = arith.constant 0.000000e+00 : f32
    %12 = vector.broadcast %cst_12 : f32 to vector<8x512xf32>
    %13 = arith.maximumf %11, %12 : vector<8x512xf32>
    %14 = arith.truncf %13 : vector<8x512xf32> to vector<8x512xbf16>
    %c0_13 = arith.constant 0 : index
    %c0_14 = arith.constant 0 : index
    %15 = vector.load %arg7[%c0_13, %c0_14] : memref<512x512xbf16, #tpu.memory_space<vmem>>, vector<512x512xbf16>
    %cst_15 = arith.constant dense<0.000000e+00> : vector<8x512xf32>
    %16 = tpu.matmul %14, %15, %cst_15 {dimension_numbers = #tpu.dot_dimension_numbers<[1], [0], [0], [1], [0, 0, 1, 1], [], []>} : vector<8x512xbf16>, vector<512x512xbf16>, vector<8x512xf32> -> vector<8x512xf32>
    %c0_16 = arith.constant 0 : index
    %c0_17 = arith.constant 0 : index
    %17 = vector.load %arg8[%c0_16, %c0_17] : memref<1x512xf32, #tpu.memory_space<vmem>>, vector<1x512xf32>
    %18 = vector.broadcast %17 : vector<1x512xf32> to vector<8x512xf32>
    %19 = arith.addf %16, %18 : vector<8x512xf32>
    %20 = arith.negf %19 : vector<8x512xf32>
    %21 = math.exp %20 : vector<8x512xf32>
    %cst_18 = arith.constant 1.000000e+00 : f32
    %22 = vector.broadcast %cst_18 : f32 to vector<8x512xf32>
    %23 = arith.addf %22, %21 : vector<8x512xf32>
    %24 = arith.divf %22, %23 : vector<8x512xf32>
    %25 = arith.addf %3, %2 : vector<8x512xf32>
    %26 = arith.mulf %2, %24 : vector<8x512xf32>
    %27 = arith.truncf %26 : vector<8x512xf32> to vector<8x512xbf16>
    %c0_19 = arith.constant 0 : index
    %c0_20 = arith.constant 0 : index
    %28 = vector.load %arg9[%c0_19, %c0_20] : memref<512x512xbf16, #tpu.memory_space<vmem>>, vector<512x512xbf16>
    %cst_21 = arith.constant dense<0.000000e+00> : vector<8x512xf32>
    %29 = tpu.matmul %27, %28, %cst_21 {dimension_numbers = #tpu.dot_dimension_numbers<[1], [0], [0], [1], [0, 0, 1, 1], [], []>} : vector<8x512xbf16>, vector<512x512xbf16>, vector<8x512xf32> -> vector<8x512xf32>
    %c0_22 = arith.constant 0 : index
    %c0_23 = arith.constant 0 : index
    %30 = vector.load %arg10[%c0_22, %c0_23] : memref<1x512xf32, #tpu.memory_space<vmem>>, vector<1x512xf32>
    %31 = vector.broadcast %30 : vector<1x512xf32> to vector<8x512xf32>
    %32 = arith.addf %29, %31 : vector<8x512xf32>
    %c0_24 = arith.constant 0 : index
    %c0_25 = arith.constant 0 : index
    %33 = memref.load %arg11[%c0_24, %c0_25] : memref<1x1xf32, #tpu.memory_space<smem>>
    %cst_26 = arith.constant 0.000000e+00 : f32
    %34 = vector.broadcast %cst_26 : f32 to vector<8x512xf32>
    %35 = arith.cmpf oge, %32, %34 : vector<8x512xf32>
    %36 = vector.broadcast %33 : f32 to vector<8x512xf32>
    %37 = arith.mulf %36, %32 : vector<8x512xf32>
    %38 = arith.select %35, %32, %37 : vector<8x512xi1>, vector<8x512xf32>
    %c0_27 = arith.constant 0 : index
    %c0_28 = arith.constant 0 : index
    %39 = vector.load %arg12[%c0_27, %c0_28] : memref<1x512xf32, #tpu.memory_space<vmem>>, vector<1x512xf32>
    %c0_29 = arith.constant 0 : index
    %c0_30 = arith.constant 0 : index
    %40 = vector.load %arg13[%c0_29, %c0_30] : memref<1x512xf32, #tpu.memory_space<vmem>>, vector<1x512xf32>
    %cst_31 = arith.constant dense<0.000000e+00> : vector<8xf32>
    %41 = vector.multi_reduction <add>, %38, %cst_31 [1] : vector<8x512xf32> to vector<8xf32>
    %42 = vector.shape_cast %41 : vector<8xf32> to vector<8x1xf32>
    %cst_32 = arith.constant 5.120000e+02 : f32
    %43 = vector.broadcast %cst_32 : f32 to vector<8x1xf32>
    %44 = arith.divf %42, %43 : vector<8x1xf32>
    %45 = arith.mulf %38, %38 : vector<8x512xf32>
    %cst_33 = arith.constant dense<0.000000e+00> : vector<8xf32>
    %46 = vector.multi_reduction <add>, %45, %cst_33 [1] : vector<8x512xf32> to vector<8xf32>
    %47 = vector.shape_cast %46 : vector<8xf32> to vector<8x1xf32>
    %cst_34 = arith.constant 5.120000e+02 : f32
    %48 = vector.broadcast %cst_34 : f32 to vector<8x1xf32>
    %49 = arith.divf %47, %48 : vector<8x1xf32>
    %50 = arith.mulf %44, %44 : vector<8x1xf32>
    %51 = arith.subf %49, %50 : vector<8x1xf32>
    %cst_35 = arith.constant 0.000000e+00 : f32
    %52 = vector.broadcast %cst_35 : f32 to vector<8x1xf32>
    %53 = arith.maximumf %51, %52 : vector<8x1xf32>
    %54 = vector.broadcast %44 : vector<8x1xf32> to vector<8x512xf32>
    %55 = arith.subf %38, %54 : vector<8x512xf32>
    %cst_36 = arith.constant 9.99999974E-6 : f32
    %56 = vector.broadcast %cst_36 : f32 to vector<8x1xf32>
    %57 = arith.addf %53, %56 : vector<8x1xf32>
    %58 = math.rsqrt %57 : vector<8x1xf32>
    %59 = vector.broadcast %58 : vector<8x1xf32> to vector<8x512xf32>
    %60 = arith.mulf %55, %59 : vector<8x512xf32>
    %61 = vector.broadcast %39 : vector<1x512xf32> to vector<8x512xf32>
    %62 = arith.mulf %60, %61 : vector<8x512xf32>
    %63 = vector.broadcast %40 : vector<1x512xf32> to vector<8x512xf32>
    %64 = arith.addf %62, %63 : vector<8x512xf32>
    %65 = arith.addf %64, %25 : vector<8x512xf32>
    %c0_37 = arith.constant 0 : index
    %c0_38 = arith.constant 0 : index
    %66 = vector.load %arg14[%c0_37, %c0_38] : memref<1x512xf32, #tpu.memory_space<vmem>>, vector<1x512xf32>
    %c0_39 = arith.constant 0 : index
    %c0_40 = arith.constant 0 : index
    %67 = vector.load %arg15[%c0_39, %c0_40] : memref<1x512xf32, #tpu.memory_space<vmem>>, vector<1x512xf32>
    %cst_41 = arith.constant dense<0.000000e+00> : vector<8xf32>
    %68 = vector.multi_reduction <add>, %65, %cst_41 [1] : vector<8x512xf32> to vector<8xf32>
    %69 = vector.shape_cast %68 : vector<8xf32> to vector<8x1xf32>
    %cst_42 = arith.constant 5.120000e+02 : f32
    %70 = vector.broadcast %cst_42 : f32 to vector<8x1xf32>
    %71 = arith.divf %69, %70 : vector<8x1xf32>
    %72 = arith.mulf %65, %65 : vector<8x512xf32>
    %cst_43 = arith.constant dense<0.000000e+00> : vector<8xf32>
    %73 = vector.multi_reduction <add>, %72, %cst_43 [1] : vector<8x512xf32> to vector<8xf32>
    %74 = vector.shape_cast %73 : vector<8xf32> to vector<8x1xf32>
    %cst_44 = arith.constant 5.120000e+02 : f32
    %75 = vector.broadcast %cst_44 : f32 to vector<8x1xf32>
    %76 = arith.divf %74, %75 : vector<8x1xf32>
    %77 = arith.mulf %71, %71 : vector<8x1xf32>
    %78 = arith.subf %76, %77 : vector<8x1xf32>
    %cst_45 = arith.constant 0.000000e+00 : f32
    %79 = vector.broadcast %cst_45 : f32 to vector<8x1xf32>
    %80 = arith.maximumf %78, %79 : vector<8x1xf32>
    %81 = vector.broadcast %71 : vector<8x1xf32> to vector<8x512xf32>
    %82 = arith.subf %65, %81 : vector<8x512xf32>
    %cst_46 = arith.constant 9.99999974E-6 : f32
    %83 = vector.broadcast %cst_46 : f32 to vector<8x1xf32>
    %84 = arith.addf %80, %83 : vector<8x1xf32>
    %85 = math.rsqrt %84 : vector<8x1xf32>
    %86 = vector.broadcast %85 : vector<8x1xf32> to vector<8x512xf32>
    %87 = arith.mulf %82, %86 : vector<8x512xf32>
    %88 = vector.broadcast %66 : vector<1x512xf32> to vector<8x512xf32>
    %89 = arith.mulf %87, %88 : vector<8x512xf32>
    %90 = vector.broadcast %67 : vector<1x512xf32> to vector<8x512xf32>
    %91 = arith.addf %89, %90 : vector<8x512xf32>
    %92 = arith.truncf %91 : vector<8x512xf32> to vector<8x512xbf16>
    %c0_47 = arith.constant 0 : index
    %c0_48 = arith.constant 0 : index
    %93 = vector.load %arg16[%c0_47, %c0_48] : memref<8x512xbf16, #tpu.memory_space<vmem>>, vector<8x512xbf16>
    tpu.vector_store %arg16[%c0_47, %c0_48], %92 {strides = array<i32>} : memref<8x512xbf16, #tpu.memory_space<vmem>>, vector<8x512xbf16>,
    %c0_49 = arith.constant 0 : index
    %c0_50 = arith.constant 0 : index
    %94 = vector.load %arg17[%c0_49, %c0_50] : memref<8x512xf32, #tpu.memory_space<vmem>>, vector<8x512xf32>
    tpu.vector_store %arg17[%c0_49, %c0_50], %25 {strides = array<i32>} : memref<8x512xf32, #tpu.memory_space<vmem>>, vector<8x512xf32>,
    return
  }
  func.func @transform_0(%arg0: i32) -> (i32, i32) {
    %c0_i32 = arith.constant 0 : i32
    %c0_i32_0 = arith.constant 0 : i32
    return %arg0, %c0_i32 : i32, i32
  }
  func.func @transform_1(%arg0: i32) -> (i32, i32) {
    %c0_i32 = arith.constant 0 : i32
    %c0_i32_0 = arith.constant 0 : i32
    return %arg0, %c0_i32 : i32, i32
  }
  func.func @transform_2(%arg0: i32) -> (i32, i32) {
    %c0_i32 = arith.constant 0 : i32
    %c0_i32_0 = arith.constant 0 : i32
    return %arg0, %c0_i32 : i32, i32
  }
  func.func @transform_3(%arg0: i32) -> (i32, i32) {
    %c0_i32 = arith.constant 0 : i32
    %c0_i32_0 = arith.constant 0 : i32
    %c0_i32_1 = arith.constant 0 : i32
    return %c0_i32, %c0_i32_0 : i32, i32
  }
  func.func @transform_4(%arg0: i32) -> (i32, i32) {
    %c0_i32 = arith.constant 0 : i32
    %c0_i32_0 = arith.constant 0 : i32
    %c0_i32_1 = arith.constant 0 : i32
    return %c0_i32, %c0_i32_0 : i32, i32
  }
  func.func @transform_5(%arg0: i32) -> (i32, i32) {
    %c0_i32 = arith.constant 0 : i32
    %c0_i32_0 = arith.constant 0 : i32
    %c0_i32_1 = arith.constant 0 : i32
    return %c0_i32, %c0_i32_0 : i32, i32
  }
  func.func @transform_6(%arg0: i32) -> (i32, i32) {
    %c0_i32 = arith.constant 0 : i32
    %c0_i32_0 = arith.constant 0 : i32
    %c0_i32_1 = arith.constant 0 : i32
    return %c0_i32, %c0_i32_0 : i32, i32
  }
  func.func @transform_7(%arg0: i32) -> (i32, i32) {
    %c0_i32 = arith.constant 0 : i32
    %c0_i32_0 = arith.constant 0 : i32
    %c0_i32_1 = arith.constant 0 : i32
    return %c0_i32, %c0_i32_0 : i32, i32
  }
  func.func @transform_8(%arg0: i32) -> (i32, i32) {
    %c0_i32 = arith.constant 0 : i32
    %c0_i32_0 = arith.constant 0 : i32
    %c0_i32_1 = arith.constant 0 : i32
    return %c0_i32, %c0_i32_0 : i32, i32
  }
  func.func @transform_9(%arg0: i32) -> (i32, i32) {
    %c0_i32 = arith.constant 0 : i32
    %c0_i32_0 = arith.constant 0 : i32
    %c0_i32_1 = arith.constant 0 : i32
    return %c0_i32, %c0_i32_0 : i32, i32
  }
  func.func @transform_10(%arg0: i32) -> (i32, i32) {
    %c0_i32 = arith.constant 0 : i32
    %c0_i32_0 = arith.constant 0 : i32
    %c0_i32_1 = arith.constant 0 : i32
    return %c0_i32, %c0_i32_0 : i32, i32
  }
  func.func @transform_11(%arg0: i32) -> (i32, i32) {
    %c0_i32 = arith.constant 0 : i32
    %c0_i32_0 = arith.constant 0 : i32
    %c0_i32_1 = arith.constant 0 : i32
    return %c0_i32, %c0_i32_0 : i32, i32
  }
  func.func @transform_12(%arg0: i32) -> (i32, i32) {
    %c0_i32 = arith.constant 0 : i32
    %c0_i32_0 = arith.constant 0 : i32
    %c0_i32_1 = arith.constant 0 : i32
    return %c0_i32, %c0_i32_0 : i32, i32
  }
  func.func @transform_13(%arg0: i32) -> (i32, i32) {
    %c0_i32 = arith.constant 0 : i32
    %c0_i32_0 = arith.constant 0 : i32
    %c0_i32_1 = arith.constant 0 : i32
    return %c0_i32, %c0_i32_0 : i32, i32
  }
  func.func @transform_14(%arg0: i32) -> (i32, i32) {
    %c0_i32 = arith.constant 0 : i32
    %c0_i32_0 = arith.constant 0 : i32
    %c0_i32_1 = arith.constant 0 : i32
    return %c0_i32, %c0_i32_0 : i32, i32
  }
  func.func @transform_15(%arg0: i32) -> (i32, i32) {
    %c0_i32 = arith.constant 0 : i32
    %c0_i32_0 = arith.constant 0 : i32
    return %arg0, %c0_i32 : i32, i32
  }
  func.func @transform_16(%arg0: i32) -> (i32, i32) {
    %c0_i32 = arith.constant 0 : i32
    %c0_i32_0 = arith.constant 0 : i32
    return %arg0, %c0_i32 : i32, i32
  }
}

</mosaic_0001>

<llo_original>
// kernel: _gsfusion_call.1
$region0: #{_gsfusion_call.1}
  #allocation0 [shape = 'u32[]', space=smem, size = 0x4, offset = 0x4, fixed_abs, tag = 'smem constant byte address 0x4 - core index']
  #allocation1 [shape = 'u32[144,128]{1,0:T(1,128)}', space=vmem, size = 0x12000, scoped, tag = 'internal scratch']
  #allocation2 [shape = 'f32[1,1]{1,0:T(1,128)S(6)}', space=smem, size = 0x200, scoped, tag = 'scoped memory for _gsfusion_call.1']
  %s0 = inlined_call_operand.hbm [shape: bf16[16,512], index: 0, kind: input, shape index: {}]
  %s1 = inlined_call_operand.hbm [shape: bf16[16,512], index: 1, kind: input, shape index: {}]
  %s2 = inlined_call_operand.hbm [shape: f32[16,512], index: 2, kind: input, shape index: {}]
  %s3 = inlined_call_operand.hbm [shape: bf16[512,512], index: 3, kind: input, shape index: {}]
  %s4 = inlined_call_operand.hbm [shape: bf16[512,512], index: 4, kind: input, shape index: {}]
  %s5 = inlined_call_operand.vmem [shape: f32[1,512], index: 5, kind: input, shape index: {}]
  %s6 = inlined_call_operand.hbm [shape: bf16[512,512], index: 6, kind: input, shape index: {}]
  %s7 = inlined_call_operand.vmem [shape: f32[1,512], index: 7, kind: input, shape index: {}]
  %s8 = inlined_call_operand.hbm [shape: bf16[512,512], index: 8, kind: input, shape index: {}]
  %s9 = inlined_call_operand.vmem [shape: f32[1,512], index: 9, kind: input, shape index: {}]
  %s10 = inlined_call_operand.<no memory space> [shape: f32[1,1], index: 10, kind: input, shape index: {}]
  %s11 = inlined_call_operand.vmem [shape: f32[1,512], index: 11, kind: input, shape index: {}]
  %s12 = inlined_call_operand.vmem [shape: f32[1,512], index: 12, kind: input, shape index: {}]
  %s13 = inlined_call_operand.vmem [shape: f32[1,512], index: 13, kind: input, shape index: {}]
  %s14 = inlined_call_operand.vmem [shape: f32[1,512], index: 14, kind: input, shape index: {}]
  %s15 = inlined_call_operand.hbm [shape: bf16[16,512], index: 15, kind: output, shape index: {0}]
  %s16 = inlined_call_operand.hbm [shape: f32[16,512], index: 16, kind: output, shape index: {1}]
  %17 = xla_tuple %s15, %s16
  %s18 = sld [smem:[#allocation0]]
  $region129: #{_gsfusion_call.1} parent=0
    _
  %s20 = ssub.s32 1, %s18
  %s21 = scalar_select 0, %s20, %s18
  %22 = sst [smem:[#allocation2]] %s10
  $region1: #{_gsfusion_call.1} parent=0
    #allocation3 [shape = 'u8[16384]{0}', space=vmem, size = 0x4000, scoped, tag = 'input window, operand 0']
    #allocation4 [shape = 's32[2]{0}', space=sflag, size = 0x8, scoped, tag = 'scoped memory for _gsfusion_call.1']
    #allocation5 [shape = 's32[2]{0}', space=sflag, size = 0x8, scoped, tag = 'scoped memory for _gsfusion_call.1']
    #allocation6 [shape = 'u8[16384]{0}', space=vmem, size = 0x4000, scoped, tag = 'input window, operand 1']
    #allocation7 [shape = 's32[2]{0}', space=sflag, size = 0x8, scoped, tag = 'scoped memory for _gsfusion_call.1']
    #allocation8 [shape = 'u8[32768]{0}', space=vmem, size = 0x8000, scoped, tag = 'input window, operand 2']
    #allocation9 [shape = 'u8[524288]{0}', space=vmem, size = 0x80000, scoped, tag = 'input window, operand 3, single buffered']
    #allocation10 [shape = 's32[1]{0}', space=sflag, size = 0x4, scoped, tag = 'scoped memory for _gsfusion_call.1']
    #allocation11 [shape = 'u8[524288]{0}', space=vmem, size = 0x80000, scoped, tag = 'input window, operand 4, single buffered']
    #allocation12 [shape = 'u8[524288]{0}', space=vmem, size = 0x80000, scoped, tag = 'input window, operand 6, single buffered']
    #allocation13 [shape = 's32[1]{0}', space=sflag, size = 0x4, scoped, tag = 'scoped memory for _gsfusion_call.1']
    #allocation14 [shape = 'u8[524288]{0}', space=vmem, size = 0x80000, scoped, tag = 'input window, operand 8, single buffered']
    #allocation15 [shape = 'u8[16384]{0}', space=vmem, size = 0x4000, scoped, tag = 'output window, operand 0']
    #allocation16 [shape = 'u8[32768]{0}', space=vmem, size = 0x8000, scoped, tag = 'output window, operand 1']
    #allocation17 [shape = 's32[2]{0}', space=sflag, size = 0x8, scoped, tag = 'scoped memory for _gsfusion_call.1']
    %23 = vsyncpa [#allocation4], 0
    %s24 = scalar_lea.sflag [#allocation4], 1
    %25 = vsyncpa %s24, 0
    %26 = vsyncpa [#allocation7], 0
    %s27 = scalar_lea.sflag [#allocation7], 1
    %28 = vsyncpa %s27, 0
    %29 = vsyncpa [#allocation10], 0
    %30 = vsyncpa [#allocation13], 0
    %31 = vsyncpa [#allocation5], 0
    %s32 = scalar_lea.sflag [#allocation5], 1
    %33 = vsyncpa %s32, 0
    %34 = vsyncpa [#allocation17], 0
    %s35 = scalar_lea.sflag [#allocation17], 1
    %36 = vsyncpa %s35, 0
    loop: start=0, step=1, limit=4
    $region2: #{_gsfusion_call.1} parent=1 // loop_pre_header
      _
    $region3: #{_gsfusion_call.1} parent=1 // loop_header
      %s38 = sphi 0, %s42
      %p39 = scmp.ge.s32.totalorder %s38, 4
      %s48 = sphi 0, %s50
      %s51 = sphi 0, %s48
      %s52 = sphi 0, %s51
      %s68 = sphi 0, %s52
      %s74 = sphi 0, %s76
      %s77 = sphi 0, %s74
      %s78 = sphi 0, %s77
      %s94 = sphi 0, %s78
      %s100 = sphi 0, %s102
      %s103 = sphi 0, %s100
      %s104 = sphi 0, %s103
      %s120 = sphi 0, %s104
      %s124 = sphi 0, %s124
      %s126 = sphi 0, %s124
      %s127 = sphi 0, %s126
      %s141 = sphi 0, %s127
      %s145 = sphi 0, %s145
      %s147 = sphi 0, %s145
      %s148 = sphi 0, %s147
      %s162 = sphi 0, %s148
      %s166 = sphi 0, %s166
      %s168 = sphi 0, %s166
      %s169 = sphi 0, %s168
      %s183 = sphi 0, %s169
      %s187 = sphi 0, %s187
      %s189 = sphi 0, %s187
      %s190 = sphi 0, %s189
      %s204 = sphi 0, %s190
      %s208 = sphi 0, %s208
      %s210 = sphi 0, %s208
      %s211 = sphi 0, %s210
      %s225 = sphi 0, %s211
      %s229 = sphi 0, %s229
      %s231 = sphi 0, %s229
      %s232 = sphi 0, %s231
      %s246 = sphi 0, %s232
      %s250 = sphi 0, %s250
      %s252 = sphi 0, %s250
      %s253 = sphi 0, %s252
      %s267 = sphi 0, %s253
      %s271 = sphi 0, %s271
      %s273 = sphi 0, %s271
      %s274 = sphi 0, %s273
      %s288 = sphi 0, %s274
      %s292 = sphi 0, %s292
      %s294 = sphi 0, %s292
      %s295 = sphi 0, %s294
      %s309 = sphi 0, %s295
      %s313 = sphi 0, %s313
      %s315 = sphi 0, %s313
      %s316 = sphi 0, %s315
      %s330 = sphi 0, %s316
      %s334 = sphi 0, %s334
      %s336 = sphi 0, %s334
      %s337 = sphi 0, %s336
      %s351 = sphi 0, %s337
      %s355 = sphi 0, %s355
      %s357 = sphi 0, %s355
      %s358 = sphi 0, %s357
      %s372 = sphi 0, %s358
      %s378 = sphi 0, %s380
      %s381 = sphi 0, %s378
      %s382 = sphi 0, %s381
      %s398 = sphi 0, %s382
      %s404 = sphi 0, %s406
      %s407 = sphi 0, %s404
      %s408 = sphi 0, %s407
      %s424 = sphi 0, %s408
    $region4: #{_gsfusion_call.1} parent=1 // loop_header_branch
      %41 = sbr.rel (%p39) target = $region8
    $region5: #{_gsfusion_call.1} parent=1 // loop_body
      %s43 = ssub.s32 %s38, 1
      %s44 = ssub.s32 %s38, 2
      %s45 = sadd.s32 %s38, 1
      %s46 = ssub.s32 %s38, %s45
      %p47 = scmp.eq.s32.totalorder %s46, 0
      %s49 = sadd.s32 %s48, 1
      %s50 = scalar_select %p47, %s48, %s49
      %p53 = pneg %p47
      %p54 = scmp.eq.s32.totalorder %s38, 1
      %p55 = por %p53, %p54
      %p56 = scmp.ne.s32.totalorder %s48, %s51
      %p57 = scmp.eq.s32.totalorder %s38, 0
      %p58 = por %p56, %p57
      %p59 = scmp.ne.s32.totalorder %s48, %s51
      %p60 = scmp.eq.s32.totalorder %s43, 1
      %p61 = por %p59, %p60
      %p62 = scmp.ne.s32.totalorder %s51, %s52
      %p63 = scmp.eq.s32.totalorder %s43, 0
      %p64 = por %p62, %p63
      %p65 = scmp.ne.s32.totalorder %s51, %s52
      %p66 = scmp.eq.s32.totalorder %s44, 1
      %p67 = por %p65, %p66
      %p69 = scmp.ne.s32.totalorder %s52, %s68
      %p70 = scmp.eq.s32.totalorder %s44, 0
      %p71 = por %p69, %p70
      %s72 = ssub.s32 %s38, %s45
      %p73 = scmp.eq.s32.totalorder %s72, 0
      %s75 = sadd.s32 %s74, 1
      %s76 = scalar_select %p73, %s74, %s75
      %p79 = pneg %p73
      %p80 = scmp.eq.s32.totalorder %s38, 1
      %p81 = por %p79, %p80
      %p82 = scmp.ne.s32.totalorder %s74, %s77
      %p83 = scmp.eq.s32.totalorder %s38, 0
      %p84 = por %p82, %p83
      %p85 = scmp.ne.s32.totalorder %s74, %s77
      %p86 = scmp.eq.s32.totalorder %s43, 1
      %p87 = por %p85, %p86
      %p88 = scmp.ne.s32.totalorder %s77, %s78
      %p89 = scmp.eq.s32.totalorder %s43, 0
      %p90 = por %p88, %p89
      %p91 = scmp.ne.s32.totalorder %s77, %s78
      %p92 = scmp.eq.s32.totalorder %s44, 1
      %p93 = por %p91, %p92
      %p95 = scmp.ne.s32.totalorder %s78, %s94
      %p96 = scmp.eq.s32.totalorder %s44, 0
      %p97 = por %p95, %p96
      %s98 = ssub.s32 %s38, %s45
      %p99 = scmp.eq.s32.totalorder %s98, 0
      %s101 = sadd.s32 %s100, 1
      %s102 = scalar_select %p99, %s100, %s101
      %p105 = pneg %p99
      %p106 = scmp.eq.s32.totalorder %s38, 1
      %p107 = por %p105, %p106
      %p108 = scmp.ne.s32.totalorder %s100, %s103
      %p109 = scmp.eq.s32.totalorder %s38, 0
      %p110 = por %p108, %p109
      %p111 = scmp.ne.s32.totalorder %s100, %s103
      %p112 = scmp.eq.s32.totalorder %s43, 1
      %p113 = por %p111, %p112
      %p114 = scmp.ne.s32.totalorder %s103, %s104
      %p115 = scmp.eq.s32.totalorder %s43, 0
      %p116 = por %p114, %p115
      %p117 = scmp.ne.s32.totalorder %s103, %s104
      %p118 = scmp.eq.s32.totalorder %s44, 1
      %p119 = por %p117, %p118
      %p121 = scmp.ne.s32.totalorder %s104, %s120
      %p122 = scmp.eq.s32.totalorder %s44, 0
      %p123 = por %p121, %p122
      %s125 = sadd.s32 %s124, 1
      %p128 = scmp.eq.s32.totalorder %s38, 1
      %p129 = scmp.ne.s32.totalorder %s124, %s126
      %p130 = scmp.eq.s32.totalorder %s38, 0
      %p131 = por %p129, %p130
      %p132 = scmp.ne.s32.totalorder %s124, %s126
      %p133 = scmp.eq.s32.totalorder %s43, 1
      %p134 = por %p132, %p133
      %p135 = scmp.ne.s32.totalorder %s126, %s127
      %p136 = scmp.eq.s32.totalorder %s43, 0
      %p137 = por %p135, %p136
      %p138 = scmp.ne.s32.totalorder %s126, %s127
      %p139 = scmp.eq.s32.totalorder %s44, 1
      %p140 = por %p138, %p139
      %p142 = scmp.ne.s32.totalorder %s127, %s141
      %p143 = scmp.eq.s32.totalorder %s44, 0
      %p144 = por %p142, %p143
      %s146 = sadd.s32 %s145, 1
      %p149 = scmp.eq.s32.totalorder %s38, 1
      %p150 = scmp.ne.s32.totalorder %s145, %s147
      %p151 = scmp.eq.s32.totalorder %s38, 0
      %p152 = por %p150, %p151
      %p153 = scmp.ne.s32.totalorder %s145, %s147
      %p154 = scmp.eq.s32.totalorder %s43, 1
      %p155 = por %p153, %p154
      %p156 = scmp.ne.s32.totalorder %s147, %s148
      %p157 = scmp.eq.s32.totalorder %s43, 0
      %p158 = por %p156, %p157
      %p159 = scmp.ne.s32.totalorder %s147, %s148
      %p160 = scmp.eq.s32.totalorder %s44, 1
      %p161 = por %p159, %p160
      %p163 = scmp.ne.s32.totalorder %s148, %s162
      %p164 = scmp.eq.s32.totalorder %s44, 0
      %p165 = por %p163, %p164
      %s167 = sadd.s32 %s166, 1
      %p170 = scmp.eq.s32.totalorder %s38, 1
      %p171 = scmp.ne.s32.totalorder %s166, %s168
      %p172 = scmp.eq.s32.totalorder %s38, 0
      %p173 = por %p171, %p172
      %p174 = scmp.ne.s32.totalorder %s166, %s168
      %p175 = scmp.eq.s32.totalorder %s43, 1
      %p176 = por %p174, %p175
      %p177 = scmp.ne.s32.totalorder %s168, %s169
      %p178 = scmp.eq.s32.totalorder %s43, 0
      %p179 = por %p177, %p178
      %p180 = scmp.ne.s32.totalorder %s168, %s169
      %p181 = scmp.eq.s32.totalorder %s44, 1
      %p182 = por %p180, %p181
      %p184 = scmp.ne.s32.totalorder %s169, %s183
      %p185 = scmp.eq.s32.totalorder %s44, 0
      %p186 = por %p184, %p185
      %s188 = sadd.s32 %s187, 1
      %p191 = scmp.eq.s32.totalorder %s38, 1
      %p192 = scmp.ne.s32.totalorder %s187, %s189
      %p193 = scmp.eq.s32.totalorder %s38, 0
      %p194 = por %p192, %p193
      %p195 = scmp.ne.s32.totalorder %s187, %s189
      %p196 = scmp.eq.s32.totalorder %s43, 1
      %p197 = por %p195, %p196
      %p198 = scmp.ne.s32.totalorder %s189, %s190
      %p199 = scmp.eq.s32.totalorder %s43, 0
      %p200 = por %p198, %p199
      %p201 = scmp.ne.s32.totalorder %s189, %s190
      %p202 = scmp.eq.s32.totalorder %s44, 1
      %p203 = por %p201, %p202
      %p205 = scmp.ne.s32.totalorder %s190, %s204
      %p206 = scmp.eq.s32.totalorder %s44, 0
      %p207 = por %p205, %p206
      %s209 = sadd.s32 %s208, 1
      %p212 = scmp.eq.s32.totalorder %s38, 1
      %p213 = scmp.ne.s32.totalorder %s208, %s210
      %p214 = scmp.eq.s32.totalorder %s38, 0
      %p215 = por %p213, %p214
      %p216 = scmp.ne.s32.totalorder %s208, %s210
      %p217 = scmp.eq.s32.totalorder %s43, 1
      %p218 = por %p216, %p217
      %p219 = scmp.ne.s32.totalorder %s210, %s211
      %p220 = scmp.eq.s32.totalorder %s43, 0
      %p221 = por %p219, %p220
      %p222 = scmp.ne.s32.totalorder %s210, %s211
      %p223 = scmp.eq.s32.totalorder %s44, 1
      %p224 = por %p222, %p223
      %p226 = scmp.ne.s32.totalorder %s211, %s225
      %p227 = scmp.eq.s32.totalorder %s44, 0
      %p228 = por %p226, %p227
      %s230 = sadd.s32 %s229, 1
      %p233 = scmp.eq.s32.totalorder %s38, 1
      %p234 = scmp.ne.s32.totalorder %s229, %s231
      %p235 = scmp.eq.s32.totalorder %s38, 0
      %p236 = por %p234, %p235
      %p237 = scmp.ne.s32.totalorder %s229, %s231
      %p238 = scmp.eq.s32.totalorder %s43, 1
      %p239 = por %p237, %p238
      %p240 = scmp.ne.s32.totalorder %s231, %s232
      %p241 = scmp.eq.s32.totalorder %s43, 0
      %p242 = por %p240, %p241
      %p243 = scmp.ne.s32.totalorder %s231, %s232
      %p244 = scmp.eq.s32.totalorder %s44, 1
      %p245 = por %p243, %p244
      %p247 = scmp.ne.s32.totalorder %s232, %s246
      %p248 = scmp.eq.s32.totalorder %s44, 0
      %p249 = por %p247, %p248
      %s251 = sadd.s32 %s250, 1
      %p254 = scmp.eq.s32.totalorder %s38, 1
      %p255 = scmp.ne.s32.totalorder %s250, %s252
      %p256 = scmp.eq.s32.totalorder %s38, 0
      %p257 = por %p255, %p256
      %p258 = scmp.ne.s32.totalorder %s250, %s252
      %p259 = scmp.eq.s32.totalorder %s43, 1
      %p260 = por %p258, %p259
      %p261 = scmp.ne.s32.totalorder %s252, %s253
      %p262 = scmp.eq.s32.totalorder %s43, 0
      %p263 = por %p261, %p262
      %p264 = scmp.ne.s32.totalorder %s252, %s253
      %p265 = scmp.eq.s32.totalorder %s44, 1
      %p266 = por %p264, %p265
      %p268 = scmp.ne.s32.totalorder %s253, %s267
      %p269 = scmp.eq.s32.totalorder %s44, 0
      %p270 = por %p268, %p269
      %s272 = sadd.s32 %s271, 1
      %p275 = scmp.eq.s32.totalorder %s38, 1
      %p276 = scmp.ne.s32.totalorder %s271, %s273
      %p277 = scmp.eq.s32.totalorder %s38, 0
      %p278 = por %p276, %p277
      %p279 = scmp.ne.s32.totalorder %s271, %s273
      %p280 = scmp.eq.s32.totalorder %s43, 1
      %p281 = por %p279, %p280
      %p282 = scmp.ne.s32.totalorder %s273, %s274
      %p283 = scmp.eq.s32.totalorder %s43, 0
      %p284 = por %p282, %p283
      %p285 = scmp.ne.s32.totalorder %s273, %s274
      %p286 = scmp.eq.s32.totalorder %s44, 1
      %p287 = por %p285, %p286
      %p289 = scmp.ne.s32.totalorder %s274, %s288
      %p290 = scmp.eq.s32.totalorder %s44, 0
      %p291 = por %p289, %p290
      %s293 = sadd.s32 %s292, 1
      %p296 = scmp.eq.s32.totalorder %s38, 1
      %p297 = scmp.ne.s32.totalorder %s292, %s294
      %p298 = scmp.eq.s32.totalorder %s38, 0
      %p299 = por %p297, %p298
      %p300 = scmp.ne.s32.totalorder %s292, %s294
      %p301 = scmp.eq.s32.totalorder %s43, 1
      %p302 = por %p300, %p301
      %p303 = scmp.ne.s32.totalorder %s294, %s295
      %p304 = scmp.eq.s32.totalorder %s43, 0
      %p305 = por %p303, %p304
      %p306 = scmp.ne.s32.totalorder %s294, %s295
      %p307 = scmp.eq.s32.totalorder %s44, 1
      %p308 = por %p306, %p307
      %p310 = scmp.ne.s32.totalorder %s295, %s309
      %p311 = scmp.eq.s32.totalorder %s44, 0
      %p312 = por %p310, %p311
      %s314 = sadd.s32 %s313, 1
      %p317 = scmp.eq.s32.totalorder %s38, 1
      %p318 = scmp.ne.s32.totalorder %s313, %s315
      %p319 = scmp.eq.s32.totalorder %s38, 0
      %p320 = por %p318, %p319
      %p321 = scmp.ne.s32.totalorder %s313, %s315
      %p322 = scmp.eq.s32.totalorder %s43, 1
      %p323 = por %p321, %p322
      %p324 = scmp.ne.s32.totalorder %s315, %s316
      %p325 = scmp.eq.s32.totalorder %s43, 0
      %p326 = por %p324, %p325
      %p327 = scmp.ne.s32.totalorder %s315, %s316
      %p328 = scmp.eq.s32.totalorder %s44, 1
      %p329 = por %p327, %p328
      %p331 = scmp.ne.s32.totalorder %s316, %s330
      %p332 = scmp.eq.s32.totalorder %s44, 0
      %p333 = por %p331, %p332
      %s335 = sadd.s32 %s334, 1
      %p338 = scmp.eq.s32.totalorder %s38, 1
      %p339 = scmp.ne.s32.totalorder %s334, %s336
      %p340 = scmp.eq.s32.totalorder %s38, 0
      %p341 = por %p339, %p340
      %p342 = scmp.ne.s32.totalorder %s334, %s336
      %p343 = scmp.eq.s32.totalorder %s43, 1
      %p344 = por %p342, %p343
      %p345 = scmp.ne.s32.totalorder %s336, %s337
      %p346 = scmp.eq.s32.totalorder %s43, 0
      %p347 = por %p345, %p346
      %p348 = scmp.ne.s32.totalorder %s336, %s337
      %p349 = scmp.eq.s32.totalorder %s44, 1
      %p350 = por %p348, %p349
      %p352 = scmp.ne.s32.totalorder %s337, %s351
      %p353 = scmp.eq.s32.totalorder %s44, 0
      %p354 = por %p352, %p353
      %s356 = sadd.s32 %s355, 1
      %p359 = scmp.eq.s32.totalorder %s38, 1
      %p360 = scmp.ne.s32.totalorder %s355, %s357
      %p361 = scmp.eq.s32.totalorder %s38, 0
      %p362 = por %p360, %p361
      %p363 = scmp.ne.s32.totalorder %s355, %s357
      %p364 = scmp.eq.s32.totalorder %s43, 1
      %p365 = por %p363, %p364
      %p366 = scmp.ne.s32.totalorder %s357, %s358
      %p367 = scmp.eq.s32.totalorder %s43, 0
      %p368 = por %p366, %p367
      %p369 = scmp.ne.s32.totalorder %s357, %s358
      %p370 = scmp.eq.s32.totalorder %s44, 1
      %p371 = por %p369, %p370
      %p373 = scmp.ne.s32.totalorder %s358, %s372
      %p374 = scmp.eq.s32.totalorder %s44, 0
      %p375 = por %p373, %p374
      %s376 = ssub.s32 %s38, %s45
      %p377 = scmp.eq.s32.totalorder %s376, 0
      %s379 = sadd.s32 %s378, 1
      %s380 = scalar_select %p377, %s378, %s379
      %p383 = pneg %p377
      %p384 = scmp.eq.s32.totalorder %s38, 1
      %p385 = por %p383, %p384
      %p386 = scmp.ne.s32.totalorder %s378, %s381
      %p387 = scmp.eq.s32.totalorder %s38, 0
      %p388 = por %p386, %p387
      %p389 = scmp.ne.s32.totalorder %s378, %s381
      %p390 = scmp.eq.s32.totalorder %s43, 1
      %p391 = por %p389, %p390
      %p392 = scmp.ne.s32.totalorder %s381, %s382
      %p393 = scmp.eq.s32.totalorder %s43, 0
      %p394 = por %p392, %p393
      %p395 = scmp.ne.s32.totalorder %s381, %s382
      %p396 = scmp.eq.s32.totalorder %s44, 1
      %p397 = por %p395, %p396
      %p399 = scmp.ne.s32.totalorder %s382, %s398
      %p400 = scmp.eq.s32.totalorder %s44, 0
      %p401 = por %p399, %p400
      %s402 = ssub.s32 %s38, %s45
      %p403 = scmp.eq.s32.totalorder %s402, 0
      %s405 = sadd.s32 %s404, 1
      %s406 = scalar_select %p403, %s404, %s405
      %p409 = pneg %p403
      %p410 = scmp.eq.s32.totalorder %s38, 1
      %p411 = por %p409, %p410
      %p412 = scmp.ne.s32.totalorder %s404, %s407
      %p413 = scmp.eq.s32.totalorder %s38, 0
      %p414 = por %p412, %p413
      %p415 = scmp.ne.s32.totalorder %s404, %s407
      %p416 = scmp.eq.s32.totalorder %s43, 1
      %p417 = por %p415, %p416
      %p418 = scmp.ne.s32.totalorder %s407, %s408
      %p419 = scmp.eq.s32.totalorder %s43, 0
      %p420 = por %p418, %p419
      %p421 = scmp.ne.s32.totalorder %s407, %s408
      %p422 = scmp.eq.s32.totalorder %s44, 1
      %p423 = por %p421, %p422
      %p425 = scmp.ne.s32.totalorder %s408, %s424
      %p426 = scmp.eq.s32.totalorder %s44, 0
      %p427 = por %p425, %p426
      %p428 = scmp.le.s32.totalorder 1, %s38
      %p429 = scmp.lt.s32.totalorder %s38, 3
      %p430 = pnand %p428, %p429
      %p431 = pneg %p430
      // Predicated region
      $region9: #{_gsfusion_call.1} parent=5 // pred_check
        _
      $region10: #{_gsfusion_call.1} parent=5 // pred_check_branch
        %433 = sbr.rel (%p430) target = $region12
      $region11: #{_gsfusion_call.1} parent=5 // pred_region
        %s434 = ssub.s32 %s38, 1
        // Predicated region
        $region13: #{_gsfusion_call.1} parent=11 // pred_check
          %p435 = pneg %p137
        $region14: #{_gsfusion_call.1} parent=11 // pred_check_branch
          %437 = sbr.rel (%p435) target = $region16
        $region15: #{_gsfusion_call.1} parent=11 // pred_region
          %s439 = ssub.s32 16384, 16384
          %440 = vsyncadd [#allocation10], %s439
          %s441 = sshll.u32 [#allocation9], 4
          %s442 = int_to_ptr.vmem [resolvable:$true] %s441
          %447 = dma.hbm_to_vmem [thread:$0]  %s3, 16384, %s442, [#allocation10], 256, 256, 16
        $region16: #{_gsfusion_call.1} parent=11 // pred_fallthru
          _
        // Predicated region
        $region17: #{_gsfusion_call.1} parent=11 // pred_check
          %p448 = pneg %p158
        $region18: #{_gsfusion_call.1} parent=11 // pred_check_branch
          %450 = sbr.rel (%p448) target = $region20
        $region19: #{_gsfusion_call.1} parent=11 // pred_region
          %s452 = ssub.s32 16384, 16384
          %453 = vsyncadd [#allocation10], %s452
          %s454 = sshll.u32 [#allocation11], 4
          %s455 = int_to_ptr.vmem [resolvable:$true] %s454
          %460 = dma.hbm_to_vmem [thread:$0]  %s4, 16384, %s455, [#allocation10], 256, 256, 16
        $region20: #{_gsfusion_call.1} parent=11 // pred_fallthru
          _
        // Predicated region
        $region21: #{_gsfusion_call.1} parent=11 // pred_check
          %p461 = pneg %p179
        $region22: #{_gsfusion_call.1} parent=11 // pred_check_branch
          %463 = sbr.rel (%p461) target = $region24
        $region23: #{_gsfusion_call.1} parent=11 // pred_region
          _
        $region24: #{_gsfusion_call.1} parent=11 // pred_fallthru
          _
        // Predicated region
        $region25: #{_gsfusion_call.1} parent=11 // pred_check
          %p464 = pneg %p200
        $region26: #{_gsfusion_call.1} parent=11 // pred_check_branch
          %466 = sbr.rel (%p464) target = $region28
        $region27: #{_gsfusion_call.1} parent=11 // pred_region
          %s468 = ssub.s32 16384, 16384
          %469 = vsyncadd [#allocation13], %s468
          %s470 = sshll.u32 [#allocation12], 4
          %s471 = int_to_ptr.vmem [resolvable:$true] %s470
          %476 = dma.hbm_to_vmem [thread:$0]  %s6, 16384, %s471, [#allocation13], 256, 256, 16
        $region28: #{_gsfusion_call.1} parent=11 // pred_fallthru
          _
        // Predicated region
        $region29: #{_gsfusion_call.1} parent=11 // pred_check
          %p477 = pneg %p221
        $region30: #{_gsfusion_call.1} parent=11 // pred_check_branch
          %479 = sbr.rel (%p477) target = $region32
        $region31: #{_gsfusion_call.1} parent=11 // pred_region
          _
        $region32: #{_gsfusion_call.1} parent=11 // pred_fallthru
          _
        // Predicated region
        $region33: #{_gsfusion_call.1} parent=11 // pred_check
          %p480 = pneg %p242
        $region34: #{_gsfusion_call.1} parent=11 // pred_check_branch
          %482 = sbr.rel (%p480) target = $region36
        $region35: #{_gsfusion_call.1} parent=11 // pred_region
          %s484 = ssub.s32 16384, 16384
          %485 = vsyncadd [#allocation13], %s484
          %s486 = sshll.u32 [#allocation14], 4
          %s487 = int_to_ptr.vmem [resolvable:$true] %s486
          %492 = dma.hbm_to_vmem [thread:$0]  %s8, 16384, %s487, [#allocation13], 256, 256, 16
        $region36: #{_gsfusion_call.1} parent=11 // pred_fallthru
          _
        // Predicated region
        $region37: #{_gsfusion_call.1} parent=11 // pred_check
          %p493 = pneg %p263
        $region38: #{_gsfusion_call.1} parent=11 // pred_check_branch
          %495 = sbr.rel (%p493) target = $region40
        $region39: #{_gsfusion_call.1} parent=11 // pred_region
          _
        $region40: #{_gsfusion_call.1} parent=11 // pred_fallthru
          _
        // Predicated region
        $region41: #{_gsfusion_call.1} parent=11 // pred_check
          %p496 = pneg %p284
        $region42: #{_gsfusion_call.1} parent=11 // pred_check_branch
          %498 = sbr.rel (%p496) target = $region44
        $region43: #{_gsfusion_call.1} parent=11 // pred_region
          _
        $region44: #{_gsfusion_call.1} parent=11 // pred_fallthru
          _
        // Predicated region
        $region45: #{_gsfusion_call.1} parent=11 // pred_check
          %p499 = pneg %p305
        $region46: #{_gsfusion_call.1} parent=11 // pred_check_branch
          %501 = sbr.rel (%p499) target = $region48
        $region47: #{_gsfusion_call.1} parent=11 // pred_region
          _
        $region48: #{_gsfusion_call.1} parent=11 // pred_fallthru
          _
        // Predicated region
        $region49: #{_gsfusion_call.1} parent=11 // pred_check
          %p502 = pneg %p326
        $region50: #{_gsfusion_call.1} parent=11 // pred_check_branch
          %504 = sbr.rel (%p502) target = $region52
        $region51: #{_gsfusion_call.1} parent=11 // pred_region
          _
        $region52: #{_gsfusion_call.1} parent=11 // pred_fallthru
          _
        // Predicated region
        $region53: #{_gsfusion_call.1} parent=11 // pred_check
          %p505 = pneg %p347
        $region54: #{_gsfusion_call.1} parent=11 // pred_check_branch
          %507 = sbr.rel (%p505) target = $region56
        $region55: #{_gsfusion_call.1} parent=11 // pred_region
          _
        $region56: #{_gsfusion_call.1} parent=11 // pred_fallthru
          _
        // Predicated region
        $region57: #{_gsfusion_call.1} parent=11 // pred_check
          %p508 = pneg %p368
        $region58: #{_gsfusion_call.1} parent=11 // pred_check_branch
          %510 = sbr.rel (%p508) target = $region60
        $region59: #{_gsfusion_call.1} parent=11 // pred_region
          _
        $region60: #{_gsfusion_call.1} parent=11 // pred_fallthru
          _
      $region12: #{_gsfusion_call.1} parent=5 // pred_fallthru
        _
      %p511 = scmp.lt.s32.totalorder %s38, 2
      // Predicated region
      $region61: #{_gsfusion_call.1} parent=5 // pred_check
        %p512 = pneg %p511
      $region62: #{_gsfusion_call.1} parent=5 // pred_check_branch
        %514 = sbr.rel (%p512) target = $region64
      $region63: #{_gsfusion_call.1} parent=5 // pred_region
        // Predicated region
        $region65: #{_gsfusion_call.1} parent=63 // pred_check
          %p515 = pneg %p58
        $region66: #{_gsfusion_call.1} parent=63 // pred_check_branch
          %517 = sbr.rel (%p515) target = $region68
        $region67: #{_gsfusion_call.1} parent=63 // pred_region
          %s518 = sand.u32 %s48, 1
          %s519 = scalar_lea.sflag [#allocation4], %s518
          %s520 = sand.u32 %s48, 1
          %s521 = smul.addr %s520, 16
          %s522 = scalar_lea.vmem [#allocation3], %s521
          %s524 = ssub.s32 256, 256
          %525 = vsyncadd %s519, %s524
          %s526 = smul.addr %s38, 4
          %s527 = smul.addr %s526, 64
          %s528 = scalar_lea.hbm %s0, %s527
          %s530 = sshll.u32 %s522, 4
          %s531 = int_to_ptr.vmem [resolvable:$true] %s530
          %533 = dma.hbm_to_vmem [thread:$0]  %s528, 256, %s531, %s519
        $region68: #{_gsfusion_call.1} parent=63 // pred_fallthru
          _
        // Predicated region
        $region69: #{_gsfusion_call.1} parent=63 // pred_check
          %p534 = pneg %p84
        $region70: #{_gsfusion_call.1} parent=63 // pred_check_branch
          %536 = sbr.rel (%p534) target = $region72
        $region71: #{_gsfusion_call.1} parent=63 // pred_region
          %s537 = sand.u32 %s38, 1
          %s538 = scalar_lea.sflag [#allocation7], %s537
          %s539 = sand.u32 %s74, 1
          %s540 = smul.addr %s539, 16
          %s541 = scalar_lea.vmem [#allocation6], %s540
          %s543 = ssub.s32 256, 256
          %544 = vsyncadd %s538, %s543
          %s545 = smul.addr %s38, 4
          %s546 = smul.addr %s545, 64
          %s547 = scalar_lea.hbm %s1, %s546
          %s549 = sshll.u32 %s541, 4
          %s550 = int_to_ptr.vmem [resolvable:$true] %s549
          %552 = dma.hbm_to_vmem [thread:$0]  %s547, 256, %s550, %s538
        $region72: #{_gsfusion_call.1} parent=63 // pred_fallthru
          _
        // Predicated region
        $region73: #{_gsfusion_call.1} parent=63 // pred_check
          %p553 = pneg %p110
        $region74: #{_gsfusion_call.1} parent=63 // pred_check_branch
          %555 = sbr.rel (%p553) target = $region76
        $region75: #{_gsfusion_call.1} parent=63 // pred_region
          %s556 = sand.u32 %s38, 1
          %s557 = scalar_lea.sflag [#allocation7], %s556
          %s558 = sand.u32 %s100, 1
          %s559 = smul.addr %s558, 32
          %s560 = scalar_lea.vmem [#allocation8], %s559
          %s562 = ssub.s32 512, 512
          %563 = vsyncadd %s557, %s562
          %s564 = smul.addr %s38, 4
          %s565 = smul.addr %s564, 128
          %s566 = scalar_lea.hbm %s2, %s565
          %s568 = sshll.u32 %s560, 4
          %s569 = int_to_ptr.vmem [resolvable:$true] %s568
          %571 = dma.hbm_to_vmem [thread:$0]  %s566, 512, %s569, %s557
        $region76: #{_gsfusion_call.1} parent=63 // pred_fallthru
          _
      $region64: #{_gsfusion_call.1} parent=5 // pred_fallthru
        _
      %p572 = scmp.le.s32.totalorder 1, %s38
      %p573 = scmp.lt.s32.totalorder %s38, 3
      %p574 = pnand %p572, %p573
      %p575 = pneg %p574
      // Predicated region
      $region77: #{_gsfusion_call.1} parent=5 // pred_check
        _
      $region78: #{_gsfusion_call.1} parent=5 // pred_check_branch
        %577 = sbr.rel (%p574) target = $region80
      $region79: #{_gsfusion_call.1} parent=5 // pred_region
        %s578 = ssub.s32 %s38, 1
        %s579 = sand.u32 %s51, 1
        %s580 = scalar_lea.sflag [#allocation4], %s579
        %s581 = sand.u32 %s51, 1
        %s582 = smul.addr %s581, 16
        %s583 = scalar_lea.vmem [#allocation3], %s582
        // Predicated region
        $region81: #{_gsfusion_call.1} parent=79 // pred_check
          %p584 = pneg %p64
        $region82: #{_gsfusion_call.1} parent=79 // pred_check_branch
          %586 = sbr.rel (%p584) target = $region84
        $region83: #{_gsfusion_call.1} parent=79 // pred_region
          %587 = dma.done %s580, 256
        $region84: #{_gsfusion_call.1} parent=79 // pred_fallthru
          _
        %s588 = sand.u32 %s43, 1
        %s589 = scalar_lea.sflag [#allocation7], %s588
        %s590 = sand.u32 %s77, 1
        %s591 = smul.addr %s590, 16
        %s592 = scalar_lea.vmem [#allocation6], %s591
        // Predicated region
        $region85: #{_gsfusion_call.1} parent=79 // pred_check
          %p593 = pneg %p90
        $region86: #{_gsfusion_call.1} parent=79 // pred_check_branch
          %595 = sbr.rel (%p593) target = $region88
        $region87: #{_gsfusion_call.1} parent=79 // pred_region
          %596 = dma.done %s589, 256
        $region88: #{_gsfusion_call.1} parent=79 // pred_fallthru
          _
        %s597 = sand.u32 %s43, 1
        %s598 = scalar_lea.sflag [#allocation7], %s597
        %s599 = sand.u32 %s103, 1
        %s600 = smul.addr %s599, 32
        %s601 = scalar_lea.vmem [#allocation8], %s600
        // Predicated region
        $region89: #{_gsfusion_call.1} parent=79 // pred_check
          %p602 = pneg %p116
        $region90: #{_gsfusion_call.1} parent=79 // pred_check_branch
          %604 = sbr.rel (%p602) target = $region92
        $region91: #{_gsfusion_call.1} parent=79 // pred_region
          %605 = dma.done %s598, 512
        $region92: #{_gsfusion_call.1} parent=79 // pred_fallthru
          _
        // Predicated region
        $region93: #{_gsfusion_call.1} parent=79 // pred_check
          %p606 = pneg %p137
        $region94: #{_gsfusion_call.1} parent=79 // pred_check_branch
          %608 = sbr.rel (%p606) target = $region96
        $region95: #{_gsfusion_call.1} parent=79 // pred_region
          %609 = dma.done [#allocation10], 16384
        $region96: #{_gsfusion_call.1} parent=79 // pred_fallthru
          _
        // Predicated region
        $region97: #{_gsfusion_call.1} parent=79 // pred_check
          %p610 = pneg %p158
        $region98: #{_gsfusion_call.1} parent=79 // pred_check_branch
          %612 = sbr.rel (%p610) target = $region100
        $region99: #{_gsfusion_call.1} parent=79 // pred_region
          %613 = dma.done [#allocation10], 16384
        $region100: #{_gsfusion_call.1} parent=79 // pred_fallthru
          _
        // Predicated region
        $region101: #{_gsfusion_call.1} parent=79 // pred_check
          %p614 = pneg %p200
        $region102: #{_gsfusion_call.1} parent=79 // pred_check_branch
          %616 = sbr.rel (%p614) target = $region104
        $region103: #{_gsfusion_call.1} parent=79 // pred_region
          %617 = dma.done [#allocation13], 16384
        $region104: #{_gsfusion_call.1} parent=79 // pred_fallthru
          _
        // Predicated region
        $region105: #{_gsfusion_call.1} parent=79 // pred_check
          %p618 = pneg %p242
        $region106: #{_gsfusion_call.1} parent=79 // pred_check_branch
          %620 = sbr.rel (%p618) target = $region108
        $region107: #{_gsfusion_call.1} parent=79 // pred_region
          %621 = dma.done [#allocation13], 16384
        $region108: #{_gsfusion_call.1} parent=79 // pred_fallthru
          _
        %s622 = sand.u32 %s51, 1
        %s623 = scalar_lea.sflag [#allocation4], %s622
        %s624 = sand.u32 %s51, 1
        %s625 = smul.addr %s624, 16
        %s626 = scalar_lea.vmem [#allocation3], %s625
        %p627 = pneg %p64
        %p628 = pneg %p61
        %s629 = sand.u32 %s43, 1
        %s630 = scalar_lea.sflag [#allocation7], %s629
        %s631 = sand.u32 %s77, 1
        %s632 = smul.addr %s631, 16
        %s633 = scalar_lea.vmem [#allocation6], %s632
        %p634 = pneg %p90
        %p635 = pneg %p87
        %s636 = sand.u32 %s43, 1
        %s637 = scalar_lea.sflag [#allocation7], %s636
        %s638 = sand.u32 %s103, 1
        %s639 = smul.addr %s638, 32
        %s640 = scalar_lea.vmem [#allocation8], %s639
        %p641 = pneg %p116
        %p642 = pneg %p113
        %p643 = pneg %p137
        %p644 = pneg %p134
        %p645 = pneg %p158
        %p646 = pneg %p155
        %p647 = pneg %p179
        %p648 = pneg %p176
        %p649 = pneg %p200
        %p650 = pneg %p197
        %p651 = pneg %p221
        %p652 = pneg %p218
        %p653 = pneg %p242
        %p654 = pneg %p239
        %p655 = pneg %p263
        %p656 = pneg %p260
        %p657 = pneg %p284
        %p658 = pneg %p281
        %p659 = pneg %p305
        %p660 = pneg %p302
        %p661 = pneg %p326
        %p662 = pneg %p323
        %p663 = pneg %p347
        %p664 = pneg %p344
        %p665 = pneg %p368
        %p666 = pneg %p365
        %p667 = pneg %p394
        %p668 = pneg %p391
        %s669 = sand.u32 %s381, 1
        %s670 = scalar_lea.sflag [#allocation5], %s669
        %s671 = sand.u32 %s381, 1
        %s672 = smul.addr %s671, 16
        %s673 = scalar_lea.vmem [#allocation15], %s672
        %p674 = pneg %p420
        %p675 = pneg %p417
        %s676 = sand.u32 %s407, 1
        %s677 = scalar_lea.sflag [#allocation17], %s676
        %s678 = sand.u32 %s407, 1
        %s679 = smul.addr %s678, 32
        %s680 = scalar_lea.vmem [#allocation16], %s679
        %v681 = vld [vmem:[%s583] sm:$0xff]
        %v682 = vld [vmem:[%s583 + $0x8] sm:$0xff]
        %v683 = vld [vmem:[%s592] sm:$0xff]
        %v684 = vld [vmem:[%s592 + $0x8] sm:$0xff]
        %v685 = vunpack.c.l.bf16 %v681
        %v686 = vunpack.c.h.bf16 %v681
        %v687 = vunpack.c.l.bf16 %v682
        %v688 = vunpack.c.h.bf16 %v682
        %v689 = vld [vmem:[%s601] sm:$0xff]
        %v690 = vld [vmem:[%s601 + $0x8] sm:$0xff]
        %v691 = vld [vmem:[%s601 + $0x10] sm:$0xff]
        %v692 = vld [vmem:[%s601 + $0x18] sm:$0xff]
        %v693 = vld [vmem:[#allocation9] sm:$0xff]
        %v694 = vld [vmem:[#allocation9 + $0x8] sm:$0xff]
        %v695 = vld [vmem:[#allocation9 + $0x10] sm:$0xff]
        %v696 = vld [vmem:[#allocation9 + $0x18] sm:$0xff]
        %v697 = vld [vmem:[#allocation9 + $0x20] sm:$0xff]
        %v698 = vld [vmem:[#allocation9 + $0x28] sm:$0xff]
        %v699 = vld [vmem:[#allocation9 + $0x30] sm:$0xff]
        %v700 = vld [vmem:[#allocation9 + $0x38] sm:$0xff]
        %v701 = vld [vmem:[#allocation9 + $0x40] sm:$0xff]
        %v702 = vld [vmem:[#allocation9 + $0x48] sm:$0xff]
        %v703 = vld [vmem:[#allocation9 + $0x50] sm:$0xff]
        %v704 = vld [vmem:[#allocation9 + $0x58] sm:$0xff]
        %v705 = vld [vmem:[#allocation9 + $0x60] sm:$0xff]
        %v706 = vld [vmem:[#allocation9 + $0x68] sm:$0xff]
        %v707 = vld [vmem:[#allocation9 + $0x70] sm:$0xff]
        %v708 = vld [vmem:[#allocation9 + $0x78] sm:$0xff]
        %v709 = vld [vmem:[#allocation9 + $0x80] sm:$0xff]
        %v710 = vld [vmem:[#allocation9 + $0x88] sm:$0xff]
        %v711 = vld [vmem:[#allocation9 + $0x90] sm:$0xff]
        %v712 = vld [vmem:[#allocation9 + $0x98] sm:$0xff]
        %v713 = vld [vmem:[#allocation9 + $0xa0] sm:$0xff]
        %v714 = vld [vmem:[#allocation9 + $0xa8] sm:$0xff]
        %v715 = vld [vmem:[#allocation9 + $0xb0] sm:$0xff]
        %v716 = vld [vmem:[#allocation9 + $0xb8] sm:$0xff]
        %v717 = vld [vmem:[#allocation9 + $0xc0] sm:$0xff]
        %v718 = vld [vmem:[#allocation9 + $0xc8] sm:$0xff]
        %v719 = vld [vmem:[#allocation9 + $0xd0] sm:$0xff]
        %v720 = vld [vmem:[#allocation9 + $0xd8] sm:$0xff]
        %v721 = vld [vmem:[#allocation9 + $0xe0] sm:$0xff]
        %v722 = vld [vmem:[#allocation9 + $0xe8] sm:$0xff]
        %v723 = vld [vmem:[#allocation9 + $0xf0] sm:$0xff]
        %v724 = vld [vmem:[#allocation9 + $0xf8] sm:$0xff]
        %v725 = vld [vmem:[#allocation9 + $0x100] sm:$0xff]
        %v726 = vld [vmem:[#allocation9 + $0x108] sm:$0xff]
        %v727 = vld [vmem:[#allocation9 + $0x110] sm:$0xff]
        %v728 = vld [vmem:[#allocation9 + $0x118] sm:$0xff]
        %v729 = vld [vmem:[#allocation9 + $0x120] sm:$0xff]
        %v730 = vld [vmem:[#allocation9 + $0x128] sm:$0xff]
        %v731 = vld [vmem:[#allocation9 + $0x130] sm:$0xff]
        %v732 = vld [vmem:[#allocation9 + $0x138] sm:$0xff]
        %v733 = vld [vmem:[#allocation9 + $0x140] sm:$0xff]
        %v734 = vld [vmem:[#allocation9 + $0x148] sm:$0xff]
        %v735 = vld [vmem:[#allocation9 + $0x150] sm:$0xff]
        %v736 = vld [vmem:[#allocation9 + $0x158] sm:$0xff]
        %v737 = vld [vmem:[#allocation9 + $0x160] sm:$0xff]
        %v738 = vld [vmem:[#allocation9 + $0x168] sm:$0xff]
        %v739 = vld [vmem:[#allocation9 + $0x170] sm:$0xff]
        %v740 = vld [vmem:[#allocation9 + $0x178] sm:$0xff]
        %v741 = vld [vmem:[#allocation9 + $0x180] sm:$0xff]
        %v742 = vld [vmem:[#allocation9 + $0x188] sm:$0xff]
        %v743 = vld [vmem:[#allocation9 + $0x190] sm:$0xff]
        %v744 = vld [vmem:[#allocation9 + $0x198] sm:$0xff]
        %v745 = vld [vmem:[#allocation9 + $0x1a0] sm:$0xff]
        %v746 = vld [vmem:[#allocation9 + $0x1a8] sm:$0xff]
        %v747 = vld [vmem:[#allocation9 + $0x1b0] sm:$0xff]
        %v748 = vld [vmem:[#allocation9 + $0x1b8] sm:$0xff]
        %v749 = vld [vmem:[#allocation9 + $0x1c0] sm:$0xff]
        %v750 = vld [vmem:[#allocation9 + $0x1c8] sm:$0xff]
        %v751 = vld [vmem:[#allocation9 + $0x1d0] sm:$0xff]
        %v752 = vld [vmem:[#allocation9 + $0x1d8] sm:$0xff]
        %v753 = vld [vmem:[#allocation9 + $0x1e0] sm:$0xff]
        %v754 = vld [vmem:[#allocation9 + $0x1e8] sm:$0xff]
        %v755 = vld [vmem:[#allocation9 + $0x1f0] sm:$0xff]
        %v756 = vld [vmem:[#allocation9 + $0x1f8] sm:$0xff]
        %v757 = vld [vmem:[#allocation9 + $0x200] sm:$0xff]
        %v758 = vld [vmem:[#allocation9 + $0x208] sm:$0xff]
        %v759 = vld [vmem:[#allocation9 + $0x210] sm:$0xff]
        %v760 = vld [vmem:[#allocation9 + $0x218] sm:$0xff]
        %v761 = vld [vmem:[#allocation9 + $0x220] sm:$0xff]
        %v762 = vld [vmem:[#allocation9 + $0x228] sm:$0xff]
        %v763 = vld [vmem:[#allocation9 + $0x230] sm:$0xff]
        %v764 = vld [vmem:[#allocation9 + $0x238] sm:$0xff]
        %v765 = vld [vmem:[#allocation9 + $0x240] sm:$0xff]
        %v766 = vld [vmem:[#allocation9 + $0x248] sm:$0xff]
        %v767 = vld [vmem:[#allocation9 + $0x250] sm:$0xff]
        %v768 = vld [vmem:[#allocation9 + $0x258] sm:$0xff]
        %v769 = vld [vmem:[#allocation9 + $0x260] sm:$0xff]
        %v770 = vld [vmem:[#allocation9 + $0x268] sm:$0xff]
        %v771 = vld [vmem:[#allocation9 + $0x270] sm:$0xff]
        %v772 = vld [vmem:[#allocation9 + $0x278] sm:$0xff]
        %v773 = vld [vmem:[#allocation9 + $0x280] sm:$0xff]
        %v774 = vld [vmem:[#allocation9 + $0x288] sm:$0xff]
        %v775 = vld [vmem:[#allocation9 + $0x290] sm:$0xff]
        %v776 = vld [vmem:[#allocation9 + $0x298] sm:$0xff]
        %v777 = vld [vmem:[#allocation9 + $0x2a0] sm:$0xff]
        %v778 = vld [vmem:[#allocation9 + $0x2a8] sm:$0xff]
        %v779 = vld [vmem:[#allocation9 + $0x2b0] sm:$0xff]
        %v780 = vld [vmem:[#allocation9 + $0x2b8] sm:$0xff]
        %v781 = vld [vmem:[#allocation9 + $0x2c0] sm:$0xff]
        %v782 = vld [vmem:[#allocation9 + $0x2c8] sm:$0xff]
        %v783 = vld [vmem:[#allocation9 + $0x2d0] sm:$0xff]
        %v784 = vld [vmem:[#allocation9 + $0x2d8] sm:$0xff]
        %v785 = vld [vmem:[#allocation9 + $0x2e0] sm:$0xff]
        %v786 = vld [vmem:[#allocation9 + $0x2e8] sm:$0xff]
        %v787 = vld [vmem:[#allocation9 + $0x2f0] sm:$0xff]
        %v788 = vld [vmem:[#allocation9 + $0x2f8] sm:$0xff]
        %v789 = vld [vmem:[#allocation9 + $0x300] sm:$0xff]
        %v790 = vld [vmem:[#allocation9 + $0x308] sm:$0xff]
        %v791 = vld [vmem:[#allocation9 + $0x310] sm:$0xff]
        %v792 = vld [vmem:[#allocation9 + $0x318] sm:$0xff]
        %v793 = vld [vmem:[#allocation9 + $0x320] sm:$0xff]
        %v794 = vld [vmem:[#allocation9 + $0x328] sm:$0xff]
        %v795 = vld [vmem:[#allocation9 + $0x330] sm:$0xff]
        %v796 = vld [vmem:[#allocation9 + $0x338] sm:$0xff]
        %v797 = vld [vmem:[#allocation9 + $0x340] sm:$0xff]
        %v798 = vld [vmem:[#allocation9 + $0x348] sm:$0xff]
        %v799 = vld [vmem:[#allocation9 + $0x350] sm:$0xff]
        %v800 = vld [vmem:[#allocation9 + $0x358] sm:$0xff]
        %v801 = vld [vmem:[#allocation9 + $0x360] sm:$0xff]
        %v802 = vld [vmem:[#allocation9 + $0x368] sm:$0xff]
        %v803 = vld [vmem:[#allocation9 + $0x370] sm:$0xff]
        %v804 = vld [vmem:[#allocation9 + $0x378] sm:$0xff]
        %v805 = vld [vmem:[#allocation9 + $0x380] sm:$0xff]
        %v806 = vld [vmem:[#allocation9 + $0x388] sm:$0xff]
        %v807 = vld [vmem:[#allocation9 + $0x390] sm:$0xff]
        %v808 = vld [vmem:[#allocation9 + $0x398] sm:$0xff]
        %v809 = vld [vmem:[#allocation9 + $0x3a0] sm:$0xff]
        %v810 = vld [vmem:[#allocation9 + $0x3a8] sm:$0xff]
        %v811 = vld [vmem:[#allocation9 + $0x3b0] sm:$0xff]
        %v812 = vld [vmem:[#allocation9 + $0x3b8] sm:$0xff]
        %v813 = vld [vmem:[#allocation9 + $0x3c0] sm:$0xff]
        %v814 = vld [vmem:[#allocation9 + $0x3c8] sm:$0xff]
        %v815 = vld [vmem:[#allocation9 + $0x3d0] sm:$0xff]
        %v816 = vld [vmem:[#allocation9 + $0x3d8] sm:$0xff]
        %v817 = vld [vmem:[#allocation9 + $0x3e0] sm:$0xff]
        %v818 = vld [vmem:[#allocation9 + $0x3e8] sm:$0xff]
        %v819 = vld [vmem:[#allocation9 + $0x3f0] sm:$0xff]
        %v820 = vld [vmem:[#allocation9 + $0x3f8] sm:$0xff]
        %v821 = vld [vmem:[#allocation11] sm:$0xff]
        %v822 = vld [vmem:[#allocation11 + $0x8] sm:$0xff]
        %v823 = vld [vmem:[#allocation11 + $0x10] sm:$0xff]
        %v824 = vld [vmem:[#allocation11 + $0x18] sm:$0xff]
        %v825 = vld [vmem:[#allocation11 + $0x20] sm:$0xff]
        %v826 = vld [vmem:[#allocation11 + $0x28] sm:$0xff]
        %v827 = vld [vmem:[#allocation11 + $0x30] sm:$0xff]
        %v828 = vld [vmem:[#allocation11 + $0x38] sm:$0xff]
        %v829 = vld [vmem:[#allocation11 + $0x40] sm:$0xff]
        %v830 = vld [vmem:[#allocation11 + $0x48] sm:$0xff]
        %v831 = vld [vmem:[#allocation11 + $0x50] sm:$0xff]
        %v832 = vld [vmem:[#allocation11 + $0x58] sm:$0xff]
        %v833 = vld [vmem:[#allocation11 + $0x60] sm:$0xff]
        %v834 = vld [vmem:[#allocation11 + $0x68] sm:$0xff]
        %v835 = vld [vmem:[#allocation11 + $0x70] sm:$0xff]
        %v836 = vld [vmem:[#allocation11 + $0x78] sm:$0xff]
        %v837 = vld [vmem:[#allocation11 + $0x80] sm:$0xff]
        %v838 = vld [vmem:[#allocation11 + $0x88] sm:$0xff]
        %v839 = vld [vmem:[#allocation11 + $0x90] sm:$0xff]
        %v840 = vld [vmem:[#allocation11 + $0x98] sm:$0xff]
        %v841 = vld [vmem:[#allocation11 + $0xa0] sm:$0xff]
        %v842 = vld [vmem:[#allocation11 + $0xa8] sm:$0xff]
        %v843 = vld [vmem:[#allocation11 + $0xb0] sm:$0xff]
        %v844 = vld [vmem:[#allocation11 + $0xb8] sm:$0xff]
        %v845 = vld [vmem:[#allocation11 + $0xc0] sm:$0xff]
        %v846 = vld [vmem:[#allocation11 + $0xc8] sm:$0xff]
        %v847 = vld [vmem:[#allocation11 + $0xd0] sm:$0xff]
        %v848 = vld [vmem:[#allocation11 + $0xd8] sm:$0xff]
        %v849 = vld [vmem:[#allocation11 + $0xe0] sm:$0xff]
        %v850 = vld [vmem:[#allocation11 + $0xe8] sm:$0xff]
        %v851 = vld [vmem:[#allocation11 + $0xf0] sm:$0xff]
        %v852 = vld [vmem:[#allocation11 + $0xf8] sm:$0xff]
        %v853 = vld [vmem:[#allocation11 + $0x100] sm:$0xff]
        %v854 = vld [vmem:[#allocation11 + $0x108] sm:$0xff]
        %v855 = vld [vmem:[#allocation11 + $0x110] sm:$0xff]
        %v856 = vld [vmem:[#allocation11 + $0x118] sm:$0xff]
        %v857 = vld [vmem:[#allocation11 + $0x120] sm:$0xff]
        %v858 = vld [vmem:[#allocation11 + $0x128] sm:$0xff]
        %v859 = vld [vmem:[#allocation11 + $0x130] sm:$0xff]
        %v860 = vld [vmem:[#allocation11 + $0x138] sm:$0xff]
        %v861 = vld [vmem:[#allocation11 + $0x140] sm:$0xff]
        %v862 = vld [vmem:[#allocation11 + $0x148] sm:$0xff]
        %v863 = vld [vmem:[#allocation11 + $0x150] sm:$0xff]
        %v864 = vld [vmem:[#allocation11 + $0x158] sm:$0xff]
        %v865 = vld [vmem:[#allocation11 + $0x160] sm:$0xff]
        %v866 = vld [vmem:[#allocation11 + $0x168] sm:$0xff]
        %v867 = vld [vmem:[#allocation11 + $0x170] sm:$0xff]
        %v868 = vld [vmem:[#allocation11 + $0x178] sm:$0xff]
        %v869 = vld [vmem:[#allocation11 + $0x180] sm:$0xff]
        %v870 = vld [vmem:[#allocation11 + $0x188] sm:$0xff]
        %v871 = vld [vmem:[#allocation11 + $0x190] sm:$0xff]
        %v872 = vld [vmem:[#allocation11 + $0x198] sm:$0xff]
        %v873 = vld [vmem:[#allocation11 + $0x1a0] sm:$0xff]
        %v874 = vld [vmem:[#allocation11 + $0x1a8] sm:$0xff]
        %v875 = vld [vmem:[#allocation11 + $0x1b0] sm:$0xff]
        %v876 = vld [vmem:[#allocation11 + $0x1b8] sm:$0xff]
        %v877 = vld [vmem:[#allocation11 + $0x1c0] sm:$0xff]
        %v878 = vld [vmem:[#allocation11 + $0x1c8] sm:$0xff]
        %v879 = vld [vmem:[#allocation11 + $0x1d0] sm:$0xff]
        %v880 = vld [vmem:[#allocation11 + $0x1d8] sm:$0xff]
        %v881 = vld [vmem:[#allocation11 + $0x1e0] sm:$0xff]
        %v882 = vld [vmem:[#allocation11 + $0x1e8] sm:$0xff]
        %v883 = vld [vmem:[#allocation11 + $0x1f0] sm:$0xff]
        %v884 = vld [vmem:[#allocation11 + $0x1f8] sm:$0xff]
        %v885 = vld [vmem:[#allocation11 + $0x200] sm:$0xff]
        %v886 = vld [vmem:[#allocation11 + $0x208] sm:$0xff]
        %v887 = vld [vmem:[#allocation11 + $0x210] sm:$0xff]
        %v888 = vld [vmem:[#allocation11 + $0x218] sm:$0xff]
        %v889 = vld [vmem:[#allocation11 + $0x220] sm:$0xff]
        %v890 = vld [vmem:[#allocation11 + $0x228] sm:$0xff]
        %v891 = vld [vmem:[#allocation11 + $0x230] sm:$0xff]
        %v892 = vld [vmem:[#allocation11 + $0x238] sm:$0xff]
        %v893 = vld [vmem:[#allocation11 + $0x240] sm:$0xff]
        %v894 = vld [vmem:[#allocation11 + $0x248] sm:$0xff]
        %v895 = vld [vmem:[#allocation11 + $0x250] sm:$0xff]
        %v896 = vld [vmem:[#allocation11 + $0x258] sm:$0xff]
        %v897 = vld [vmem:[#allocation11 + $0x260] sm:$0xff]
        %v898 = vld [vmem:[#allocation11 + $0x268] sm:$0xff]
        %v899 = vld [vmem:[#allocation11 + $0x270] sm:$0xff]
        %v900 = vld [vmem:[#allocation11 + $0x278] sm:$0xff]
        %v901 = vld [vmem:[#allocation11 + $0x280] sm:$0xff]
        %v902 = vld [vmem:[#allocation11 + $0x288] sm:$0xff]
        %v903 = vld [vmem:[#allocation11 + $0x290] sm:$0xff]
        %v904 = vld [vmem:[#allocation11 + $0x298] sm:$0xff]
        %v905 = vld [vmem:[#allocation11 + $0x2a0] sm:$0xff]
        %v906 = vld [vmem:[#allocation11 + $0x2a8] sm:$0xff]
        %v907 = vld [vmem:[#allocation11 + $0x2b0] sm:$0xff]
        %v908 = vld [vmem:[#allocation11 + $0x2b8] sm:$0xff]
        %v909 = vld [vmem:[#allocation11 + $0x2c0] sm:$0xff]
        %v910 = vld [vmem:[#allocation11 + $0x2c8] sm:$0xff]
        %v911 = vld [vmem:[#allocation11 + $0x2d0] sm:$0xff]
        %v912 = vld [vmem:[#allocation11 + $0x2d8] sm:$0xff]
        %v913 = vld [vmem:[#allocation11 + $0x2e0] sm:$0xff]
        %v914 = vld [vmem:[#allocation11 + $0x2e8] sm:$0xff]
        %v915 = vld [vmem:[#allocation11 + $0x2f0] sm:$0xff]
        %v916 = vld [vmem:[#allocation11 + $0x2f8] sm:$0xff]
        %v917 = vld [vmem:[#allocation11 + $0x300] sm:$0xff]
        %v918 = vld [vmem:[#allocation11 + $0x308] sm:$0xff]
        %v919 = vld [vmem:[#allocation11 + $0x310] sm:$0xff]
        %v920 = vld [vmem:[#allocation11 + $0x318] sm:$0xff]
        %v921 = vld [vmem:[#allocation11 + $0x320] sm:$0xff]
        %v922 = vld [vmem:[#allocation11 + $0x328] sm:$0xff]
        %v923 = vld [vmem:[#allocation11 + $0x330] sm:$0xff]
        %v924 = vld [vmem:[#allocation11 + $0x338] sm:$0xff]
        %v925 = vld [vmem:[#allocation11 + $0x340] sm:$0xff]
        %v926 = vld [vmem:[#allocation11 + $0x348] sm:$0xff]
        %v927 = vld [vmem:[#allocation11 + $0x350] sm:$0xff]
        %v928 = vld [vmem:[#allocation11 + $0x358] sm:$0xff]
        %v929 = vld [vmem:[#allocation11 + $0x360] sm:$0xff]
        %v930 = vld [vmem:[#allocation11 + $0x368] sm:$0xff]
        %v931 = vld [vmem:[#allocation11 + $0x370] sm:$0xff]
        %v932 = vld [vmem:[#allocation11 + $0x378] sm:$0xff]
        %v933 = vld [vmem:[#allocation11 + $0x380] sm:$0xff]
        %v934 = vld [vmem:[#allocation11 + $0x388] sm:$0xff]
        %v935 = vld [vmem:[#allocation11 + $0x390] sm:$0xff]
        %v936 = vld [vmem:[#allocation11 + $0x398] sm:$0xff]
        %v937 = vld [vmem:[#allocation11 + $0x3a0] sm:$0xff]
        %v938 = vld [vmem:[#allocation11 + $0x3a8] sm:$0xff]
        %v939 = vld [vmem:[#allocation11 + $0x3b0] sm:$0xff]
        %v940 = vld [vmem:[#allocation11 + $0x3b8] sm:$0xff]
        %v941 = vld [vmem:[#allocation11 + $0x3c0] sm:$0xff]
        %v942 = vld [vmem:[#allocation11 + $0x3c8] sm:$0xff]
        %v943 = vld [vmem:[#allocation11 + $0x3d0] sm:$0xff]
        %v944 = vld [vmem:[#allocation11 + $0x3d8] sm:$0xff]
        %v945 = vld [vmem:[#allocation11 + $0x3e0] sm:$0xff]
        %v946 = vld [vmem:[#allocation11 + $0x3e8] sm:$0xff]
        %v947 = vld [vmem:[#allocation11 + $0x3f0] sm:$0xff]
        %v948 = vld [vmem:[#allocation11 + $0x3f8] sm:$0xff]
        %v951 = vunpack.c.l.b16 %v683
        %v952 = vunpack.c.h.b16 %v683
        %v953 = vunpack.c.l.b16 %v684
        %v954 = vunpack.c.h.b16 %v684
        %v955 = vpack.c.b16 %v951, %v951
        %v956 = vpack.c.b16 %v952, %v952
        %v957 = vpack.c.b16 %v953, %v953
        %v958 = vpack.c.b16 %v954, %v954
        %v1091 = vunpack.c.l.b16 %v821
        %v1092 = vunpack.c.h.b16 %v821
        %v1093 = vunpack.c.l.b16 %v822
        %v1094 = vunpack.c.h.b16 %v822
        %v1095 = vunpack.c.l.b16 %v823
        %v1096 = vunpack.c.h.b16 %v823
        %v1097 = vunpack.c.l.b16 %v824
        %v1098 = vunpack.c.h.b16 %v824
        %v1099 = vunpack.c.l.b16 %v825
        %v1100 = vunpack.c.h.b16 %v825
        %v1101 = vunpack.c.l.b16 %v826
        %v1102 = vunpack.c.h.b16 %v826
        %v1103 = vunpack.c.l.b16 %v827
        %v1104 = vunpack.c.h.b16 %v827
        %v1105 = vunpack.c.l.b16 %v828
        %v1106 = vunpack.c.h.b16 %v828
        %v1107 = vunpack.c.l.b16 %v829
        %v1108 = vunpack.c.h.b16 %v829
        %v1109 = vunpack.c.l.b16 %v830
        %v1110 = vunpack.c.h.b16 %v830
        %v1111 = vunpack.c.l.b16 %v831
        %v1112 = vunpack.c.h.b16 %v831
        %v1113 = vunpack.c.l.b16 %v832
        %v1114 = vunpack.c.h.b16 %v832
        %v1115 = vunpack.c.l.b16 %v833
        %v1116 = vunpack.c.h.b16 %v833
        %v1117 = vunpack.c.l.b16 %v834
        %v1118 = vunpack.c.h.b16 %v834
        %v1119 = vunpack.c.l.b16 %v835
        %v1120 = vunpack.c.h.b16 %v835
        %v1121 = vunpack.c.l.b16 %v836
        %v1122 = vunpack.c.h.b16 %v836
        %v1123 = vunpack.c.l.b16 %v837
        %v1124 = vunpack.c.h.b16 %v837
        %v1125 = vunpack.c.l.b16 %v838
        %v1126 = vunpack.c.h.b16 %v838
        %v1127 = vunpack.c.l.b16 %v839
        %v1128 = vunpack.c.h.b16 %v839
        %v1129 = vunpack.c.l.b16 %v840
        %v1130 = vunpack.c.h.b16 %v840
        %v1131 = vunpack.c.l.b16 %v841
        %v1132 = vunpack.c.h.b16 %v841
        %v1133 = vunpack.c.l.b16 %v842
        %v1134 = vunpack.c.h.b16 %v842
        %v1135 = vunpack.c.l.b16 %v843
        %v1136 = vunpack.c.h.b16 %v843
        %v1137 = vunpack.c.l.b16 %v844
        %v1138 = vunpack.c.h.b16 %v844
        %v1139 = vunpack.c.l.b16 %v845
        %v1140 = vunpack.c.h.b16 %v845
        %v1141 = vunpack.c.l.b16 %v846
        %v1142 = vunpack.c.h.b16 %v846
        %v1143 = vunpack.c.l.b16 %v847
        %v1144 = vunpack.c.h.b16 %v847
        %v1145 = vunpack.c.l.b16 %v848
        %v1146 = vunpack.c.h.b16 %v848
        %v1147 = vunpack.c.l.b16 %v849
        %v1148 = vunpack.c.h.b16 %v849
        %v1149 = vunpack.c.l.b16 %v850
        %v1150 = vunpack.c.h.b16 %v850
        %v1151 = vunpack.c.l.b16 %v851
        %v1152 = vunpack.c.h.b16 %v851
        %v1153 = vunpack.c.l.b16 %v852
        %v1154 = vunpack.c.h.b16 %v852
        %v1155 = vunpack.c.l.b16 %v853
        %v1156 = vunpack.c.h.b16 %v853
        %v1157 = vunpack.c.l.b16 %v854
        %v1158 = vunpack.c.h.b16 %v854
        %v1159 = vunpack.c.l.b16 %v855
        %v1160 = vunpack.c.h.b16 %v855
        %v1161 = vunpack.c.l.b16 %v856
        %v1162 = vunpack.c.h.b16 %v856
        %v1163 = vunpack.c.l.b16 %v857
        %v1164 = vunpack.c.h.b16 %v857
        %v1165 = vunpack.c.l.b16 %v858
        %v1166 = vunpack.c.h.b16 %v858
        %v1167 = vunpack.c.l.b16 %v859
        %v1168 = vunpack.c.h.b16 %v859
        %v1169 = vunpack.c.l.b16 %v860
        %v1170 = vunpack.c.h.b16 %v860
        %v1171 = vunpack.c.l.b16 %v861
        %v1172 = vunpack.c.h.b16 %v861
        %v1173 = vunpack.c.l.b16 %v862
        %v1174 = vunpack.c.h.b16 %v862
        %v1175 = vunpack.c.l.b16 %v863
        %v1176 = vunpack.c.h.b16 %v863
        %v1177 = vunpack.c.l.b16 %v864
        %v1178 = vunpack.c.h.b16 %v864
        %v1179 = vunpack.c.l.b16 %v865
        %v1180 = vunpack.c.h.b16 %v865
        %v1181 = vunpack.c.l.b16 %v866
        %v1182 = vunpack.c.h.b16 %v866
        %v1183 = vunpack.c.l.b16 %v867
        %v1184 = vunpack.c.h.b16 %v867
        %v1185 = vunpack.c.l.b16 %v868
        %v1186 = vunpack.c.h.b16 %v868
        %v1187 = vunpack.c.l.b16 %v869
        %v1188 = vunpack.c.h.b16 %v869
        %v1189 = vunpack.c.l.b16 %v870
        %v1190 = vunpack.c.h.b16 %v870
        %v1191 = vunpack.c.l.b16 %v871
        %v1192 = vunpack.c.h.b16 %v871
        %v1193 = vunpack.c.l.b16 %v872
        %v1194 = vunpack.c.h.b16 %v872
        %v1195 = vunpack.c.l.b16 %v873
        %v1196 = vunpack.c.h.b16 %v873
        %v1197 = vunpack.c.l.b16 %v874
        %v1198 = vunpack.c.h.b16 %v874
        %v1199 = vunpack.c.l.b16 %v875
        %v1200 = vunpack.c.h.b16 %v875
        %v1201 = vunpack.c.l.b16 %v876
        %v1202 = vunpack.c.h.b16 %v876
        %v1203 = vunpack.c.l.b16 %v877
        %v1204 = vunpack.c.h.b16 %v877
        %v1205 = vunpack.c.l.b16 %v878
        %v1206 = vunpack.c.h.b16 %v878
        %v1207 = vunpack.c.l.b16 %v879
        %v1208 = vunpack.c.h.b16 %v879
        %v1209 = vunpack.c.l.b16 %v880
        %v1210 = vunpack.c.h.b16 %v880
        %v1211 = vunpack.c.l.b16 %v881
        %v1212 = vunpack.c.h.b16 %v881
        %v1213 = vunpack.c.l.b16 %v882
        %v1214 = vunpack.c.h.b16 %v882
        %v1215 = vunpack.c.l.b16 %v883
        %v1216 = vunpack.c.h.b16 %v883
        %v1217 = vunpack.c.l.b16 %v884
        %v1218 = vunpack.c.h.b16 %v884
        %v1219 = vunpack.c.l.b16 %v885
        %v1220 = vunpack.c.h.b16 %v885
        %v1221 = vunpack.c.l.b16 %v886
        %v1222 = vunpack.c.h.b16 %v886
        %v1223 = vunpack.c.l.b16 %v887
        %v1224 = vunpack.c.h.b16 %v887
        %v1225 = vunpack.c.l.b16 %v888
        %v1226 = vunpack.c.h.b16 %v888
        %v1227 = vunpack.c.l.b16 %v889
        %v1228 = vunpack.c.h.b16 %v889
        %v1229 = vunpack.c.l.b16 %v890
        %v1230 = vunpack.c.h.b16 %v890
        %v1231 = vunpack.c.l.b16 %v891
        %v1232 = vunpack.c.h.b16 %v891
        %v1233 = vunpack.c.l.b16 %v892
        %v1234 = vunpack.c.h.b16 %v892
        %v1235 = vunpack.c.l.b16 %v893
        %v1236 = vunpack.c.h.b16 %v893
        %v1237 = vunpack.c.l.b16 %v894
        %v1238 = vunpack.c.h.b16 %v894
        %v1239 = vunpack.c.l.b16 %v895
        %v1240 = vunpack.c.h.b16 %v895
        %v1241 = vunpack.c.l.b16 %v896
        %v1242 = vunpack.c.h.b16 %v896
        %v1243 = vunpack.c.l.b16 %v897
        %v1244 = vunpack.c.h.b16 %v897
        %v1245 = vunpack.c.l.b16 %v898
        %v1246 = vunpack.c.h.b16 %v898
        %v1247 = vunpack.c.l.b16 %v899
        %v1248 = vunpack.c.h.b16 %v899
        %v1249 = vunpack.c.l.b16 %v900
        %v1250 = vunpack.c.h.b16 %v900
        %v1251 = vunpack.c.l.b16 %v901
        %v1252 = vunpack.c.h.b16 %v901
        %v1253 = vunpack.c.l.b16 %v902
        %v1254 = vunpack.c.h.b16 %v902
        %v1255 = vunpack.c.l.b16 %v903
        %v1256 = vunpack.c.h.b16 %v903
        %v1257 = vunpack.c.l.b16 %v904
        %v1258 = vunpack.c.h.b16 %v904
        %v1259 = vunpack.c.l.b16 %v905
        %v1260 = vunpack.c.h.b16 %v905
        %v1261 = vunpack.c.l.b16 %v906
        %v1262 = vunpack.c.h.b16 %v906
        %v1263 = vunpack.c.l.b16 %v907
        %v1264 = vunpack.c.h.b16 %v907
        %v1265 = vunpack.c.l.b16 %v908
        %v1266 = vunpack.c.h.b16 %v908
        %v1267 = vunpack.c.l.b16 %v909
        %v1268 = vunpack.c.h.b16 %v909
        %v1269 = vunpack.c.l.b16 %v910
        %v1270 = vunpack.c.h.b16 %v910
        %v1271 = vunpack.c.l.b16 %v911
        %v1272 = vunpack.c.h.b16 %v911
        %v1273 = vunpack.c.l.b16 %v912
        %v1274 = vunpack.c.h.b16 %v912
        %v1275 = vunpack.c.l.b16 %v913
        %v1276 = vunpack.c.h.b16 %v913
        %v1277 = vunpack.c.l.b16 %v914
        %v1278 = vunpack.c.h.b16 %v914
        %v1279 = vunpack.c.l.b16 %v915
        %v1280 = vunpack.c.h.b16 %v915
        %v1281 = vunpack.c.l.b16 %v916
        %v1282 = vunpack.c.h.b16 %v916
        %v1283 = vunpack.c.l.b16 %v917
        %v1284 = vunpack.c.h.b16 %v917
        %v1285 = vunpack.c.l.b16 %v918
        %v1286 = vunpack.c.h.b16 %v918
        %v1287 = vunpack.c.l.b16 %v919
        %v1288 = vunpack.c.h.b16 %v919
        %v1289 = vunpack.c.l.b16 %v920
        %v1290 = vunpack.c.h.b16 %v920
        %v1291 = vunpack.c.l.b16 %v921
        %v1292 = vunpack.c.h.b16 %v921
        %v1293 = vunpack.c.l.b16 %v922
        %v1294 = vunpack.c.h.b16 %v922
        %v1295 = vunpack.c.l.b16 %v923
        %v1296 = vunpack.c.h.b16 %v923
        %v1297 = vunpack.c.l.b16 %v924
        %v1298 = vunpack.c.h.b16 %v924
        %v1299 = vunpack.c.l.b16 %v925
        %v1300 = vunpack.c.h.b16 %v925
        %v1301 = vunpack.c.l.b16 %v926
        %v1302 = vunpack.c.h.b16 %v926
        %v1303 = vunpack.c.l.b16 %v927
        %v1304 = vunpack.c.h.b16 %v927
        %v1305 = vunpack.c.l.b16 %v928
        %v1306 = vunpack.c.h.b16 %v928
        %v1307 = vunpack.c.l.b16 %v929
        %v1308 = vunpack.c.h.b16 %v929
        %v1309 = vunpack.c.l.b16 %v930
        %v1310 = vunpack.c.h.b16 %v930
        %v1311 = vunpack.c.l.b16 %v931
        %v1312 = vunpack.c.h.b16 %v931
        %v1313 = vunpack.c.l.b16 %v932
        %v1314 = vunpack.c.h.b16 %v932
        %v1315 = vunpack.c.l.b16 %v933
        %v1316 = vunpack.c.h.b16 %v933
        %v1317 = vunpack.c.l.b16 %v934
        %v1318 = vunpack.c.h.b16 %v934
        %v1319 = vunpack.c.l.b16 %v935
        %v1320 = vunpack.c.h.b16 %v935
        %v1321 = vunpack.c.l.b16 %v936
        %v1322 = vunpack.c.h.b16 %v936
        %v1323 = vunpack.c.l.b16 %v937
        %v1324 = vunpack.c.h.b16 %v937
        %v1325 = vunpack.c.l.b16 %v938
        %v1326 = vunpack.c.h.b16 %v938
        %v1327 = vunpack.c.l.b16 %v939
        %v1328 = vunpack.c.h.b16 %v939
        %v1329 = vunpack.c.l.b16 %v940
        %v1330 = vunpack.c.h.b16 %v940
        %v1331 = vunpack.c.l.b16 %v941
        %v1332 = vunpack.c.h.b16 %v941
        %v1333 = vunpack.c.l.b16 %v942
        %v1334 = vunpack.c.h.b16 %v942
        %v1335 = vunpack.c.l.b16 %v943
        %v1336 = vunpack.c.h.b16 %v943
        %v1337 = vunpack.c.l.b16 %v944
        %v1338 = vunpack.c.h.b16 %v944
        %v1339 = vunpack.c.l.b16 %v945
        %v1340 = vunpack.c.h.b16 %v945
        %v1341 = vunpack.c.l.b16 %v946
        %v1342 = vunpack.c.h.b16 %v946
        %v1343 = vunpack.c.l.b16 %v947
        %v1344 = vunpack.c.h.b16 %v947
        %v1345 = vunpack.c.l.b16 %v948
        %v1346 = vunpack.c.h.b16 %v948
        %v1347 = vpack.c.b16 %v1095, %v1091
        %v1348 = vpack.c.b16 %v1096, %v1092
        %v1349 = vpack.c.b16 %v1097, %v1093
        %v1350 = vpack.c.b16 %v1098, %v1094
        %v1351 = vpack.c.b16 %v1103, %v1099
        %v1352 = vpack.c.b16 %v1104, %v1100
        %v1353 = vpack.c.b16 %v1105, %v1101
        %v1354 = vpack.c.b16 %v1106, %v1102
        %v1355 = vpack.c.b16 %v1111, %v1107
        %v1356 = vpack.c.b16 %v1112, %v1108
        %v1357 = vpack.c.b16 %v1113, %v1109
        %v1358 = vpack.c.b16 %v1114, %v1110
        %v1359 = vpack.c.b16 %v1119, %v1115
        %v1360 = vpack.c.b16 %v1120, %v1116
        %v1361 = vpack.c.b16 %v1121, %v1117
        %v1362 = vpack.c.b16 %v1122, %v1118
        %v1363 = vpack.c.b16 %v1127, %v1123
        %v1364 = vpack.c.b16 %v1128, %v1124
        %v1365 = vpack.c.b16 %v1129, %v1125
        %v1366 = vpack.c.b16 %v1130, %v1126
        %v1367 = vpack.c.b16 %v1135, %v1131
        %v1368 = vpack.c.b16 %v1136, %v1132
        %v1369 = vpack.c.b16 %v1137, %v1133
        %v1370 = vpack.c.b16 %v1138, %v1134
        %v1371 = vpack.c.b16 %v1143, %v1139
        %v1372 = vpack.c.b16 %v1144, %v1140
        %v1373 = vpack.c.b16 %v1145, %v1141
        %v1374 = vpack.c.b16 %v1146, %v1142
        %v1375 = vpack.c.b16 %v1151, %v1147
        %v1376 = vpack.c.b16 %v1152, %v1148
        %v1377 = vpack.c.b16 %v1153, %v1149
        %v1378 = vpack.c.b16 %v1154, %v1150
        %v1379 = vpack.c.b16 %v1159, %v1155
        %v1380 = vpack.c.b16 %v1160, %v1156
        %v1381 = vpack.c.b16 %v1161, %v1157
        %v1382 = vpack.c.b16 %v1162, %v1158
        %v1383 = vpack.c.b16 %v1167, %v1163
        %v1384 = vpack.c.b16 %v1168, %v1164
        %v1385 = vpack.c.b16 %v1169, %v1165
        %v1386 = vpack.c.b16 %v1170, %v1166
        %v1387 = vpack.c.b16 %v1175, %v1171
        %v1388 = vpack.c.b16 %v1176, %v1172
        %v1389 = vpack.c.b16 %v1177, %v1173
        %v1390 = vpack.c.b16 %v1178, %v1174
        %v1391 = vpack.c.b16 %v1183, %v1179
        %v1392 = vpack.c.b16 %v1184, %v1180
        %v1393 = vpack.c.b16 %v1185, %v1181
        %v1394 = vpack.c.b16 %v1186, %v1182
        %v1395 = vpack.c.b16 %v1191, %v1187
        %v1396 = vpack.c.b16 %v1192, %v1188
        %v1397 = vpack.c.b16 %v1193, %v1189
        %v1398 = vpack.c.b16 %v1194, %v1190
        %v1399 = vpack.c.b16 %v1199, %v1195
        %v1400 = vpack.c.b16 %v1200, %v1196
        %v1401 = vpack.c.b16 %v1201, %v1197
        %v1402 = vpack.c.b16 %v1202, %v1198
        %v1403 = vpack.c.b16 %v1207, %v1203
        %v1404 = vpack.c.b16 %v1208, %v1204
        %v1405 = vpack.c.b16 %v1209, %v1205
        %v1406 = vpack.c.b16 %v1210, %v1206
        %v1407 = vpack.c.b16 %v1215, %v1211
        %v1408 = vpack.c.b16 %v1216, %v1212
        %v1409 = vpack.c.b16 %v1217, %v1213
        %v1410 = vpack.c.b16 %v1218, %v1214
        %v1411 = vpack.c.b16 %v1223, %v1219
        %v1412 = vpack.c.b16 %v1224, %v1220
        %v1413 = vpack.c.b16 %v1225, %v1221
        %v1414 = vpack.c.b16 %v1226, %v1222
        %v1415 = vpack.c.b16 %v1231, %v1227
        %v1416 = vpack.c.b16 %v1232, %v1228
        %v1417 = vpack.c.b16 %v1233, %v1229
        %v1418 = vpack.c.b16 %v1234, %v1230
        %v1419 = vpack.c.b16 %v1239, %v1235
        %v1420 = vpack.c.b16 %v1240, %v1236
        %v1421 = vpack.c.b16 %v1241, %v1237
        %v1422 = vpack.c.b16 %v1242, %v1238
        %v1423 = vpack.c.b16 %v1247, %v1243
        %v1424 = vpack.c.b16 %v1248, %v1244
        %v1425 = vpack.c.b16 %v1249, %v1245
        %v1426 = vpack.c.b16 %v1250, %v1246
        %v1427 = vpack.c.b16 %v1255, %v1251
        %v1428 = vpack.c.b16 %v1256, %v1252
        %v1429 = vpack.c.b16 %v1257, %v1253
        %v1430 = vpack.c.b16 %v1258, %v1254
        %v1431 = vpack.c.b16 %v1263, %v1259
        %v1432 = vpack.c.b16 %v1264, %v1260
        %v1433 = vpack.c.b16 %v1265, %v1261
        %v1434 = vpack.c.b16 %v1266, %v1262
        %v1435 = vpack.c.b16 %v1271, %v1267
        %v1436 = vpack.c.b16 %v1272, %v1268
        %v1437 = vpack.c.b16 %v1273, %v1269
        %v1438 = vpack.c.b16 %v1274, %v1270
        %v1439 = vpack.c.b16 %v1279, %v1275
        %v1440 = vpack.c.b16 %v1280, %v1276
        %v1441 = vpack.c.b16 %v1281, %v1277
        %v1442 = vpack.c.b16 %v1282, %v1278
        %v1443 = vpack.c.b16 %v1287, %v1283
        %v1444 = vpack.c.b16 %v1288, %v1284
        %v1445 = vpack.c.b16 %v1289, %v1285
        %v1446 = vpack.c.b16 %v1290, %v1286
        %v1447 = vpack.c.b16 %v1295, %v1291
        %v1448 = vpack.c.b16 %v1296, %v1292
        %v1449 = vpack.c.b16 %v1297, %v1293
        %v1450 = vpack.c.b16 %v1298, %v1294
        %v1451 = vpack.c.b16 %v1303, %v1299
        %v1452 = vpack.c.b16 %v1304, %v1300
        %v1453 = vpack.c.b16 %v1305, %v1301
        %v1454 = vpack.c.b16 %v1306, %v1302
        %v1455 = vpack.c.b16 %v1311, %v1307
        %v1456 = vpack.c.b16 %v1312, %v1308
        %v1457 = vpack.c.b16 %v1313, %v1309
        %v1458 = vpack.c.b16 %v1314, %v1310
        %v1459 = vpack.c.b16 %v1319, %v1315
        %v1460 = vpack.c.b16 %v1320, %v1316
        %v1461 = vpack.c.b16 %v1321, %v1317
        %v1462 = vpack.c.b16 %v1322, %v1318
        %v1463 = vpack.c.b16 %v1327, %v1323
        %v1464 = vpack.c.b16 %v1328, %v1324
        %v1465 = vpack.c.b16 %v1329, %v1325
        %v1466 = vpack.c.b16 %v1330, %v1326
        %v1467 = vpack.c.b16 %v1335, %v1331
        %v1468 = vpack.c.b16 %v1336, %v1332
        %v1469 = vpack.c.b16 %v1337, %v1333
        %v1470 = vpack.c.b16 %v1338, %v1334
        %v1471 = vpack.c.b16 %v1343, %v1339
        %v1472 = vpack.c.b16 %v1344, %v1340
        %v1473 = vpack.c.b16 %v1345, %v1341
        %v1474 = vpack.c.b16 %v1346, %v1342
        %1603 = vmatprep.subr.bf16.mxu0 %v1348
        %1604 = vmatpush1.bf16.msra.mxu0 %v1347
        %1605 = vmatprep.subr.bf16.mxu0 %v1352
        %1606 = vmatpush1.bf16.msra.mxu0 %v1351
        %1607 = vmatprep.subr.bf16.mxu0 %v1356
        %1608 = vmatpush1.bf16.msra.mxu0 %v1355
        %1609 = vmatprep.subr.bf16.mxu0 %v1360
        %1610 = vmatpush1.bf16.msra.mxu0 %v1359
        %1611 = vmatprep.subr.bf16.mxu0 %v1364
        %1612 = vmatpush1.bf16.msra.mxu0 %v1363
        %1613 = vmatprep.subr.bf16.mxu0 %v1368
        %1614 = vmatpush1.bf16.msra.mxu0 %v1367
        %1615 = vmatprep.subr.bf16.mxu0 %v1372
        %1616 = vmatpush1.bf16.msra.mxu0 %v1371
        %1617 = vmatprep.subr.bf16.mxu0 %v1376
        %1618 = vmatpush1.bf16.msra.mxu0 %v1375
        %1619 = vmatprep.subr.bf16.mxu0 %v1380
        %1620 = vmatpush1.bf16.msra.mxu0 %v1379
        %1621 = vmatprep.subr.bf16.mxu0 %v1384
        %1622 = vmatpush1.bf16.msra.mxu0 %v1383
        %1623 = vmatprep.subr.bf16.mxu0 %v1388
        %1624 = vmatpush1.bf16.msra.mxu0 %v1387
        %1625 = vmatprep.subr.bf16.mxu0 %v1392
        %1626 = vmatpush1.bf16.msra.mxu0 %v1391
        %1627 = vmatprep.subr.bf16.mxu0 %v1396
        %1628 = vmatpush1.bf16.msra.mxu0 %v1395
        %1629 = vmatprep.subr.bf16.mxu0 %v1400
        %1630 = vmatpush1.bf16.msra.mxu0 %v1399
        %1631 = vmatprep.subr.bf16.mxu0 %v1404
        %1632 = vmatpush1.bf16.msra.mxu0 %v1403
        %1633 = vmatprep.subr.bf16.mxu0 %v1408
        %1634 = vmatpush1.bf16.msra.mxu0 %v1407
        %1635 = vmatprep.mubr.bf16.mxu0 %v956
        %1636 = vmatmul.mubr.bf16.gmra.mrb[0].mxu0 %v955
        %v1637 = vpop.f32.mrb[0].mxu0
        %v1638 = vadd.f32 0.0, %v1637
        %v1639 = vpop.f32.mrb[0].mxu0
        %v1640 = vadd.f32 0.0, %v1639
        %v1641 = vpop.f32.mrb[0].mxu0
        %v1642 = vpop.f32.mrb[0].mxu0
        %1643 = vdwg.mxu0
        %1644 = vmatprep.subr.bf16.mxu0 %v1412
        %1645 = vmatpush1.bf16.msra.mxu0 %v1411
        %1646 = vmatprep.subr.bf16.mxu0 %v1416
        %1647 = vmatpush1.bf16.msra.mxu0 %v1415
        %1648 = vmatprep.subr.bf16.mxu0 %v1420
        %1649 = vmatpush1.bf16.msra.mxu0 %v1419
        %1650 = vmatprep.subr.bf16.mxu0 %v1424
        %1651 = vmatpush1.bf16.msra.mxu0 %v1423
        %1652 = vmatprep.subr.bf16.mxu0 %v1428
        %1653 = vmatpush1.bf16.msra.mxu0 %v1427
        %1654 = vmatprep.subr.bf16.mxu0 %v1432
        %1655 = vmatpush1.bf16.msra.mxu0 %v1431
        %1656 = vmatprep.subr.bf16.mxu0 %v1436
        %1657 = vmatpush1.bf16.msra.mxu0 %v1435
        %1658 = vmatprep.subr.bf16.mxu0 %v1440
        %1659 = vmatpush1.bf16.msra.mxu0 %v1439
        %1660 = vmatprep.subr.bf16.mxu0 %v1444
        %1661 = vmatpush1.bf16.msra.mxu0 %v1443
        %1662 = vmatprep.subr.bf16.mxu0 %v1448
        %1663 = vmatpush1.bf16.msra.mxu0 %v1447
        %1664 = vmatprep.subr.bf16.mxu0 %v1452
        %1665 = vmatpush1.bf16.msra.mxu0 %v1451
        %1666 = vmatprep.subr.bf16.mxu0 %v1456
        %1667 = vmatpush1.bf16.msra.mxu0 %v1455
        %1668 = vmatprep.subr.bf16.mxu0 %v1460
        %1669 = vmatpush1.bf16.msra.mxu0 %v1459
        %1670 = vmatprep.subr.bf16.mxu0 %v1464
        %1671 = vmatpush1.bf16.msra.mxu0 %v1463
        %1672 = vmatprep.subr.bf16.mxu0 %v1468
        %1673 = vmatpush1.bf16.msra.mxu0 %v1467
        %1674 = vmatprep.subr.bf16.mxu0 %v1472
        %1675 = vmatpush1.bf16.msra.mxu0 %v1471
        %1676 = vmatprep.mubr.bf16.mxu0 %v958
        %1677 = vmatmul.mubr.bf16.gmra.mrb[0].mxu0 %v957
        %v1678 = vpop.f32.mrb[0].mxu0
        %v1679 = vadd.f32 %v1638, %v1678
        %v1680 = vpop.f32.mrb[0].mxu0
        %v1681 = vadd.f32 %v1640, %v1680
        %v1682 = vpop.f32.mrb[0].mxu0
        %v1683 = vpop.f32.mrb[0].mxu0
        %1684 = vdwg.mxu0
        %1685 = vmatprep.subr.bf16.mxu0 %v1350
        %1686 = vmatpush1.bf16.msra.mxu0 %v1349
        %1687 = vmatprep.subr.bf16.mxu0 %v1354
        %1688 = vmatpush1.bf16.msra.mxu0 %v1353
        %1689 = vmatprep.subr.bf16.mxu0 %v1358
        %1690 = vmatpush1.bf16.msra.mxu0 %v1357
        %1691 = vmatprep.subr.bf16.mxu0 %v1362
        %1692 = vmatpush1.bf16.msra.mxu0 %v1361
        %1693 = vmatprep.subr.bf16.mxu0 %v1366
        %1694 = vmatpush1.bf16.msra.mxu0 %v1365
        %1695 = vmatprep.subr.bf16.mxu0 %v1370
        %1696 = vmatpush1.bf16.msra.mxu0 %v1369
        %1697 = vmatprep.subr.bf16.mxu0 %v1374
        %1698 = vmatpush1.bf16.msra.mxu0 %v1373
        %1699 = vmatprep.subr.bf16.mxu0 %v1378
        %1700 = vmatpush1.bf16.msra.mxu0 %v1377
        %1701 = vmatprep.subr.bf16.mxu0 %v1382
        %1702 = vmatpush1.bf16.msra.mxu0 %v1381
        %1703 = vmatprep.subr.bf16.mxu0 %v1386
        %1704 = vmatpush1.bf16.msra.mxu0 %v1385
        %1705 = vmatprep.subr.bf16.mxu0 %v1390
        %1706 = vmatpush1.bf16.msra.mxu0 %v1389
        %1707 = vmatprep.subr.bf16.mxu0 %v1394
        %1708 = vmatpush1.bf16.msra.mxu0 %v1393
        %1709 = vmatprep.subr.bf16.mxu0 %v1398
        %1710 = vmatpush1.bf16.msra.mxu0 %v1397
        %1711 = vmatprep.subr.bf16.mxu0 %v1402
        %1712 = vmatpush1.bf16.msra.mxu0 %v1401
        %1713 = vmatprep.subr.bf16.mxu0 %v1406
        %1714 = vmatpush1.bf16.msra.mxu0 %v1405
        %1715 = vmatprep.subr.bf16.mxu0 %v1410
        %1716 = vmatpush1.bf16.msra.mxu0 %v1409
        %1717 = vmatprep.mubr.bf16.mxu0 %v956
        %1718 = vmatmul.mubr.bf16.gmra.mrb[0].mxu0 %v955
        %v1719 = vpop.f32.mrb[0].mxu0
        %v1720 = vadd.f32 0.0, %v1719
        %v1721 = vpop.f32.mrb[0].mxu0
        %v1722 = vadd.f32 0.0, %v1721
        %v1723 = vpop.f32.mrb[0].mxu0
        %v1724 = vpop.f32.mrb[0].mxu0
        %1725 = vdwg.mxu0
        %1726 = vmatprep.subr.bf16.mxu0 %v1414
        %1727 = vmatpush1.bf16.msra.mxu0 %v1413
        %1728 = vmatprep.subr.bf16.mxu0 %v1418
        %1729 = vmatpush1.bf16.msra.mxu0 %v1417
        %1730 = vmatprep.subr.bf16.mxu0 %v1422
        %1731 = vmatpush1.bf16.msra.mxu0 %v1421
        %1732 = vmatprep.subr.bf16.mxu0 %v1426
        %1733 = vmatpush1.bf16.msra.mxu0 %v1425
        %1734 = vmatprep.subr.bf16.mxu0 %v1430
        %1735 = vmatpush1.bf16.msra.mxu0 %v1429
        %1736 = vmatprep.subr.bf16.mxu0 %v1434
        %1737 = vmatpush1.bf16.msra.mxu0 %v1433
        %1738 = vmatprep.subr.bf16.mxu0 %v1438
        %1739 = vmatpush1.bf16.msra.mxu0 %v1437
        %1740 = vmatprep.subr.bf16.mxu0 %v1442
        %1741 = vmatpush1.bf16.msra.mxu0 %v1441
        %1742 = vmatprep.subr.bf16.mxu0 %v1446
        %1743 = vmatpush1.bf16.msra.mxu0 %v1445
        %1744 = vmatprep.subr.bf16.mxu0 %v1450
        %1745 = vmatpush1.bf16.msra.mxu0 %v1449
        %1746 = vmatprep.subr.bf16.mxu0 %v1454
        %1747 = vmatpush1.bf16.msra.mxu0 %v1453
        %1748 = vmatprep.subr.bf16.mxu0 %v1458
        %1749 = vmatpush1.bf16.msra.mxu0 %v1457
        %1750 = vmatprep.subr.bf16.mxu0 %v1462
        %1751 = vmatpush1.bf16.msra.mxu0 %v1461
        %1752 = vmatprep.subr.bf16.mxu0 %v1466
        %1753 = vmatpush1.bf16.msra.mxu0 %v1465
        %1754 = vmatprep.subr.bf16.mxu0 %v1470
        %1755 = vmatpush1.bf16.msra.mxu0 %v1469
        %1756 = vmatprep.subr.bf16.mxu0 %v1474
        %1757 = vmatpush1.bf16.msra.mxu0 %v1473
        %1758 = vmatprep.mubr.bf16.mxu0 %v958
        %1759 = vmatmul.mubr.bf16.gmra.mrb[0].mxu0 %v957
        %v1760 = vpop.f32.mrb[0].mxu0
        %v1761 = vadd.f32 %v1720, %v1760
        %v1762 = vpop.f32.mrb[0].mxu0
        %v1763 = vadd.f32 %v1722, %v1762
        %v1764 = vpop.f32.mrb[0].mxu0
        %v1765 = vpop.f32.mrb[0].mxu0
        %1766 = vdwg.mxu0
        %v1769 = vunpack.c.l.b16 %v681
        %v1770 = vunpack.c.h.b16 %v681
        %v1771 = vunpack.c.l.b16 %v682
        %v1772 = vunpack.c.h.b16 %v682
        %v1773 = vpack.c.b16 %v1769, %v1769
        %v1774 = vpack.c.b16 %v1770, %v1770
        %v1775 = vpack.c.b16 %v1771, %v1771
        %v1776 = vpack.c.b16 %v1772, %v1772
        %v1909 = vunpack.c.l.b16 %v693
        %v1910 = vunpack.c.h.b16 %v693
        %v1911 = vunpack.c.l.b16 %v694
        %v1912 = vunpack.c.h.b16 %v694
        %v1913 = vunpack.c.l.b16 %v695
        %v1914 = vunpack.c.h.b16 %v695
        %v1915 = vunpack.c.l.b16 %v696
        %v1916 = vunpack.c.h.b16 %v696
        %v1917 = vunpack.c.l.b16 %v697
        %v1918 = vunpack.c.h.b16 %v697
        %v1919 = vunpack.c.l.b16 %v698
        %v1920 = vunpack.c.h.b16 %v698
        %v1921 = vunpack.c.l.b16 %v699
        %v1922 = vunpack.c.h.b16 %v699
        %v1923 = vunpack.c.l.b16 %v700
        %v1924 = vunpack.c.h.b16 %v700
        %v1925 = vunpack.c.l.b16 %v701
        %v1926 = vunpack.c.h.b16 %v701
        %v1927 = vunpack.c.l.b16 %v702
        %v1928 = vunpack.c.h.b16 %v702
        %v1929 = vunpack.c.l.b16 %v703
        %v1930 = vunpack.c.h.b16 %v703
        %v1931 = vunpack.c.l.b16 %v704
        %v1932 = vunpack.c.h.b16 %v704
        %v1933 = vunpack.c.l.b16 %v705
        %v1934 = vunpack.c.h.b16 %v705
        %v1935 = vunpack.c.l.b16 %v706
        %v1936 = vunpack.c.h.b16 %v706
        %v1937 = vunpack.c.l.b16 %v707
        %v1938 = vunpack.c.h.b16 %v707
        %v1939 = vunpack.c.l.b16 %v708
        %v1940 = vunpack.c.h.b16 %v708
        %v1941 = vunpack.c.l.b16 %v709
        %v1942 = vunpack.c.h.b16 %v709
        %v1943 = vunpack.c.l.b16 %v710
        %v1944 = vunpack.c.h.b16 %v710
        %v1945 = vunpack.c.l.b16 %v711
        %v1946 = vunpack.c.h.b16 %v711
        %v1947 = vunpack.c.l.b16 %v712
        %v1948 = vunpack.c.h.b16 %v712
        %v1949 = vunpack.c.l.b16 %v713
        %v1950 = vunpack.c.h.b16 %v713
        %v1951 = vunpack.c.l.b16 %v714
        %v1952 = vunpack.c.h.b16 %v714
        %v1953 = vunpack.c.l.b16 %v715
        %v1954 = vunpack.c.h.b16 %v715
        %v1955 = vunpack.c.l.b16 %v716
        %v1956 = vunpack.c.h.b16 %v716
        %v1957 = vunpack.c.l.b16 %v717
        %v1958 = vunpack.c.h.b16 %v717
        %v1959 = vunpack.c.l.b16 %v718
        %v1960 = vunpack.c.h.b16 %v718
        %v1961 = vunpack.c.l.b16 %v719
        %v1962 = vunpack.c.h.b16 %v719
        %v1963 = vunpack.c.l.b16 %v720
        %v1964 = vunpack.c.h.b16 %v720
        %v1965 = vunpack.c.l.b16 %v721
        %v1966 = vunpack.c.h.b16 %v721
        %v1967 = vunpack.c.l.b16 %v722
        %v1968 = vunpack.c.h.b16 %v722
        %v1969 = vunpack.c.l.b16 %v723
        %v1970 = vunpack.c.h.b16 %v723
        %v1971 = vunpack.c.l.b16 %v724
        %v1972 = vunpack.c.h.b16 %v724
        %v1973 = vunpack.c.l.b16 %v725
        %v1974 = vunpack.c.h.b16 %v725
        %v1975 = vunpack.c.l.b16 %v726
        %v1976 = vunpack.c.h.b16 %v726
        %v1977 = vunpack.c.l.b16 %v727
        %v1978 = vunpack.c.h.b16 %v727
        %v1979 = vunpack.c.l.b16 %v728
        %v1980 = vunpack.c.h.b16 %v728
        %v1981 = vunpack.c.l.b16 %v729
        %v1982 = vunpack.c.h.b16 %v729
        %v1983 = vunpack.c.l.b16 %v730
        %v1984 = vunpack.c.h.b16 %v730
        %v1985 = vunpack.c.l.b16 %v731
        %v1986 = vunpack.c.h.b16 %v731
        %v1987 = vunpack.c.l.b16 %v732
        %v1988 = vunpack.c.h.b16 %v732
        %v1989 = vunpack.c.l.b16 %v733
        %v1990 = vunpack.c.h.b16 %v733
        %v1991 = vunpack.c.l.b16 %v734
        %v1992 = vunpack.c.h.b16 %v734
        %v1993 = vunpack.c.l.b16 %v735
        %v1994 = vunpack.c.h.b16 %v735
        %v1995 = vunpack.c.l.b16 %v736
        %v1996 = vunpack.c.h.b16 %v736
        %v1997 = vunpack.c.l.b16 %v737
        %v1998 = vunpack.c.h.b16 %v737
        %v1999 = vunpack.c.l.b16 %v738
        %v2000 = vunpack.c.h.b16 %v738
        %v2001 = vunpack.c.l.b16 %v739
        %v2002 = vunpack.c.h.b16 %v739
        %v2003 = vunpack.c.l.b16 %v740
        %v2004 = vunpack.c.h.b16 %v740
        %v2005 = vunpack.c.l.b16 %v741
        %v2006 = vunpack.c.h.b16 %v741
        %v2007 = vunpack.c.l.b16 %v742
        %v2008 = vunpack.c.h.b16 %v742
        %v2009 = vunpack.c.l.b16 %v743
        %v2010 = vunpack.c.h.b16 %v743
        %v2011 = vunpack.c.l.b16 %v744
        %v2012 = vunpack.c.h.b16 %v744
        %v2013 = vunpack.c.l.b16 %v745
        %v2014 = vunpack.c.h.b16 %v745
        %v2015 = vunpack.c.l.b16 %v746
        %v2016 = vunpack.c.h.b16 %v746
        %v2017 = vunpack.c.l.b16 %v747
        %v2018 = vunpack.c.h.b16 %v747
        %v2019 = vunpack.c.l.b16 %v748
        %v2020 = vunpack.c.h.b16 %v748
        %v2021 = vunpack.c.l.b16 %v749
        %v2022 = vunpack.c.h.b16 %v749
        %v2023 = vunpack.c.l.b16 %v750
        %v2024 = vunpack.c.h.b16 %v750
        %v2025 = vunpack.c.l.b16 %v751
        %v2026 = vunpack.c.h.b16 %v751
        %v2027 = vunpack.c.l.b16 %v752
        %v2028 = vunpack.c.h.b16 %v752
        %v2029 = vunpack.c.l.b16 %v753
        %v2030 = vunpack.c.h.b16 %v753
        %v2031 = vunpack.c.l.b16 %v754
        %v2032 = vunpack.c.h.b16 %v754
        %v2033 = vunpack.c.l.b16 %v755
        %v2034 = vunpack.c.h.b16 %v755
        %v2035 = vunpack.c.l.b16 %v756
        %v2036 = vunpack.c.h.b16 %v756
        %v2037 = vunpack.c.l.b16 %v757
        %v2038 = vunpack.c.h.b16 %v757
        %v2039 = vunpack.c.l.b16 %v758
        %v2040 = vunpack.c.h.b16 %v758
        %v2041 = vunpack.c.l.b16 %v759
        %v2042 = vunpack.c.h.b16 %v759
        %v2043 = vunpack.c.l.b16 %v760
        %v2044 = vunpack.c.h.b16 %v760
        %v2045 = vunpack.c.l.b16 %v761
        %v2046 = vunpack.c.h.b16 %v761
        %v2047 = vunpack.c.l.b16 %v762
        %v2048 = vunpack.c.h.b16 %v762
        %v2049 = vunpack.c.l.b16 %v763
        %v2050 = vunpack.c.h.b16 %v763
        %v2051 = vunpack.c.l.b16 %v764
        %v2052 = vunpack.c.h.b16 %v764
        %v2053 = vunpack.c.l.b16 %v765
        %v2054 = vunpack.c.h.b16 %v765
        %v2055 = vunpack.c.l.b16 %v766
        %v2056 = vunpack.c.h.b16 %v766
        %v2057 = vunpack.c.l.b16 %v767
        %v2058 = vunpack.c.h.b16 %v767
        %v2059 = vunpack.c.l.b16 %v768
        %v2060 = vunpack.c.h.b16 %v768
        %v2061 = vunpack.c.l.b16 %v769
        %v2062 = vunpack.c.h.b16 %v769
        %v2063 = vunpack.c.l.b16 %v770
        %v2064 = vunpack.c.h.b16 %v770
        %v2065 = vunpack.c.l.b16 %v771
        %v2066 = vunpack.c.h.b16 %v771
        %v2067 = vunpack.c.l.b16 %v772
        %v2068 = vunpack.c.h.b16 %v772
        %v2069 = vunpack.c.l.b16 %v773
        %v2070 = vunpack.c.h.b16 %v773
        %v2071 = vunpack.c.l.b16 %v774
        %v2072 = vunpack.c.h.b16 %v774
        %v2073 = vunpack.c.l.b16 %v775
        %v2074 = vunpack.c.h.b16 %v775
        %v2075 = vunpack.c.l.b16 %v776
        %v2076 = vunpack.c.h.b16 %v776
        %v2077 = vunpack.c.l.b16 %v777
        %v2078 = vunpack.c.h.b16 %v777
        %v2079 = vunpack.c.l.b16 %v778
        %v2080 = vunpack.c.h.b16 %v778
        %v2081 = vunpack.c.l.b16 %v779
        %v2082 = vunpack.c.h.b16 %v779
        %v2083 = vunpack.c.l.b16 %v780
        %v2084 = vunpack.c.h.b16 %v780
        %v2085 = vunpack.c.l.b16 %v781
        %v2086 = vunpack.c.h.b16 %v781
        %v2087 = vunpack.c.l.b16 %v782
        %v2088 = vunpack.c.h.b16 %v782
        %v2089 = vunpack.c.l.b16 %v783
        %v2090 = vunpack.c.h.b16 %v783
        %v2091 = vunpack.c.l.b16 %v784
        %v2092 = vunpack.c.h.b16 %v784
        %v2093 = vunpack.c.l.b16 %v785
        %v2094 = vunpack.c.h.b16 %v785
        %v2095 = vunpack.c.l.b16 %v786
        %v2096 = vunpack.c.h.b16 %v786
        %v2097 = vunpack.c.l.b16 %v787
        %v2098 = vunpack.c.h.b16 %v787
        %v2099 = vunpack.c.l.b16 %v788
        %v2100 = vunpack.c.h.b16 %v788
        %v2101 = vunpack.c.l.b16 %v789
        %v2102 = vunpack.c.h.b16 %v789
        %v2103 = vunpack.c.l.b16 %v790
        %v2104 = vunpack.c.h.b16 %v790
        %v2105 = vunpack.c.l.b16 %v791
        %v2106 = vunpack.c.h.b16 %v791
        %v2107 = vunpack.c.l.b16 %v792
        %v2108 = vunpack.c.h.b16 %v792
        %v2109 = vunpack.c.l.b16 %v793
        %v2110 = vunpack.c.h.b16 %v793
        %v2111 = vunpack.c.l.b16 %v794
        %v2112 = vunpack.c.h.b16 %v794
        %v2113 = vunpack.c.l.b16 %v795
        %v2114 = vunpack.c.h.b16 %v795
        %v2115 = vunpack.c.l.b16 %v796
        %v2116 = vunpack.c.h.b16 %v796
        %v2117 = vunpack.c.l.b16 %v797
        %v2118 = vunpack.c.h.b16 %v797
        %v2119 = vunpack.c.l.b16 %v798
        %v2120 = vunpack.c.h.b16 %v798
        %v2121 = vunpack.c.l.b16 %v799
        %v2122 = vunpack.c.h.b16 %v799
        %v2123 = vunpack.c.l.b16 %v800
        %v2124 = vunpack.c.h.b16 %v800
        %v2125 = vunpack.c.l.b16 %v801
        %v2126 = vunpack.c.h.b16 %v801
        %v2127 = vunpack.c.l.b16 %v802
        %v2128 = vunpack.c.h.b16 %v802
        %v2129 = vunpack.c.l.b16 %v803
        %v2130 = vunpack.c.h.b16 %v803
        %v2131 = vunpack.c.l.b16 %v804
        %v2132 = vunpack.c.h.b16 %v804
        %v2133 = vunpack.c.l.b16 %v805
        %v2134 = vunpack.c.h.b16 %v805
        %v2135 = vunpack.c.l.b16 %v806
        %v2136 = vunpack.c.h.b16 %v806
        %v2137 = vunpack.c.l.b16 %v807
        %v2138 = vunpack.c.h.b16 %v807
        %v2139 = vunpack.c.l.b16 %v808
        %v2140 = vunpack.c.h.b16 %v808
        %v2141 = vunpack.c.l.b16 %v809
        %v2142 = vunpack.c.h.b16 %v809
        %v2143 = vunpack.c.l.b16 %v810
        %v2144 = vunpack.c.h.b16 %v810
        %v2145 = vunpack.c.l.b16 %v811
        %v2146 = vunpack.c.h.b16 %v811
        %v2147 = vunpack.c.l.b16 %v812
        %v2148 = vunpack.c.h.b16 %v812
        %v2149 = vunpack.c.l.b16 %v813
        %v2150 = vunpack.c.h.b16 %v813
        %v2151 = vunpack.c.l.b16 %v814
        %v2152 = vunpack.c.h.b16 %v814
        %v2153 = vunpack.c.l.b16 %v815
        %v2154 = vunpack.c.h.b16 %v815
        %v2155 = vunpack.c.l.b16 %v816
        %v2156 = vunpack.c.h.b16 %v816
        %v2157 = vunpack.c.l.b16 %v817
        %v2158 = vunpack.c.h.b16 %v817
        %v2159 = vunpack.c.l.b16 %v818
        %v2160 = vunpack.c.h.b16 %v818
        %v2161 = vunpack.c.l.b16 %v819
        %v2162 = vunpack.c.h.b16 %v819
        %v2163 = vunpack.c.l.b16 %v820
        %v2164 = vunpack.c.h.b16 %v820
        %v2165 = vpack.c.b16 %v1913, %v1909
        %v2166 = vpack.c.b16 %v1914, %v1910
        %v2167 = vpack.c.b16 %v1915, %v1911
        %v2168 = vpack.c.b16 %v1916, %v1912
        %v2169 = vpack.c.b16 %v1921, %v1917
        %v2170 = vpack.c.b16 %v1922, %v1918
        %v2171 = vpack.c.b16 %v1923, %v1919
        %v2172 = vpack.c.b16 %v1924, %v1920
        %v2173 = vpack.c.b16 %v1929, %v1925
        %v2174 = vpack.c.b16 %v1930, %v1926
        %v2175 = vpack.c.b16 %v1931, %v1927
        %v2176 = vpack.c.b16 %v1932, %v1928
        %v2177 = vpack.c.b16 %v1937, %v1933
        %v2178 = vpack.c.b16 %v1938, %v1934
        %v2179 = vpack.c.b16 %v1939, %v1935
        %v2180 = vpack.c.b16 %v1940, %v1936
        %v2181 = vpack.c.b16 %v1945, %v1941
        %v2182 = vpack.c.b16 %v1946, %v1942
        %v2183 = vpack.c.b16 %v1947, %v1943
        %v2184 = vpack.c.b16 %v1948, %v1944
        %v2185 = vpack.c.b16 %v1953, %v1949
        %v2186 = vpack.c.b16 %v1954, %v1950
        %v2187 = vpack.c.b16 %v1955, %v1951
        %v2188 = vpack.c.b16 %v1956, %v1952
        %v2189 = vpack.c.b16 %v1961, %v1957
        %v2190 = vpack.c.b16 %v1962, %v1958
        %v2191 = vpack.c.b16 %v1963, %v1959
        %v2192 = vpack.c.b16 %v1964, %v1960
        %v2193 = vpack.c.b16 %v1969, %v1965
        %v2194 = vpack.c.b16 %v1970, %v1966
        %v2195 = vpack.c.b16 %v1971, %v1967
        %v2196 = vpack.c.b16 %v1972, %v1968
        %v2197 = vpack.c.b16 %v1977, %v1973
        %v2198 = vpack.c.b16 %v1978, %v1974
        %v2199 = vpack.c.b16 %v1979, %v1975
        %v2200 = vpack.c.b16 %v1980, %v1976
        %v2201 = vpack.c.b16 %v1985, %v1981
        %v2202 = vpack.c.b16 %v1986, %v1982
        %v2203 = vpack.c.b16 %v1987, %v1983
        %v2204 = vpack.c.b16 %v1988, %v1984
        %v2205 = vpack.c.b16 %v1993, %v1989
        %v2206 = vpack.c.b16 %v1994, %v1990
        %v2207 = vpack.c.b16 %v1995, %v1991
        %v2208 = vpack.c.b16 %v1996, %v1992
        %v2209 = vpack.c.b16 %v2001, %v1997
        %v2210 = vpack.c.b16 %v2002, %v1998
        %v2211 = vpack.c.b16 %v2003, %v1999
        %v2212 = vpack.c.b16 %v2004, %v2000
        %v2213 = vpack.c.b16 %v2009, %v2005
        %v2214 = vpack.c.b16 %v2010, %v2006
        %v2215 = vpack.c.b16 %v2011, %v2007
        %v2216 = vpack.c.b16 %v2012, %v2008
        %v2217 = vpack.c.b16 %v2017, %v2013
        %v2218 = vpack.c.b16 %v2018, %v2014
        %v2219 = vpack.c.b16 %v2019, %v2015
        %v2220 = vpack.c.b16 %v2020, %v2016
        %v2221 = vpack.c.b16 %v2025, %v2021
        %v2222 = vpack.c.b16 %v2026, %v2022
        %v2223 = vpack.c.b16 %v2027, %v2023
        %v2224 = vpack.c.b16 %v2028, %v2024
        %v2225 = vpack.c.b16 %v2033, %v2029
        %v2226 = vpack.c.b16 %v2034, %v2030
        %v2227 = vpack.c.b16 %v2035, %v2031
        %v2228 = vpack.c.b16 %v2036, %v2032
        %v2229 = vpack.c.b16 %v2041, %v2037
        %v2230 = vpack.c.b16 %v2042, %v2038
        %v2231 = vpack.c.b16 %v2043, %v2039
        %v2232 = vpack.c.b16 %v2044, %v2040
        %v2233 = vpack.c.b16 %v2049, %v2045
        %v2234 = vpack.c.b16 %v2050, %v2046
        %v2235 = vpack.c.b16 %v2051, %v2047
        %v2236 = vpack.c.b16 %v2052, %v2048
        %v2237 = vpack.c.b16 %v2057, %v2053
        %v2238 = vpack.c.b16 %v2058, %v2054
        %v2239 = vpack.c.b16 %v2059, %v2055
        %v2240 = vpack.c.b16 %v2060, %v2056
        %v2241 = vpack.c.b16 %v2065, %v2061
        %v2242 = vpack.c.b16 %v2066, %v2062
        %v2243 = vpack.c.b16 %v2067, %v2063
        %v2244 = vpack.c.b16 %v2068, %v2064
        %v2245 = vpack.c.b16 %v2073, %v2069
        %v2246 = vpack.c.b16 %v2074, %v2070
        %v2247 = vpack.c.b16 %v2075, %v2071
        %v2248 = vpack.c.b16 %v2076, %v2072
        %v2249 = vpack.c.b16 %v2081, %v2077
        %v2250 = vpack.c.b16 %v2082, %v2078
        %v2251 = vpack.c.b16 %v2083, %v2079
        %v2252 = vpack.c.b16 %v2084, %v2080
        %v2253 = vpack.c.b16 %v2089, %v2085
        %v2254 = vpack.c.b16 %v2090, %v2086
        %v2255 = vpack.c.b16 %v2091, %v2087
        %v2256 = vpack.c.b16 %v2092, %v2088
        %v2257 = vpack.c.b16 %v2097, %v2093
        %v2258 = vpack.c.b16 %v2098, %v2094
        %v2259 = vpack.c.b16 %v2099, %v2095
        %v2260 = vpack.c.b16 %v2100, %v2096
        %v2261 = vpack.c.b16 %v2105, %v2101
        %v2262 = vpack.c.b16 %v2106, %v2102
        %v2263 = vpack.c.b16 %v2107, %v2103
        %v2264 = vpack.c.b16 %v2108, %v2104
        %v2265 = vpack.c.b16 %v2113, %v2109
        %v2266 = vpack.c.b16 %v2114, %v2110
        %v2267 = vpack.c.b16 %v2115, %v2111
        %v2268 = vpack.c.b16 %v2116, %v2112
        %v2269 = vpack.c.b16 %v2121, %v2117
        %v2270 = vpack.c.b16 %v2122, %v2118
        %v2271 = vpack.c.b16 %v2123, %v2119
        %v2272 = vpack.c.b16 %v2124, %v2120
        %v2273 = vpack.c.b16 %v2129, %v2125
        %v2274 = vpack.c.b16 %v2130, %v2126
        %v2275 = vpack.c.b16 %v2131, %v2127
        %v2276 = vpack.c.b16 %v2132, %v2128
        %v2277 = vpack.c.b16 %v2137, %v2133
        %v2278 = vpack.c.b16 %v2138, %v2134
        %v2279 = vpack.c.b16 %v2139, %v2135
        %v2280 = vpack.c.b16 %v2140, %v2136
        %v2281 = vpack.c.b16 %v2145, %v2141
        %v2282 = vpack.c.b16 %v2146, %v2142
        %v2283 = vpack.c.b16 %v2147, %v2143
        %v2284 = vpack.c.b16 %v2148, %v2144
        %v2285 = vpack.c.b16 %v2153, %v2149
        %v2286 = vpack.c.b16 %v2154, %v2150
        %v2287 = vpack.c.b16 %v2155, %v2151
        %v2288 = vpack.c.b16 %v2156, %v2152
        %v2289 = vpack.c.b16 %v2161, %v2157
        %v2290 = vpack.c.b16 %v2162, %v2158
        %v2291 = vpack.c.b16 %v2163, %v2159
        %v2292 = vpack.c.b16 %v2164, %v2160
        %2421 = vmatprep.subr.bf16.mxu0 %v2166
        %2422 = vmatpush1.bf16.msra.mxu0 %v2165
        %2423 = vmatprep.subr.bf16.mxu0 %v2170
        %2424 = vmatpush1.bf16.msra.mxu0 %v2169
        %2425 = vmatprep.subr.bf16.mxu0 %v2174
        %2426 = vmatpush1.bf16.msra.mxu0 %v2173
        %2427 = vmatprep.subr.bf16.mxu0 %v2178
        %2428 = vmatpush1.bf16.msra.mxu0 %v2177
        %2429 = vmatprep.subr.bf16.mxu0 %v2182
        %2430 = vmatpush1.bf16.msra.mxu0 %v2181
        %2431 = vmatprep.subr.bf16.mxu0 %v2186
        %2432 = vmatpush1.bf16.msra.mxu0 %v2185
        %2433 = vmatprep.subr.bf16.mxu0 %v2190
        %2434 = vmatpush1.bf16.msra.mxu0 %v2189
        %2435 = vmatprep.subr.bf16.mxu0 %v2194
        %2436 = vmatpush1.bf16.msra.mxu0 %v2193
        %2437 = vmatprep.subr.bf16.mxu0 %v2198
        %2438 = vmatpush1.bf16.msra.mxu0 %v2197
        %2439 = vmatprep.subr.bf16.mxu0 %v2202
        %2440 = vmatpush1.bf16.msra.mxu0 %v2201
        %2441 = vmatprep.subr.bf16.mxu0 %v2206
        %2442 = vmatpush1.bf16.msra.mxu0 %v2205
        %2443 = vmatprep.subr.bf16.mxu0 %v2210
        %2444 = vmatpush1.bf16.msra.mxu0 %v2209
        %2445 = vmatprep.subr.bf16.mxu0 %v2214
        %2446 = vmatpush1.bf16.msra.mxu0 %v2213
        %2447 = vmatprep.subr.bf16.mxu0 %v2218
        %2448 = vmatpush1.bf16.msra.mxu0 %v2217
        %2449 = vmatprep.subr.bf16.mxu0 %v2222
        %2450 = vmatpush1.bf16.msra.mxu0 %v2221
        %2451 = vmatprep.subr.bf16.mxu0 %v2226
        %2452 = vmatpush1.bf16.msra.mxu0 %v2225
        %2453 = vmatprep.mubr.bf16.mxu0 %v1774
        %2454 = vmatmul.mubr.bf16.gmra.mrb[0].mxu0 %v1773
        %v2455 = vpop.f32.mrb[0].mxu0
        %v2456 = vadd.f32 %v1679, %v2455
        %v2457 = vpop.f32.mrb[0].mxu0
        %v2458 = vadd.f32 %v1681, %v2457
        %v2459 = vpop.f32.mrb[0].mxu0
        %v2460 = vpop.f32.mrb[0].mxu0
        %2461 = vdwg.mxu0
        %2462 = vmatprep.subr.bf16.mxu0 %v2230
        %2463 = vmatpush1.bf16.msra.mxu0 %v2229
        %2464 = vmatprep.subr.bf16.mxu0 %v2234
        %2465 = vmatpush1.bf16.msra.mxu0 %v2233
        %2466 = vmatprep.subr.bf16.mxu0 %v2238
        %2467 = vmatpush1.bf16.msra.mxu0 %v2237
        %2468 = vmatprep.subr.bf16.mxu0 %v2242
        %2469 = vmatpush1.bf16.msra.mxu0 %v2241
        %2470 = vmatprep.subr.bf16.mxu0 %v2246
        %2471 = vmatpush1.bf16.msra.mxu0 %v2245
        %2472 = vmatprep.subr.bf16.mxu0 %v2250
        %2473 = vmatpush1.bf16.msra.mxu0 %v2249
        %2474 = vmatprep.subr.bf16.mxu0 %v2254
        %2475 = vmatpush1.bf16.msra.mxu0 %v2253
        %2476 = vmatprep.subr.bf16.mxu0 %v2258
        %2477 = vmatpush1.bf16.msra.mxu0 %v2257
        %2478 = vmatprep.subr.bf16.mxu0 %v2262
        %2479 = vmatpush1.bf16.msra.mxu0 %v2261
        %2480 = vmatprep.subr.bf16.mxu0 %v2266
        %2481 = vmatpush1.bf16.msra.mxu0 %v2265
        %2482 = vmatprep.subr.bf16.mxu0 %v2270
        %2483 = vmatpush1.bf16.msra.mxu0 %v2269
        %2484 = vmatprep.subr.bf16.mxu0 %v2274
        %2485 = vmatpush1.bf16.msra.mxu0 %v2273
        %2486 = vmatprep.subr.bf16.mxu0 %v2278
        %2487 = vmatpush1.bf16.msra.mxu0 %v2277
        %2488 = vmatprep.subr.bf16.mxu0 %v2282
        %2489 = vmatpush1.bf16.msra.mxu0 %v2281
        %2490 = vmatprep.subr.bf16.mxu0 %v2286
        %2491 = vmatpush1.bf16.msra.mxu0 %v2285
        %2492 = vmatprep.subr.bf16.mxu0 %v2290
        %2493 = vmatpush1.bf16.msra.mxu0 %v2289
        %2494 = vmatprep.mubr.bf16.mxu0 %v1776
        %2495 = vmatmul.mubr.bf16.gmra.mrb[0].mxu0 %v1775
        %v2496 = vpop.f32.mrb[0].mxu0
        %v2497 = vadd.f32 %v2456, %v2496
        %v2498 = vpop.f32.mrb[0].mxu0
        %v2499 = vadd.f32 %v2458, %v2498
        %v2500 = vpop.f32.mrb[0].mxu0
        %v2501 = vpop.f32.mrb[0].mxu0
        %2502 = vdwg.mxu0
        %2503 = vmatprep.subr.bf16.mxu0 %v2168
        %2504 = vmatpush1.bf16.msra.mxu0 %v2167
        %2505 = vmatprep.subr.bf16.mxu0 %v2172
        %2506 = vmatpush1.bf16.msra.mxu0 %v2171
        %2507 = vmatprep.subr.bf16.mxu0 %v2176
        %2508 = vmatpush1.bf16.msra.mxu0 %v2175
        %2509 = vmatprep.subr.bf16.mxu0 %v2180
        %2510 = vmatpush1.bf16.msra.mxu0 %v2179
        %2511 = vmatprep.subr.bf16.mxu0 %v2184
        %2512 = vmatpush1.bf16.msra.mxu0 %v2183
        %2513 = vmatprep.subr.bf16.mxu0 %v2188
        %2514 = vmatpush1.bf16.msra.mxu0 %v2187
        %2515 = vmatprep.subr.bf16.mxu0 %v2192
        %2516 = vmatpush1.bf16.msra.mxu0 %v2191
        %2517 = vmatprep.subr.bf16.mxu0 %v2196
        %2518 = vmatpush1.bf16.msra.mxu0 %v2195
        %2519 = vmatprep.subr.bf16.mxu0 %v2200
        %2520 = vmatpush1.bf16.msra.mxu0 %v2199
        %2521 = vmatprep.subr.bf16.mxu0 %v2204
        %2522 = vmatpush1.bf16.msra.mxu0 %v2203
        %2523 = vmatprep.subr.bf16.mxu0 %v2208
        %2524 = vmatpush1.bf16.msra.mxu0 %v2207
        %2525 = vmatprep.subr.bf16.mxu0 %v2212
        %2526 = vmatpush1.bf16.msra.mxu0 %v2211
        %2527 = vmatprep.subr.bf16.mxu0 %v2216
        %2528 = vmatpush1.bf16.msra.mxu0 %v2215
        %2529 = vmatprep.subr.bf16.mxu0 %v2220
        %2530 = vmatpush1.bf16.msra.mxu0 %v2219
        %2531 = vmatprep.subr.bf16.mxu0 %v2224
        %2532 = vmatpush1.bf16.msra.mxu0 %v2223
        %2533 = vmatprep.subr.bf16.mxu0 %v2228
        %2534 = vmatpush1.bf16.msra.mxu0 %v2227
        %2535 = vmatprep.mubr.bf16.mxu0 %v1774
        %2536 = vmatmul.mubr.bf16.gmra.mrb[0].mxu0 %v1773
        %v2537 = vpop.f32.mrb[0].mxu0
        %v2538 = vadd.f32 %v1761, %v2537
        %v2539 = vpop.f32.mrb[0].mxu0
        %v2540 = vadd.f32 %v1763, %v2539
        %v2541 = vpop.f32.mrb[0].mxu0
        %v2542 = vpop.f32.mrb[0].mxu0
        %2543 = vdwg.mxu0
        %2544 = vmatprep.subr.bf16.mxu0 %v2232
        %2545 = vmatpush1.bf16.msra.mxu0 %v2231
        %2546 = vmatprep.subr.bf16.mxu0 %v2236
        %2547 = vmatpush1.bf16.msra.mxu0 %v2235
        %2548 = vmatprep.subr.bf16.mxu0 %v2240
        %2549 = vmatpush1.bf16.msra.mxu0 %v2239
        %2550 = vmatprep.subr.bf16.mxu0 %v2244
        %2551 = vmatpush1.bf16.msra.mxu0 %v2243
        %2552 = vmatprep.subr.bf16.mxu0 %v2248
        %2553 = vmatpush1.bf16.msra.mxu0 %v2247
        %2554 = vmatprep.subr.bf16.mxu0 %v2252
        %2555 = vmatpush1.bf16.msra.mxu0 %v2251
        %2556 = vmatprep.subr.bf16.mxu0 %v2256
        %2557 = vmatpush1.bf16.msra.mxu0 %v2255
        %2558 = vmatprep.subr.bf16.mxu0 %v2260
        %2559 = vmatpush1.bf16.msra.mxu0 %v2259
        %2560 = vmatprep.subr.bf16.mxu0 %v2264
        %2561 = vmatpush1.bf16.msra.mxu0 %v2263
        %2562 = vmatprep.subr.bf16.mxu0 %v2268
        %2563 = vmatpush1.bf16.msra.mxu0 %v2267
        %2564 = vmatprep.subr.bf16.mxu0 %v2272
        %2565 = vmatpush1.bf16.msra.mxu0 %v2271
        %2566 = vmatprep.subr.bf16.mxu0 %v2276
        %2567 = vmatpush1.bf16.msra.mxu0 %v2275
        %2568 = vmatprep.subr.bf16.mxu0 %v2280
        %2569 = vmatpush1.bf16.msra.mxu0 %v2279
        %2570 = vmatprep.subr.bf16.mxu0 %v2284
        %2571 = vmatpush1.bf16.msra.mxu0 %v2283
        %2572 = vmatprep.subr.bf16.mxu0 %v2288
        %2573 = vmatpush1.bf16.msra.mxu0 %v2287
        %2574 = vmatprep.subr.bf16.mxu0 %v2292
        %2575 = vmatpush1.bf16.msra.mxu0 %v2291
        %2576 = vmatprep.mubr.bf16.mxu0 %v1776
        %2577 = vmatmul.mubr.bf16.gmra.mrb[0].mxu0 %v1775
        %v2578 = vpop.f32.mrb[0].mxu0
        %v2579 = vadd.f32 %v2538, %v2578
        %v2580 = vpop.f32.mrb[0].mxu0
        %v2581 = vadd.f32 %v2540, %v2580
        %v2582 = vpop.f32.mrb[0].mxu0
        %v2583 = vpop.f32.mrb[0].mxu0
        %2584 = vdwg.mxu0
        %v2585 = vld [vmem:[%s5] sm:$0xf]
        %v2587 = vlaneseq
        %v2588 = vshrl.u32 %v2587, 7
        %v2589 = vsub.s32 0, %v2588
        %v2590 = vrot.slane %v2585, %v2589
        %v2591 = vlaneseq
        %v2592 = vshrl.u32 %v2591, 7
        %v2593 = vsub.s32 1, %v2592
        %v2594 = vrot.slane %v2585, %v2593
        %v2595 = vlaneseq
        %v2596 = vshrl.u32 %v2595, 7
        %v2597 = vsub.s32 2, %v2596
        %v2598 = vrot.slane %v2585, %v2597
        %v2599 = vlaneseq
        %v2600 = vshrl.u32 %v2599, 7
        %v2601 = vsub.s32 3, %v2600
        %v2602 = vrot.slane %v2585, %v2601
        %v2607 = vadd.f32 %v2497, %v2590
        %v2608 = vadd.f32 %v2499, %v2594
        %v2609 = vadd.f32 %v2579, %v2598
        %v2610 = vadd.f32 %v2581, %v2602
        %v2611 = vmax.f32 %v2607, 0.0
        %v2612 = vmax.f32 %v2608, 0.0
        %v2613 = vmax.f32 %v2609, 0.0
        %v2614 = vmax.f32 %v2610, 0.0
        %v2615 = vpack.c.bf16 %v2611, %v2611
        %v2616 = vpack.c.bf16 %v2612, %v2612
        %v2617 = vpack.c.bf16 %v2613, %v2613
        %v2618 = vpack.c.bf16 %v2614, %v2614
        %v2619 = vld [vmem:[#allocation12] sm:$0xff]
        %v2620 = vld [vmem:[#allocation12 + $0x8] sm:$0xff]
        %v2621 = vld [vmem:[#allocation12 + $0x10] sm:$0xff]
        %v2622 = vld [vmem:[#allocation12 + $0x18] sm:$0xff]
        %v2623 = vld [vmem:[#allocation12 + $0x20] sm:$0xff]
        %v2624 = vld [vmem:[#allocation12 + $0x28] sm:$0xff]
        %v2625 = vld [vmem:[#allocation12 + $0x30] sm:$0xff]
        %v2626 = vld [vmem:[#allocation12 + $0x38] sm:$0xff]
        %v2627 = vld [vmem:[#allocation12 + $0x40] sm:$0xff]
        %v2628 = vld [vmem:[#allocation12 + $0x48] sm:$0xff]
        %v2629 = vld [vmem:[#allocation12 + $0x50] sm:$0xff]
        %v2630 = vld [vmem:[#allocation12 + $0x58] sm:$0xff]
        %v2631 = vld [vmem:[#allocation12 + $0x60] sm:$0xff]
        %v2632 = vld [vmem:[#allocation12 + $0x68] sm:$0xff]
        %v2633 = vld [vmem:[#allocation12 + $0x70] sm:$0xff]
        %v2634 = vld [vmem:[#allocation12 + $0x78] sm:$0xff]
        %v2635 = vld [vmem:[#allocation12 + $0x80] sm:$0xff]
        %v2636 = vld [vmem:[#allocation12 + $0x88] sm:$0xff]
        %v2637 = vld [vmem:[#allocation12 + $0x90] sm:$0xff]
        %v2638 = vld [vmem:[#allocation12 + $0x98] sm:$0xff]
        %v2639 = vld [vmem:[#allocation12 + $0xa0] sm:$0xff]
        %v2640 = vld [vmem:[#allocation12 + $0xa8] sm:$0xff]
        %v2641 = vld [vmem:[#allocation12 + $0xb0] sm:$0xff]
        %v2642 = vld [vmem:[#allocation12 + $0xb8] sm:$0xff]
        %v2643 = vld [vmem:[#allocation12 + $0xc0] sm:$0xff]
        %v2644 = vld [vmem:[#allocation12 + $0xc8] sm:$0xff]
        %v2645 = vld [vmem:[#allocation12 + $0xd0] sm:$0xff]
        %v2646 = vld [vmem:[#allocation12 + $0xd8] sm:$0xff]
        %v2647 = vld [vmem:[#allocation12 + $0xe0] sm:$0xff]
        %v2648 = vld [vmem:[#allocation12 + $0xe8] sm:$0xff]
        %v2649 = vld [vmem:[#allocation12 + $0xf0] sm:$0xff]
        %v2650 = vld [vmem:[#allocation12 + $0xf8] sm:$0xff]
        %v2651 = vld [vmem:[#allocation12 + $0x100] sm:$0xff]
        %v2652 = vld [vmem:[#allocation12 + $0x108] sm:$0xff]
        %v2653 = vld [vmem:[#allocation12 + $0x110] sm:$0xff]
        %v2654 = vld [vmem:[#allocation12 + $0x118] sm:$0xff]
        %v2655 = vld [vmem:[#allocation12 + $0x120] sm:$0xff]
        %v2656 = vld [vmem:[#allocation12 + $0x128] sm:$0xff]
        %v2657 = vld [vmem:[#allocation12 + $0x130] sm:$0xff]
        %v2658 = vld [vmem:[#allocation12 + $0x138] sm:$0xff]
        %v2659 = vld [vmem:[#allocation12 + $0x140] sm:$0xff]
        %v2660 = vld [vmem:[#allocation12 + $0x148] sm:$0xff]
        %v2661 = vld [vmem:[#allocation12 + $0x150] sm:$0xff]
        %v2662 = vld [vmem:[#allocation12 + $0x158] sm:$0xff]
        %v2663 = vld [vmem:[#allocation12 + $0x160] sm:$0xff]
        %v2664 = vld [vmem:[#allocation12 + $0x168] sm:$0xff]
        %v2665 = vld [vmem:[#allocation12 + $0x170] sm:$0xff]
        %v2666 = vld [vmem:[#allocation12 + $0x178] sm:$0xff]
        %v2667 = vld [vmem:[#allocation12 + $0x180] sm:$0xff]
        %v2668 = vld [vmem:[#allocation12 + $0x188] sm:$0xff]
        %v2669 = vld [vmem:[#allocation12 + $0x190] sm:$0xff]
        %v2670 = vld [vmem:[#allocation12 + $0x198] sm:$0xff]
        %v2671 = vld [vmem:[#allocation12 + $0x1a0] sm:$0xff]
        %v2672 = vld [vmem:[#allocation12 + $0x1a8] sm:$0xff]
        %v2673 = vld [vmem:[#allocation12 + $0x1b0] sm:$0xff]
        %v2674 = vld [vmem:[#allocation12 + $0x1b8] sm:$0xff]
        %v2675 = vld [vmem:[#allocation12 + $0x1c0] sm:$0xff]
        %v2676 = vld [vmem:[#allocation12 + $0x1c8] sm:$0xff]
        %v2677 = vld [vmem:[#allocation12 + $0x1d0] sm:$0xff]
        %v2678 = vld [vmem:[#allocation12 + $0x1d8] sm:$0xff]
        %v2679 = vld [vmem:[#allocation12 + $0x1e0] sm:$0xff]
        %v2680 = vld [vmem:[#allocation12 + $0x1e8] sm:$0xff]
        %v2681 = vld [vmem:[#allocation12 + $0x1f0] sm:$0xff]
        %v2682 = vld [vmem:[#allocation12 + $0x1f8] sm:$0xff]
        %v2683 = vld [vmem:[#allocation12 + $0x200] sm:$0xff]
        %v2684 = vld [vmem:[#allocation12 + $0x208] sm:$0xff]
        %v2685 = vld [vmem:[#allocation12 + $0x210] sm:$0xff]
        %v2686 = vld [vmem:[#allocation12 + $0x218] sm:$0xff]
        %v2687 = vld [vmem:[#allocation12 + $0x220] sm:$0xff]
        %v2688 = vld [vmem:[#allocation12 + $0x228] sm:$0xff]
        %v2689 = vld [vmem:[#allocation12 + $0x230] sm:$0xff]
        %v2690 = vld [vmem:[#allocation12 + $0x238] sm:$0xff]
        %v2691 = vld [vmem:[#allocation12 + $0x240] sm:$0xff]
        %v2692 = vld [vmem:[#allocation12 + $0x248] sm:$0xff]
        %v2693 = vld [vmem:[#allocation12 + $0x250] sm:$0xff]
        %v2694 = vld [vmem:[#allocation12 + $0x258] sm:$0xff]
        %v2695 = vld [vmem:[#allocation12 + $0x260] sm:$0xff]
        %v2696 = vld [vmem:[#allocation12 + $0x268] sm:$0xff]
        %v2697 = vld [vmem:[#allocation12 + $0x270] sm:$0xff]
        %v2698 = vld [vmem:[#allocation12 + $0x278] sm:$0xff]
        %v2699 = vld [vmem:[#allocation12 + $0x280] sm:$0xff]
        %v2700 = vld [vmem:[#allocation12 + $0x288] sm:$0xff]
        %v2701 = vld [vmem:[#allocation12 + $0x290] sm:$0xff]
        %v2702 = vld [vmem:[#allocation12 + $0x298] sm:$0xff]
        %v2703 = vld [vmem:[#allocation12 + $0x2a0] sm:$0xff]
        %v2704 = vld [vmem:[#allocation12 + $0x2a8] sm:$0xff]
        %v2705 = vld [vmem:[#allocation12 + $0x2b0] sm:$0xff]
        %v2706 = vld [vmem:[#allocation12 + $0x2b8] sm:$0xff]
        %v2707 = vld [vmem:[#allocation12 + $0x2c0] sm:$0xff]
        %v2708 = vld [vmem:[#allocation12 + $0x2c8] sm:$0xff]
        %v2709 = vld [vmem:[#allocation12 + $0x2d0] sm:$0xff]
        %v2710 = vld [vmem:[#allocation12 + $0x2d8] sm:$0xff]
        %v2711 = vld [vmem:[#allocation12 + $0x2e0] sm:$0xff]
        %v2712 = vld [vmem:[#allocation12 + $0x2e8] sm:$0xff]
        %v2713 = vld [vmem:[#allocation12 + $0x2f0] sm:$0xff]
        %v2714 = vld [vmem:[#allocation12 + $0x2f8] sm:$0xff]
        %v2715 = vld [vmem:[#allocation12 + $0x300] sm:$0xff]
        %v2716 = vld [vmem:[#allocation12 + $0x308] sm:$0xff]
        %v2717 = vld [vmem:[#allocation12 + $0x310] sm:$0xff]
        %v2718 = vld [vmem:[#allocation12 + $0x318] sm:$0xff]
        %v2719 = vld [vmem:[#allocation12 + $0x320] sm:$0xff]
        %v2720 = vld [vmem:[#allocation12 + $0x328] sm:$0xff]
        %v2721 = vld [vmem:[#allocation12 + $0x330] sm:$0xff]
        %v2722 = vld [vmem:[#allocation12 + $0x338] sm:$0xff]
        %v2723 = vld [vmem:[#allocation12 + $0x340] sm:$0xff]
        %v2724 = vld [vmem:[#allocation12 + $0x348] sm:$0xff]
        %v2725 = vld [vmem:[#allocation12 + $0x350] sm:$0xff]
        %v2726 = vld [vmem:[#allocation12 + $0x358] sm:$0xff]
        %v2727 = vld [vmem:[#allocation12 + $0x360] sm:$0xff]
        %v2728 = vld [vmem:[#allocation12 + $0x368] sm:$0xff]
        %v2729 = vld [vmem:[#allocation12 + $0x370] sm:$0xff]
        %v2730 = vld [vmem:[#allocation12 + $0x378] sm:$0xff]
        %v2731 = vld [vmem:[#allocation12 + $0x380] sm:$0xff]
        %v2732 = vld [vmem:[#allocation12 + $0x388] sm:$0xff]
        %v2733 = vld [vmem:[#allocation12 + $0x390] sm:$0xff]
        %v2734 = vld [vmem:[#allocation12 + $0x398] sm:$0xff]
        %v2735 = vld [vmem:[#allocation12 + $0x3a0] sm:$0xff]
        %v2736 = vld [vmem:[#allocation12 + $0x3a8] sm:$0xff]
        %v2737 = vld [vmem:[#allocation12 + $0x3b0] sm:$0xff]
        %v2738 = vld [vmem:[#allocation12 + $0x3b8] sm:$0xff]
        %v2739 = vld [vmem:[#allocation12 + $0x3c0] sm:$0xff]
        %v2740 = vld [vmem:[#allocation12 + $0x3c8] sm:$0xff]
        %v2741 = vld [vmem:[#allocation12 + $0x3d0] sm:$0xff]
        %v2742 = vld [vmem:[#allocation12 + $0x3d8] sm:$0xff]
        %v2743 = vld [vmem:[#allocation12 + $0x3e0] sm:$0xff]
        %v2744 = vld [vmem:[#allocation12 + $0x3e8] sm:$0xff]
        %v2745 = vld [vmem:[#allocation12 + $0x3f0] sm:$0xff]
        %v2746 = vld [vmem:[#allocation12 + $0x3f8] sm:$0xff]
        %v2747 = vld [vmem:[%s7] sm:$0xf]
        %v2749 = vlaneseq
        %v2750 = vshrl.u32 %v2749, 7
        %v2751 = vsub.s32 0, %v2750
        %v2752 = vrot.slane %v2747, %v2751
        %v2753 = vlaneseq
        %v2754 = vshrl.u32 %v2753, 7
        %v2755 = vsub.s32 1, %v2754
        %v2756 = vrot.slane %v2747, %v2755
        %v2757 = vlaneseq
        %v2758 = vshrl.u32 %v2757, 7
        %v2759 = vsub.s32 2, %v2758
        %v2760 = vrot.slane %v2747, %v2759
        %v2761 = vlaneseq
        %v2762 = vshrl.u32 %v2761, 7
        %v2763 = vsub.s32 3, %v2762
        %v2764 = vrot.slane %v2747, %v2763
        %v2897 = vunpack.c.l.b16 %v2619
        %v2898 = vunpack.c.h.b16 %v2619
        %v2899 = vunpack.c.l.b16 %v2620
        %v2900 = vunpack.c.h.b16 %v2620
        %v2901 = vunpack.c.l.b16 %v2621
        %v2902 = vunpack.c.h.b16 %v2621
        %v2903 = vunpack.c.l.b16 %v2622
        %v2904 = vunpack.c.h.b16 %v2622
        %v2905 = vunpack.c.l.b16 %v2623
        %v2906 = vunpack.c.h.b16 %v2623
        %v2907 = vunpack.c.l.b16 %v2624
        %v2908 = vunpack.c.h.b16 %v2624
        %v2909 = vunpack.c.l.b16 %v2625
        %v2910 = vunpack.c.h.b16 %v2625
        %v2911 = vunpack.c.l.b16 %v2626
        %v2912 = vunpack.c.h.b16 %v2626
        %v2913 = vunpack.c.l.b16 %v2627
        %v2914 = vunpack.c.h.b16 %v2627
        %v2915 = vunpack.c.l.b16 %v2628
        %v2916 = vunpack.c.h.b16 %v2628
        %v2917 = vunpack.c.l.b16 %v2629
        %v2918 = vunpack.c.h.b16 %v2629
        %v2919 = vunpack.c.l.b16 %v2630
        %v2920 = vunpack.c.h.b16 %v2630
        %v2921 = vunpack.c.l.b16 %v2631
        %v2922 = vunpack.c.h.b16 %v2631
        %v2923 = vunpack.c.l.b16 %v2632
        %v2924 = vunpack.c.h.b16 %v2632
        %v2925 = vunpack.c.l.b16 %v2633
        %v2926 = vunpack.c.h.b16 %v2633
        %v2927 = vunpack.c.l.b16 %v2634
        %v2928 = vunpack.c.h.b16 %v2634
        %v2929 = vunpack.c.l.b16 %v2635
        %v2930 = vunpack.c.h.b16 %v2635
        %v2931 = vunpack.c.l.b16 %v2636
        %v2932 = vunpack.c.h.b16 %v2636
        %v2933 = vunpack.c.l.b16 %v2637
        %v2934 = vunpack.c.h.b16 %v2637
        %v2935 = vunpack.c.l.b16 %v2638
        %v2936 = vunpack.c.h.b16 %v2638
        %v2937 = vunpack.c.l.b16 %v2639
        %v2938 = vunpack.c.h.b16 %v2639
        %v2939 = vunpack.c.l.b16 %v2640
        %v2940 = vunpack.c.h.b16 %v2640
        %v2941 = vunpack.c.l.b16 %v2641
        %v2942 = vunpack.c.h.b16 %v2641
        %v2943 = vunpack.c.l.b16 %v2642
        %v2944 = vunpack.c.h.b16 %v2642
        %v2945 = vunpack.c.l.b16 %v2643
        %v2946 = vunpack.c.h.b16 %v2643
        %v2947 = vunpack.c.l.b16 %v2644
        %v2948 = vunpack.c.h.b16 %v2644
        %v2949 = vunpack.c.l.b16 %v2645
        %v2950 = vunpack.c.h.b16 %v2645
        %v2951 = vunpack.c.l.b16 %v2646
        %v2952 = vunpack.c.h.b16 %v2646
        %v2953 = vunpack.c.l.b16 %v2647
        %v2954 = vunpack.c.h.b16 %v2647
        %v2955 = vunpack.c.l.b16 %v2648
        %v2956 = vunpack.c.h.b16 %v2648
        %v2957 = vunpack.c.l.b16 %v2649
        %v2958 = vunpack.c.h.b16 %v2649
        %v2959 = vunpack.c.l.b16 %v2650
        %v2960 = vunpack.c.h.b16 %v2650
        %v2961 = vunpack.c.l.b16 %v2651
        %v2962 = vunpack.c.h.b16 %v2651
        %v2963 = vunpack.c.l.b16 %v2652
        %v2964 = vunpack.c.h.b16 %v2652
        %v2965 = vunpack.c.l.b16 %v2653
        %v2966 = vunpack.c.h.b16 %v2653
        %v2967 = vunpack.c.l.b16 %v2654
        %v2968 = vunpack.c.h.b16 %v2654
        %v2969 = vunpack.c.l.b16 %v2655
        %v2970 = vunpack.c.h.b16 %v2655
        %v2971 = vunpack.c.l.b16 %v2656
        %v2972 = vunpack.c.h.b16 %v2656
        %v2973 = vunpack.c.l.b16 %v2657
        %v2974 = vunpack.c.h.b16 %v2657
        %v2975 = vunpack.c.l.b16 %v2658
        %v2976 = vunpack.c.h.b16 %v2658
        %v2977 = vunpack.c.l.b16 %v2659
        %v2978 = vunpack.c.h.b16 %v2659
        %v2979 = vunpack.c.l.b16 %v2660
        %v2980 = vunpack.c.h.b16 %v2660
        %v2981 = vunpack.c.l.b16 %v2661
        %v2982 = vunpack.c.h.b16 %v2661
        %v2983 = vunpack.c.l.b16 %v2662
        %v2984 = vunpack.c.h.b16 %v2662
        %v2985 = vunpack.c.l.b16 %v2663
        %v2986 = vunpack.c.h.b16 %v2663
        %v2987 = vunpack.c.l.b16 %v2664
        %v2988 = vunpack.c.h.b16 %v2664
        %v2989 = vunpack.c.l.b16 %v2665
        %v2990 = vunpack.c.h.b16 %v2665
        %v2991 = vunpack.c.l.b16 %v2666
        %v2992 = vunpack.c.h.b16 %v2666
        %v2993 = vunpack.c.l.b16 %v2667
        %v2994 = vunpack.c.h.b16 %v2667
        %v2995 = vunpack.c.l.b16 %v2668
        %v2996 = vunpack.c.h.b16 %v2668
        %v2997 = vunpack.c.l.b16 %v2669
        %v2998 = vunpack.c.h.b16 %v2669
        %v2999 = vunpack.c.l.b16 %v2670
        %v3000 = vunpack.c.h.b16 %v2670
        %v3001 = vunpack.c.l.b16 %v2671
        %v3002 = vunpack.c.h.b16 %v2671
        %v3003 = vunpack.c.l.b16 %v2672
        %v3004 = vunpack.c.h.b16 %v2672
        %v3005 = vunpack.c.l.b16 %v2673
        %v3006 = vunpack.c.h.b16 %v2673
        %v3007 = vunpack.c.l.b16 %v2674
        %v3008 = vunpack.c.h.b16 %v2674
        %v3009 = vunpack.c.l.b16 %v2675
        %v3010 = vunpack.c.h.b16 %v2675
        %v3011 = vunpack.c.l.b16 %v2676
        %v3012 = vunpack.c.h.b16 %v2676
        %v3013 = vunpack.c.l.b16 %v2677
        %v3014 = vunpack.c.h.b16 %v2677
        %v3015 = vunpack.c.l.b16 %v2678
        %v3016 = vunpack.c.h.b16 %v2678
        %v3017 = vunpack.c.l.b16 %v2679
        %v3018 = vunpack.c.h.b16 %v2679
        %v3019 = vunpack.c.l.b16 %v2680
        %v3020 = vunpack.c.h.b16 %v2680
        %v3021 = vunpack.c.l.b16 %v2681
        %v3022 = vunpack.c.h.b16 %v2681
        %v3023 = vunpack.c.l.b16 %v2682
        %v3024 = vunpack.c.h.b16 %v2682
        %v3025 = vunpack.c.l.b16 %v2683
        %v3026 = vunpack.c.h.b16 %v2683
        %v3027 = vunpack.c.l.b16 %v2684
        %v3028 = vunpack.c.h.b16 %v2684
        %v3029 = vunpack.c.l.b16 %v2685
        %v3030 = vunpack.c.h.b16 %v2685
        %v3031 = vunpack.c.l.b16 %v2686
        %v3032 = vunpack.c.h.b16 %v2686
        %v3033 = vunpack.c.l.b16 %v2687
        %v3034 = vunpack.c.h.b16 %v2687
        %v3035 = vunpack.c.l.b16 %v2688
        %v3036 = vunpack.c.h.b16 %v2688
        %v3037 = vunpack.c.l.b16 %v2689
        %v3038 = vunpack.c.h.b16 %v2689
        %v3039 = vunpack.c.l.b16 %v2690
        %v3040 = vunpack.c.h.b16 %v2690
        %v3041 = vunpack.c.l.b16 %v2691
        %v3042 = vunpack.c.h.b16 %v2691
        %v3043 = vunpack.c.l.b16 %v2692
        %v3044 = vunpack.c.h.b16 %v2692
        %v3045 = vunpack.c.l.b16 %v2693
        %v3046 = vunpack.c.h.b16 %v2693
        %v3047 = vunpack.c.l.b16 %v2694
        %v3048 = vunpack.c.h.b16 %v2694
        %v3049 = vunpack.c.l.b16 %v2695
        %v3050 = vunpack.c.h.b16 %v2695
        %v3051 = vunpack.c.l.b16 %v2696
        %v3052 = vunpack.c.h.b16 %v2696
        %v3053 = vunpack.c.l.b16 %v2697
        %v3054 = vunpack.c.h.b16 %v2697
        %v3055 = vunpack.c.l.b16 %v2698
        %v3056 = vunpack.c.h.b16 %v2698
        %v3057 = vunpack.c.l.b16 %v2699
        %v3058 = vunpack.c.h.b16 %v2699
        %v3059 = vunpack.c.l.b16 %v2700
        %v3060 = vunpack.c.h.b16 %v2700
        %v3061 = vunpack.c.l.b16 %v2701
        %v3062 = vunpack.c.h.b16 %v2701
        %v3063 = vunpack.c.l.b16 %v2702
        %v3064 = vunpack.c.h.b16 %v2702
        %v3065 = vunpack.c.l.b16 %v2703
        %v3066 = vunpack.c.h.b16 %v2703
        %v3067 = vunpack.c.l.b16 %v2704
        %v3068 = vunpack.c.h.b16 %v2704
        %v3069 = vunpack.c.l.b16 %v2705
        %v3070 = vunpack.c.h.b16 %v2705
        %v3071 = vunpack.c.l.b16 %v2706
        %v3072 = vunpack.c.h.b16 %v2706
        %v3073 = vunpack.c.l.b16 %v2707
        %v3074 = vunpack.c.h.b16 %v2707
        %v3075 = vunpack.c.l.b16 %v2708
        %v3076 = vunpack.c.h.b16 %v2708
        %v3077 = vunpack.c.l.b16 %v2709
        %v3078 = vunpack.c.h.b16 %v2709
        %v3079 = vunpack.c.l.b16 %v2710
        %v3080 = vunpack.c.h.b16 %v2710
        %v3081 = vunpack.c.l.b16 %v2711
        %v3082 = vunpack.c.h.b16 %v2711
        %v3083 = vunpack.c.l.b16 %v2712
        %v3084 = vunpack.c.h.b16 %v2712
        %v3085 = vunpack.c.l.b16 %v2713
        %v3086 = vunpack.c.h.b16 %v2713
        %v3087 = vunpack.c.l.b16 %v2714
        %v3088 = vunpack.c.h.b16 %v2714
        %v3089 = vunpack.c.l.b16 %v2715
        %v3090 = vunpack.c.h.b16 %v2715
        %v3091 = vunpack.c.l.b16 %v2716
        %v3092 = vunpack.c.h.b16 %v2716
        %v3093 = vunpack.c.l.b16 %v2717
        %v3094 = vunpack.c.h.b16 %v2717
        %v3095 = vunpack.c.l.b16 %v2718
        %v3096 = vunpack.c.h.b16 %v2718
        %v3097 = vunpack.c.l.b16 %v2719
        %v3098 = vunpack.c.h.b16 %v2719
        %v3099 = vunpack.c.l.b16 %v2720
        %v3100 = vunpack.c.h.b16 %v2720
        %v3101 = vunpack.c.l.b16 %v2721
        %v3102 = vunpack.c.h.b16 %v2721
        %v3103 = vunpack.c.l.b16 %v2722
        %v3104 = vunpack.c.h.b16 %v2722
        %v3105 = vunpack.c.l.b16 %v2723
        %v3106 = vunpack.c.h.b16 %v2723
        %v3107 = vunpack.c.l.b16 %v2724
        %v3108 = vunpack.c.h.b16 %v2724
        %v3109 = vunpack.c.l.b16 %v2725
        %v3110 = vunpack.c.h.b16 %v2725
        %v3111 = vunpack.c.l.b16 %v2726
        %v3112 = vunpack.c.h.b16 %v2726
        %v3113 = vunpack.c.l.b16 %v2727
        %v3114 = vunpack.c.h.b16 %v2727
        %v3115 = vunpack.c.l.b16 %v2728
        %v3116 = vunpack.c.h.b16 %v2728
        %v3117 = vunpack.c.l.b16 %v2729
        %v3118 = vunpack.c.h.b16 %v2729
        %v3119 = vunpack.c.l.b16 %v2730
        %v3120 = vunpack.c.h.b16 %v2730
        %v3121 = vunpack.c.l.b16 %v2731
        %v3122 = vunpack.c.h.b16 %v2731
        %v3123 = vunpack.c.l.b16 %v2732
        %v3124 = vunpack.c.h.b16 %v2732
        %v3125 = vunpack.c.l.b16 %v2733
        %v3126 = vunpack.c.h.b16 %v2733
        %v3127 = vunpack.c.l.b16 %v2734
        %v3128 = vunpack.c.h.b16 %v2734
        %v3129 = vunpack.c.l.b16 %v2735
        %v3130 = vunpack.c.h.b16 %v2735
        %v3131 = vunpack.c.l.b16 %v2736
        %v3132 = vunpack.c.h.b16 %v2736
        %v3133 = vunpack.c.l.b16 %v2737
        %v3134 = vunpack.c.h.b16 %v2737
        %v3135 = vunpack.c.l.b16 %v2738
        %v3136 = vunpack.c.h.b16 %v2738
        %v3137 = vunpack.c.l.b16 %v2739
        %v3138 = vunpack.c.h.b16 %v2739
        %v3139 = vunpack.c.l.b16 %v2740
        %v3140 = vunpack.c.h.b16 %v2740
        %v3141 = vunpack.c.l.b16 %v2741
        %v3142 = vunpack.c.h.b16 %v2741
        %v3143 = vunpack.c.l.b16 %v2742
        %v3144 = vunpack.c.h.b16 %v2742
        %v3145 = vunpack.c.l.b16 %v2743
        %v3146 = vunpack.c.h.b16 %v2743
        %v3147 = vunpack.c.l.b16 %v2744
        %v3148 = vunpack.c.h.b16 %v2744
        %v3149 = vunpack.c.l.b16 %v2745
        %v3150 = vunpack.c.h.b16 %v2745
        %v3151 = vunpack.c.l.b16 %v2746
        %v3152 = vunpack.c.h.b16 %v2746
        %v3153 = vpack.c.b16 %v2901, %v2897
        %v3154 = vpack.c.b16 %v2902, %v2898
        %v3155 = vpack.c.b16 %v2903, %v2899
        %v3156 = vpack.c.b16 %v2904, %v2900
        %v3157 = vpack.c.b16 %v2909, %v2905
        %v3158 = vpack.c.b16 %v2910, %v2906
        %v3159 = vpack.c.b16 %v2911, %v2907
        %v3160 = vpack.c.b16 %v2912, %v2908
        %v3161 = vpack.c.b16 %v2917, %v2913
        %v3162 = vpack.c.b16 %v2918, %v2914
        %v3163 = vpack.c.b16 %v2919, %v2915
        %v3164 = vpack.c.b16 %v2920, %v2916
        %v3165 = vpack.c.b16 %v2925, %v2921
        %v3166 = vpack.c.b16 %v2926, %v2922
        %v3167 = vpack.c.b16 %v2927, %v2923
        %v3168 = vpack.c.b16 %v2928, %v2924
        %v3169 = vpack.c.b16 %v2933, %v2929
        %v3170 = vpack.c.b16 %v2934, %v2930
        %v3171 = vpack.c.b16 %v2935, %v2931
        %v3172 = vpack.c.b16 %v2936, %v2932
        %v3173 = vpack.c.b16 %v2941, %v2937
        %v3174 = vpack.c.b16 %v2942, %v2938
        %v3175 = vpack.c.b16 %v2943, %v2939
        %v3176 = vpack.c.b16 %v2944, %v2940
        %v3177 = vpack.c.b16 %v2949, %v2945
        %v3178 = vpack.c.b16 %v2950, %v2946
        %v3179 = vpack.c.b16 %v2951, %v2947
        %v3180 = vpack.c.b16 %v2952, %v2948
        %v3181 = vpack.c.b16 %v2957, %v2953
        %v3182 = vpack.c.b16 %v2958, %v2954
        %v3183 = vpack.c.b16 %v2959, %v2955
        %v3184 = vpack.c.b16 %v2960, %v2956
        %v3185 = vpack.c.b16 %v2965, %v2961
        %v3186 = vpack.c.b16 %v2966, %v2962
        %v3187 = vpack.c.b16 %v2967, %v2963
        %v3188 = vpack.c.b16 %v2968, %v2964
        %v3189 = vpack.c.b16 %v2973, %v2969
        %v3190 = vpack.c.b16 %v2974, %v2970
        %v3191 = vpack.c.b16 %v2975, %v2971
        %v3192 = vpack.c.b16 %v2976, %v2972
        %v3193 = vpack.c.b16 %v2981, %v2977
        %v3194 = vpack.c.b16 %v2982, %v2978
        %v3195 = vpack.c.b16 %v2983, %v2979
        %v3196 = vpack.c.b16 %v2984, %v2980
        %v3197 = vpack.c.b16 %v2989, %v2985
        %v3198 = vpack.c.b16 %v2990, %v2986
        %v3199 = vpack.c.b16 %v2991, %v2987
        %v3200 = vpack.c.b16 %v2992, %v2988
        %v3201 = vpack.c.b16 %v2997, %v2993
        %v3202 = vpack.c.b16 %v2998, %v2994
        %v3203 = vpack.c.b16 %v2999, %v2995
        %v3204 = vpack.c.b16 %v3000, %v2996
        %v3205 = vpack.c.b16 %v3005, %v3001
        %v3206 = vpack.c.b16 %v3006, %v3002
        %v3207 = vpack.c.b16 %v3007, %v3003
        %v3208 = vpack.c.b16 %v3008, %v3004
        %v3209 = vpack.c.b16 %v3013, %v3009
        %v3210 = vpack.c.b16 %v3014, %v3010
        %v3211 = vpack.c.b16 %v3015, %v3011
        %v3212 = vpack.c.b16 %v3016, %v3012
        %v3213 = vpack.c.b16 %v3021, %v3017
        %v3214 = vpack.c.b16 %v3022, %v3018
        %v3215 = vpack.c.b16 %v3023, %v3019
        %v3216 = vpack.c.b16 %v3024, %v3020
        %v3217 = vpack.c.b16 %v3029, %v3025
        %v3218 = vpack.c.b16 %v3030, %v3026
        %v3219 = vpack.c.b16 %v3031, %v3027
        %v3220 = vpack.c.b16 %v3032, %v3028
        %v3221 = vpack.c.b16 %v3037, %v3033
        %v3222 = vpack.c.b16 %v3038, %v3034
        %v3223 = vpack.c.b16 %v3039, %v3035
        %v3224 = vpack.c.b16 %v3040, %v3036
        %v3225 = vpack.c.b16 %v3045, %v3041
        %v3226 = vpack.c.b16 %v3046, %v3042
        %v3227 = vpack.c.b16 %v3047, %v3043
        %v3228 = vpack.c.b16 %v3048, %v3044
        %v3229 = vpack.c.b16 %v3053, %v3049
        %v3230 = vpack.c.b16 %v3054, %v3050
        %v3231 = vpack.c.b16 %v3055, %v3051
        %v3232 = vpack.c.b16 %v3056, %v3052
        %v3233 = vpack.c.b16 %v3061, %v3057
        %v3234 = vpack.c.b16 %v3062, %v3058
        %v3235 = vpack.c.b16 %v3063, %v3059
        %v3236 = vpack.c.b16 %v3064, %v3060
        %v3237 = vpack.c.b16 %v3069, %v3065
        %v3238 = vpack.c.b16 %v3070, %v3066
        %v3239 = vpack.c.b16 %v3071, %v3067
        %v3240 = vpack.c.b16 %v3072, %v3068
        %v3241 = vpack.c.b16 %v3077, %v3073
        %v3242 = vpack.c.b16 %v3078, %v3074
        %v3243 = vpack.c.b16 %v3079, %v3075
        %v3244 = vpack.c.b16 %v3080, %v3076
        %v3245 = vpack.c.b16 %v3085, %v3081
        %v3246 = vpack.c.b16 %v3086, %v3082
        %v3247 = vpack.c.b16 %v3087, %v3083
        %v3248 = vpack.c.b16 %v3088, %v3084
        %v3249 = vpack.c.b16 %v3093, %v3089
        %v3250 = vpack.c.b16 %v3094, %v3090
        %v3251 = vpack.c.b16 %v3095, %v3091
        %v3252 = vpack.c.b16 %v3096, %v3092
        %v3253 = vpack.c.b16 %v3101, %v3097
        %v3254 = vpack.c.b16 %v3102, %v3098
        %v3255 = vpack.c.b16 %v3103, %v3099
        %v3256 = vpack.c.b16 %v3104, %v3100
        %v3257 = vpack.c.b16 %v3109, %v3105
        %v3258 = vpack.c.b16 %v3110, %v3106
        %v3259 = vpack.c.b16 %v3111, %v3107
        %v3260 = vpack.c.b16 %v3112, %v3108
        %v3261 = vpack.c.b16 %v3117, %v3113
        %v3262 = vpack.c.b16 %v3118, %v3114
        %v3263 = vpack.c.b16 %v3119, %v3115
        %v3264 = vpack.c.b16 %v3120, %v3116
        %v3265 = vpack.c.b16 %v3125, %v3121
        %v3266 = vpack.c.b16 %v3126, %v3122
        %v3267 = vpack.c.b16 %v3127, %v3123
        %v3268 = vpack.c.b16 %v3128, %v3124
        %v3269 = vpack.c.b16 %v3133, %v3129
        %v3270 = vpack.c.b16 %v3134, %v3130
        %v3271 = vpack.c.b16 %v3135, %v3131
        %v3272 = vpack.c.b16 %v3136, %v3132
        %v3273 = vpack.c.b16 %v3141, %v3137
        %v3274 = vpack.c.b16 %v3142, %v3138
        %v3275 = vpack.c.b16 %v3143, %v3139
        %v3276 = vpack.c.b16 %v3144, %v3140
        %v3277 = vpack.c.b16 %v3149, %v3145
        %v3278 = vpack.c.b16 %v3150, %v3146
        %v3279 = vpack.c.b16 %v3151, %v3147
        %v3280 = vpack.c.b16 %v3152, %v3148
        %3409 = vmatprep.subr.bf16.mxu0 %v3154
        %3410 = vmatpush1.bf16.msra.mxu0 %v3153
        %3411 = vmatprep.subr.bf16.mxu0 %v3158
        %3412 = vmatpush1.bf16.msra.mxu0 %v3157
        %3413 = vmatprep.subr.bf16.mxu0 %v3162
        %3414 = vmatpush1.bf16.msra.mxu0 %v3161
        %3415 = vmatprep.subr.bf16.mxu0 %v3166
        %3416 = vmatpush1.bf16.msra.mxu0 %v3165
        %3417 = vmatprep.subr.bf16.mxu0 %v3170
        %3418 = vmatpush1.bf16.msra.mxu0 %v3169
        %3419 = vmatprep.subr.bf16.mxu0 %v3174
        %3420 = vmatpush1.bf16.msra.mxu0 %v3173
        %3421 = vmatprep.subr.bf16.mxu0 %v3178
        %3422 = vmatpush1.bf16.msra.mxu0 %v3177
        %3423 = vmatprep.subr.bf16.mxu0 %v3182
        %3424 = vmatpush1.bf16.msra.mxu0 %v3181
        %3425 = vmatprep.subr.bf16.mxu0 %v3186
        %3426 = vmatpush1.bf16.msra.mxu0 %v3185
        %3427 = vmatprep.subr.bf16.mxu0 %v3190
        %3428 = vmatpush1.bf16.msra.mxu0 %v3189
        %3429 = vmatprep.subr.bf16.mxu0 %v3194
        %3430 = vmatpush1.bf16.msra.mxu0 %v3193
        %3431 = vmatprep.subr.bf16.mxu0 %v3198
        %3432 = vmatpush1.bf16.msra.mxu0 %v3197
        %3433 = vmatprep.subr.bf16.mxu0 %v3202
        %3434 = vmatpush1.bf16.msra.mxu0 %v3201
        %3435 = vmatprep.subr.bf16.mxu0 %v3206
        %3436 = vmatpush1.bf16.msra.mxu0 %v3205
        %3437 = vmatprep.subr.bf16.mxu0 %v3210
        %3438 = vmatpush1.bf16.msra.mxu0 %v3209
        %3439 = vmatprep.subr.bf16.mxu0 %v3214
        %3440 = vmatpush1.bf16.msra.mxu0 %v3213
        %3441 = vmatprep.mubr.bf16.mxu0 %v2616
        %3442 = vmatmul.mubr.bf16.gmra.mrb[0].mxu0 %v2615
        %v3443 = vpop.f32.mrb[0].mxu0
        %v3444 = vadd.f32 %v2752, %v3443
        %v3445 = vpop.f32.mrb[0].mxu0
        %v3446 = vadd.f32 %v2756, %v3445
        %v3447 = vpop.f32.mrb[0].mxu0
        %v3448 = vpop.f32.mrb[0].mxu0
        %3449 = vdwg.mxu0
        %3450 = vmatprep.subr.bf16.mxu0 %v3218
        %3451 = vmatpush1.bf16.msra.mxu0 %v3217
        %3452 = vmatprep.subr.bf16.mxu0 %v3222
        %3453 = vmatpush1.bf16.msra.mxu0 %v3221
        %3454 = vmatprep.subr.bf16.mxu0 %v3226
        %3455 = vmatpush1.bf16.msra.mxu0 %v3225
        %3456 = vmatprep.subr.bf16.mxu0 %v3230
        %3457 = vmatpush1.bf16.msra.mxu0 %v3229
        %3458 = vmatprep.subr.bf16.mxu0 %v3234
        %3459 = vmatpush1.bf16.msra.mxu0 %v3233
        %3460 = vmatprep.subr.bf16.mxu0 %v3238
        %3461 = vmatpush1.bf16.msra.mxu0 %v3237
        %3462 = vmatprep.subr.bf16.mxu0 %v3242
        %3463 = vmatpush1.bf16.msra.mxu0 %v3241
        %3464 = vmatprep.subr.bf16.mxu0 %v3246
        %3465 = vmatpush1.bf16.msra.mxu0 %v3245
        %3466 = vmatprep.subr.bf16.mxu0 %v3250
        %3467 = vmatpush1.bf16.msra.mxu0 %v3249
        %3468 = vmatprep.subr.bf16.mxu0 %v3254
        %3469 = vmatpush1.bf16.msra.mxu0 %v3253
        %3470 = vmatprep.subr.bf16.mxu0 %v3258
        %3471 = vmatpush1.bf16.msra.mxu0 %v3257
        %3472 = vmatprep.subr.bf16.mxu0 %v3262
        %3473 = vmatpush1.bf16.msra.mxu0 %v3261
        %3474 = vmatprep.subr.bf16.mxu0 %v3266
        %3475 = vmatpush1.bf16.msra.mxu0 %v3265
        %3476 = vmatprep.subr.bf16.mxu0 %v3270
        %3477 = vmatpush1.bf16.msra.mxu0 %v3269
        %3478 = vmatprep.subr.bf16.mxu0 %v3274
        %3479 = vmatpush1.bf16.msra.mxu0 %v3273
        %3480 = vmatprep.subr.bf16.mxu0 %v3278
        %3481 = vmatpush1.bf16.msra.mxu0 %v3277
        %3482 = vmatprep.mubr.bf16.mxu0 %v2618
        %3483 = vmatmul.mubr.bf16.gmra.mrb[0].mxu0 %v2617
        %v3484 = vpop.f32.mrb[0].mxu0
        %v3485 = vadd.f32 %v3444, %v3484
        %v3486 = vpop.f32.mrb[0].mxu0
        %v3487 = vadd.f32 %v3446, %v3486
        %v3488 = vpop.f32.mrb[0].mxu0
        %v3489 = vpop.f32.mrb[0].mxu0
        %3490 = vdwg.mxu0
        %3491 = vmatprep.subr.bf16.mxu0 %v3156
        %3492 = vmatpush1.bf16.msra.mxu0 %v3155
        %3493 = vmatprep.subr.bf16.mxu0 %v3160
        %3494 = vmatpush1.bf16.msra.mxu0 %v3159
        %3495 = vmatprep.subr.bf16.mxu0 %v3164
        %3496 = vmatpush1.bf16.msra.mxu0 %v3163
        %3497 = vmatprep.subr.bf16.mxu0 %v3168
        %3498 = vmatpush1.bf16.msra.mxu0 %v3167
        %3499 = vmatprep.subr.bf16.mxu0 %v3172
        %3500 = vmatpush1.bf16.msra.mxu0 %v3171
        %3501 = vmatprep.subr.bf16.mxu0 %v3176
        %3502 = vmatpush1.bf16.msra.mxu0 %v3175
        %3503 = vmatprep.subr.bf16.mxu0 %v3180
        %3504 = vmatpush1.bf16.msra.mxu0 %v3179
        %3505 = vmatprep.subr.bf16.mxu0 %v3184
        %3506 = vmatpush1.bf16.msra.mxu0 %v3183
        %3507 = vmatprep.subr.bf16.mxu0 %v3188
        %3508 = vmatpush1.bf16.msra.mxu0 %v3187
        %3509 = vmatprep.subr.bf16.mxu0 %v3192
        %3510 = vmatpush1.bf16.msra.mxu0 %v3191
        %3511 = vmatprep.subr.bf16.mxu0 %v3196
        %3512 = vmatpush1.bf16.msra.mxu0 %v3195
        %3513 = vmatprep.subr.bf16.mxu0 %v3200
        %3514 = vmatpush1.bf16.msra.mxu0 %v3199
        %3515 = vmatprep.subr.bf16.mxu0 %v3204
        %3516 = vmatpush1.bf16.msra.mxu0 %v3203
        %3517 = vmatprep.subr.bf16.mxu0 %v3208
        %3518 = vmatpush1.bf16.msra.mxu0 %v3207
        %3519 = vmatprep.subr.bf16.mxu0 %v3212
        %3520 = vmatpush1.bf16.msra.mxu0 %v3211
        %3521 = vmatprep.subr.bf16.mxu0 %v3216
        %3522 = vmatpush1.bf16.msra.mxu0 %v3215
        %3523 = vmatprep.mubr.bf16.mxu0 %v2616
        %3524 = vmatmul.mubr.bf16.gmra.mrb[0].mxu0 %v2615
        %v3525 = vpop.f32.mrb[0].mxu0
        %v3526 = vadd.f32 %v2760, %v3525
        %v3527 = vpop.f32.mrb[0].mxu0
        %v3528 = vadd.f32 %v2764, %v3527
        %v3529 = vpop.f32.mrb[0].mxu0
        %v3530 = vpop.f32.mrb[0].mxu0
        %3531 = vdwg.mxu0
        %3532 = vmatprep.subr.bf16.mxu0 %v3220
        %3533 = vmatpush1.bf16.msra.mxu0 %v3219
        %3534 = vmatprep.subr.bf16.mxu0 %v3224
        %3535 = vmatpush1.bf16.msra.mxu0 %v3223
        %3536 = vmatprep.subr.bf16.mxu0 %v3228
        %3537 = vmatpush1.bf16.msra.mxu0 %v3227
        %3538 = vmatprep.subr.bf16.mxu0 %v3232
        %3539 = vmatpush1.bf16.msra.mxu0 %v3231
        %3540 = vmatprep.subr.bf16.mxu0 %v3236
        %3541 = vmatpush1.bf16.msra.mxu0 %v3235
        %3542 = vmatprep.subr.bf16.mxu0 %v3240
        %3543 = vmatpush1.bf16.msra.mxu0 %v3239
        %3544 = vmatprep.subr.bf16.mxu0 %v3244
        %3545 = vmatpush1.bf16.msra.mxu0 %v3243
        %3546 = vmatprep.subr.bf16.mxu0 %v3248
        %3547 = vmatpush1.bf16.msra.mxu0 %v3247
        %3548 = vmatprep.subr.bf16.mxu0 %v3252
        %3549 = vmatpush1.bf16.msra.mxu0 %v3251
        %3550 = vmatprep.subr.bf16.mxu0 %v3256
        %3551 = vmatpush1.bf16.msra.mxu0 %v3255
        %3552 = vmatprep.subr.bf16.mxu0 %v3260
        %3553 = vmatpush1.bf16.msra.mxu0 %v3259
        %3554 = vmatprep.subr.bf16.mxu0 %v3264
        %3555 = vmatpush1.bf16.msra.mxu0 %v3263
        %3556 = vmatprep.subr.bf16.mxu0 %v3268
        %3557 = vmatpush1.bf16.msra.mxu0 %v3267
        %3558 = vmatprep.subr.bf16.mxu0 %v3272
        %3559 = vmatpush1.bf16.msra.mxu0 %v3271
        %3560 = vmatprep.subr.bf16.mxu0 %v3276
        %3561 = vmatpush1.bf16.msra.mxu0 %v3275
        %3562 = vmatprep.subr.bf16.mxu0 %v3280
        %3563 = vmatpush1.bf16.msra.mxu0 %v3279
        %3564 = vmatprep.mubr.bf16.mxu0 %v2618
        %3565 = vmatmul.mubr.bf16.gmra.mrb[0].mxu0 %v2617
        %v3566 = vpop.f32.mrb[0].mxu0
        %v3567 = vadd.f32 %v3526, %v3566
        %v3568 = vpop.f32.mrb[0].mxu0
        %v3569 = vadd.f32 %v3528, %v3568
        %v3570 = vpop.f32.mrb[0].mxu0
        %v3571 = vpop.f32.mrb[0].mxu0
        %3572 = vdwg.mxu0
        %v3573 = vxor.u32 %v3485, 2147483648
        %v3574 = vxor.u32 %v3487, 2147483648
        %v3575 = vxor.u32 %v3567, 2147483648
        %v3576 = vxor.u32 %v3569, 2147483648
        %v3577 = vmul.f32 %v3573, 1.442695
        %v3578 = vpow.pop %v3577
        %v3579 = vmul.f32 %v3574, 1.442695
        %v3580 = vpow.pop %v3579
        %v3581 = vmul.f32 %v3575, 1.442695
        %v3582 = vpow.pop %v3581
        %v3583 = vmul.f32 %v3576, 1.442695
        %v3584 = vpow.pop %v3583
        %v3585 = vadd.f32 %v3578, 1.0
        %v3586 = vadd.f32 %v3580, 1.0
        %v3587 = vadd.f32 %v3582, 1.0
        %v3588 = vadd.f32 %v3584, 1.0
        %v3589 = vrcp.pop %v3585
        %v3590 = vmul.f32 1.0, %v3589
        %v3591 = vrcp.pop %v3586
        %v3592 = vmul.f32 1.0, %v3591
        %v3593 = vrcp.pop %v3587
        %v3594 = vmul.f32 1.0, %v3593
        %v3595 = vrcp.pop %v3588
        %v3596 = vmul.f32 1.0, %v3595
        %v3597 = vadd.f32 %v689, %v685
        %v3598 = vadd.f32 %v690, %v686
        %v3599 = vadd.f32 %v691, %v687
        %v3600 = vadd.f32 %v692, %v688
        %v3601 = vmul.f32 %v685, %v3590
        %v3602 = vmul.f32 %v686, %v3592
        %v3603 = vmul.f32 %v687, %v3594
        %v3604 = vmul.f32 %v688, %v3596
        %v3605 = vpack.c.bf16 %v3601, %v3601
        %v3606 = vpack.c.bf16 %v3602, %v3602
        %v3607 = vpack.c.bf16 %v3603, %v3603
        %v3608 = vpack.c.bf16 %v3604, %v3604
        %v3609 = vld [vmem:[#allocation14] sm:$0xff]
        %v3610 = vld [vmem:[#allocation14 + $0x8] sm:$0xff]
        %v3611 = vld [vmem:[#allocation14 + $0x10] sm:$0xff]
        %v3612 = vld [vmem:[#allocation14 + $0x18] sm:$0xff]
        %v3613 = vld [vmem:[#allocation14 + $0x20] sm:$0xff]
        %v3614 = vld [vmem:[#allocation14 + $0x28] sm:$0xff]
        %v3615 = vld [vmem:[#allocation14 + $0x30] sm:$0xff]
        %v3616 = vld [vmem:[#allocation14 + $0x38] sm:$0xff]
        %v3617 = vld [vmem:[#allocation14 + $0x40] sm:$0xff]
        %v3618 = vld [vmem:[#allocation14 + $0x48] sm:$0xff]
        %v3619 = vld [vmem:[#allocation14 + $0x50] sm:$0xff]
        %v3620 = vld [vmem:[#allocation14 + $0x58] sm:$0xff]
        %v3621 = vld [vmem:[#allocation14 + $0x60] sm:$0xff]
        %v3622 = vld [vmem:[#allocation14 + $0x68] sm:$0xff]
        %v3623 = vld [vmem:[#allocation14 + $0x70] sm:$0xff]
        %v3624 = vld [vmem:[#allocation14 + $0x78] sm:$0xff]
        %v3625 = vld [vmem:[#allocation14 + $0x80] sm:$0xff]
        %v3626 = vld [vmem:[#allocation14 + $0x88] sm:$0xff]
        %v3627 = vld [vmem:[#allocation14 + $0x90] sm:$0xff]
        %v3628 = vld [vmem:[#allocation14 + $0x98] sm:$0xff]
        %v3629 = vld [vmem:[#allocation14 + $0xa0] sm:$0xff]
        %v3630 = vld [vmem:[#allocation14 + $0xa8] sm:$0xff]
        %v3631 = vld [vmem:[#allocation14 + $0xb0] sm:$0xff]
        %v3632 = vld [vmem:[#allocation14 + $0xb8] sm:$0xff]
        %v3633 = vld [vmem:[#allocation14 + $0xc0] sm:$0xff]
        %v3634 = vld [vmem:[#allocation14 + $0xc8] sm:$0xff]
        %v3635 = vld [vmem:[#allocation14 + $0xd0] sm:$0xff]
        %v3636 = vld [vmem:[#allocation14 + $0xd8] sm:$0xff]
        %v3637 = vld [vmem:[#allocation14 + $0xe0] sm:$0xff]
        %v3638 = vld [vmem:[#allocation14 + $0xe8] sm:$0xff]
        %v3639 = vld [vmem:[#allocation14 + $0xf0] sm:$0xff]
        %v3640 = vld [vmem:[#allocation14 + $0xf8] sm:$0xff]
        %v3641 = vld [vmem:[#allocation14 + $0x100] sm:$0xff]
        %v3642 = vld [vmem:[#allocation14 + $0x108] sm:$0xff]
        %v3643 = vld [vmem:[#allocation14 + $0x110] sm:$0xff]
        %v3644 = vld [vmem:[#allocation14 + $0x118] sm:$0xff]
        %v3645 = vld [vmem:[#allocation14 + $0x120] sm:$0xff]
        %v3646 = vld [vmem:[#allocation14 + $0x128] sm:$0xff]
        %v3647 = vld [vmem:[#allocation14 + $0x130] sm:$0xff]
        %v3648 = vld [vmem:[#allocation14 + $0x138] sm:$0xff]
        %v3649 = vld [vmem:[#allocation14 + $0x140] sm:$0xff]
        %v3650 = vld [vmem:[#allocation14 + $0x148] sm:$0xff]
        %v3651 = vld [vmem:[#allocation14 + $0x150] sm:$0xff]
        %v3652 = vld [vmem:[#allocation14 + $0x158] sm:$0xff]
        %v3653 = vld [vmem:[#allocation14 + $0x160] sm:$0xff]
        %v3654 = vld [vmem:[#allocation14 + $0x168] sm:$0xff]
        %v3655 = vld [vmem:[#allocation14 + $0x170] sm:$0xff]
        %v3656 = vld [vmem:[#allocation14 + $0x178] sm:$0xff]
        %v3657 = vld [vmem:[#allocation14 + $0x180] sm:$0xff]
        %v3658 = vld [vmem:[#allocation14 + $0x188] sm:$0xff]
        %v3659 = vld [vmem:[#allocation14 + $0x190] sm:$0xff]
        %v3660 = vld [vmem:[#allocation14 + $0x198] sm:$0xff]
        %v3661 = vld [vmem:[#allocation14 + $0x1a0] sm:$0xff]
        %v3662 = vld [vmem:[#allocation14 + $0x1a8] sm:$0xff]
        %v3663 = vld [vmem:[#allocation14 + $0x1b0] sm:$0xff]
        %v3664 = vld [vmem:[#allocation14 + $0x1b8] sm:$0xff]
        %v3665 = vld [vmem:[#allocation14 + $0x1c0] sm:$0xff]
        %v3666 = vld [vmem:[#allocation14 + $0x1c8] sm:$0xff]
        %v3667 = vld [vmem:[#allocation14 + $0x1d0] sm:$0xff]
        %v3668 = vld [vmem:[#allocation14 + $0x1d8] sm:$0xff]
        %v3669 = vld [vmem:[#allocation14 + $0x1e0] sm:$0xff]
        %v3670 = vld [vmem:[#allocation14 + $0x1e8] sm:$0xff]
        %v3671 = vld [vmem:[#allocation14 + $0x1f0] sm:$0xff]
        %v3672 = vld [vmem:[#allocation14 + $0x1f8] sm:$0xff]
        %v3673 = vld [vmem:[#allocation14 + $0x200] sm:$0xff]
        %v3674 = vld [vmem:[#allocation14 + $0x208] sm:$0xff]
        %v3675 = vld [vmem:[#allocation14 + $0x210] sm:$0xff]
        %v3676 = vld [vmem:[#allocation14 + $0x218] sm:$0xff]
        %v3677 = vld [vmem:[#allocation14 + $0x220] sm:$0xff]
        %v3678 = vld [vmem:[#allocation14 + $0x228] sm:$0xff]
        %v3679 = vld [vmem:[#allocation14 + $0x230] sm:$0xff]
        %v3680 = vld [vmem:[#allocation14 + $0x238] sm:$0xff]
        %v3681 = vld [vmem:[#allocation14 + $0x240] sm:$0xff]
        %v3682 = vld [vmem:[#allocation14 + $0x248] sm:$0xff]
        %v3683 = vld [vmem:[#allocation14 + $0x250] sm:$0xff]
        %v3684 = vld [vmem:[#allocation14 + $0x258] sm:$0xff]
        %v3685 = vld [vmem:[#allocation14 + $0x260] sm:$0xff]
        %v3686 = vld [vmem:[#allocation14 + $0x268] sm:$0xff]
        %v3687 = vld [vmem:[#allocation14 + $0x270] sm:$0xff]
        %v3688 = vld [vmem:[#allocation14 + $0x278] sm:$0xff]
        %v3689 = vld [vmem:[#allocation14 + $0x280] sm:$0xff]
        %v3690 = vld [vmem:[#allocation14 + $0x288] sm:$0xff]
        %v3691 = vld [vmem:[#allocation14 + $0x290] sm:$0xff]
        %v3692 = vld [vmem:[#allocation14 + $0x298] sm:$0xff]
        %v3693 = vld [vmem:[#allocation14 + $0x2a0] sm:$0xff]
        %v3694 = vld [vmem:[#allocation14 + $0x2a8] sm:$0xff]
        %v3695 = vld [vmem:[#allocation14 + $0x2b0] sm:$0xff]
        %v3696 = vld [vmem:[#allocation14 + $0x2b8] sm:$0xff]
        %v3697 = vld [vmem:[#allocation14 + $0x2c0] sm:$0xff]
        %v3698 = vld [vmem:[#allocation14 + $0x2c8] sm:$0xff]
        %v3699 = vld [vmem:[#allocation14 + $0x2d0] sm:$0xff]
        %v3700 = vld [vmem:[#allocation14 + $0x2d8] sm:$0xff]
        %v3701 = vld [vmem:[#allocation14 + $0x2e0] sm:$0xff]
        %v3702 = vld [vmem:[#allocation14 + $0x2e8] sm:$0xff]
        %v3703 = vld [vmem:[#allocation14 + $0x2f0] sm:$0xff]
        %v3704 = vld [vmem:[#allocation14 + $0x2f8] sm:$0xff]
        %v3705 = vld [vmem:[#allocation14 + $0x300] sm:$0xff]
        %v3706 = vld [vmem:[#allocation14 + $0x308] sm:$0xff]
        %v3707 = vld [vmem:[#allocation14 + $0x310] sm:$0xff]
        %v3708 = vld [vmem:[#allocation14 + $0x318] sm:$0xff]
        %v3709 = vld [vmem:[#allocation14 + $0x320] sm:$0xff]
        %v3710 = vld [vmem:[#allocation14 + $0x328] sm:$0xff]
        %v3711 = vld [vmem:[#allocation14 + $0x330] sm:$0xff]
        %v3712 = vld [vmem:[#allocation14 + $0x338] sm:$0xff]
        %v3713 = vld [vmem:[#allocation14 + $0x340] sm:$0xff]
        %v3714 = vld [vmem:[#allocation14 + $0x348] sm:$0xff]
        %v3715 = vld [vmem:[#allocation14 + $0x350] sm:$0xff]
        %v3716 = vld [vmem:[#allocation14 + $0x358] sm:$0xff]
        %v3717 = vld [vmem:[#allocation14 + $0x360] sm:$0xff]
        %v3718 = vld [vmem:[#allocation14 + $0x368] sm:$0xff]
        %v3719 = vld [vmem:[#allocation14 + $0x370] sm:$0xff]
        %v3720 = vld [vmem:[#allocation14 + $0x378] sm:$0xff]
        %v3721 = vld [vmem:[#allocation14 + $0x380] sm:$0xff]
        %v3722 = vld [vmem:[#allocation14 + $0x388] sm:$0xff]
        %v3723 = vld [vmem:[#allocation14 + $0x390] sm:$0xff]
        %v3724 = vld [vmem:[#allocation14 + $0x398] sm:$0xff]
        %v3725 = vld [vmem:[#allocation14 + $0x3a0] sm:$0xff]
        %v3726 = vld [vmem:[#allocation14 + $0x3a8] sm:$0xff]
        %v3727 = vld [vmem:[#allocation14 + $0x3b0] sm:$0xff]
        %v3728 = vld [vmem:[#allocation14 + $0x3b8] sm:$0xff]
        %v3729 = vld [vmem:[#allocation14 + $0x3c0] sm:$0xff]
        %v3730 = vld [vmem:[#allocation14 + $0x3c8] sm:$0xff]
        %v3731 = vld [vmem:[#allocation14 + $0x3d0] sm:$0xff]
        %v3732 = vld [vmem:[#allocation14 + $0x3d8] sm:$0xff]
        %v3733 = vld [vmem:[#allocation14 + $0x3e0] sm:$0xff]
        %v3734 = vld [vmem:[#allocation14 + $0x3e8] sm:$0xff]
        %v3735 = vld [vmem:[#allocation14 + $0x3f0] sm:$0xff]
        %v3736 = vld [vmem:[#allocation14 + $0x3f8] sm:$0xff]
        %v3737 = vld [vmem:[%s9] sm:$0xf]
        %v3739 = vlaneseq
        %v3740 = vshrl.u32 %v3739, 7
        %v3741 = vsub.s32 0, %v3740
        %v3742 = vrot.slane %v3737, %v3741
        %v3743 = vlaneseq
        %v3744 = vshrl.u32 %v3743, 7
        %v3745 = vsub.s32 1, %v3744
        %v3746 = vrot.slane %v3737, %v3745
        %v3747 = vlaneseq
        %v3748 = vshrl.u32 %v3747, 7
        %v3749 = vsub.s32 2, %v3748
        %v3750 = vrot.slane %v3737, %v3749
        %v3751 = vlaneseq
        %v3752 = vshrl.u32 %v3751, 7
        %v3753 = vsub.s32 3, %v3752
        %v3754 = vrot.slane %v3737, %v3753
        %v3887 = vunpack.c.l.b16 %v3609
        %v3888 = vunpack.c.h.b16 %v3609
        %v3889 = vunpack.c.l.b16 %v3610
        %v3890 = vunpack.c.h.b16 %v3610
        %v3891 = vunpack.c.l.b16 %v3611
        %v3892 = vunpack.c.h.b16 %v3611
        %v3893 = vunpack.c.l.b16 %v3612
        %v3894 = vunpack.c.h.b16 %v3612
        %v3895 = vunpack.c.l.b16 %v3613
        %v3896 = vunpack.c.h.b16 %v3613
        %v3897 = vunpack.c.l.b16 %v3614
        %v3898 = vunpack.c.h.b16 %v3614
        %v3899 = vunpack.c.l.b16 %v3615
        %v3900 = vunpack.c.h.b16 %v3615
        %v3901 = vunpack.c.l.b16 %v3616
        %v3902 = vunpack.c.h.b16 %v3616
        %v3903 = vunpack.c.l.b16 %v3617
        %v3904 = vunpack.c.h.b16 %v3617
        %v3905 = vunpack.c.l.b16 %v3618
        %v3906 = vunpack.c.h.b16 %v3618
        %v3907 = vunpack.c.l.b16 %v3619
        %v3908 = vunpack.c.h.b16 %v3619
        %v3909 = vunpack.c.l.b16 %v3620
        %v3910 = vunpack.c.h.b16 %v3620
        %v3911 = vunpack.c.l.b16 %v3621
        %v3912 = vunpack.c.h.b16 %v3621
        %v3913 = vunpack.c.l.b16 %v3622
        %v3914 = vunpack.c.h.b16 %v3622
        %v3915 = vunpack.c.l.b16 %v3623
        %v3916 = vunpack.c.h.b16 %v3623
        %v3917 = vunpack.c.l.b16 %v3624
        %v3918 = vunpack.c.h.b16 %v3624
        %v3919 = vunpack.c.l.b16 %v3625
        %v3920 = vunpack.c.h.b16 %v3625
        %v3921 = vunpack.c.l.b16 %v3626
        %v3922 = vunpack.c.h.b16 %v3626
        %v3923 = vunpack.c.l.b16 %v3627
        %v3924 = vunpack.c.h.b16 %v3627
        %v3925 = vunpack.c.l.b16 %v3628
        %v3926 = vunpack.c.h.b16 %v3628
        %v3927 = vunpack.c.l.b16 %v3629
        %v3928 = vunpack.c.h.b16 %v3629
        %v3929 = vunpack.c.l.b16 %v3630
        %v3930 = vunpack.c.h.b16 %v3630
        %v3931 = vunpack.c.l.b16 %v3631
        %v3932 = vunpack.c.h.b16 %v3631
        %v3933 = vunpack.c.l.b16 %v3632
        %v3934 = vunpack.c.h.b16 %v3632
        %v3935 = vunpack.c.l.b16 %v3633
        %v3936 = vunpack.c.h.b16 %v3633
        %v3937 = vunpack.c.l.b16 %v3634
        %v3938 = vunpack.c.h.b16 %v3634
        %v3939 = vunpack.c.l.b16 %v3635
        %v3940 = vunpack.c.h.b16 %v3635
        %v3941 = vunpack.c.l.b16 %v3636
        %v3942 = vunpack.c.h.b16 %v3636
        %v3943 = vunpack.c.l.b16 %v3637
        %v3944 = vunpack.c.h.b16 %v3637
        %v3945 = vunpack.c.l.b16 %v3638
        %v3946 = vunpack.c.h.b16 %v3638
        %v3947 = vunpack.c.l.b16 %v3639
        %v3948 = vunpack.c.h.b16 %v3639
        %v3949 = vunpack.c.l.b16 %v3640
        %v3950 = vunpack.c.h.b16 %v3640
        %v3951 = vunpack.c.l.b16 %v3641
        %v3952 = vunpack.c.h.b16 %v3641
        %v3953 = vunpack.c.l.b16 %v3642
        %v3954 = vunpack.c.h.b16 %v3642
        %v3955 = vunpack.c.l.b16 %v3643
        %v3956 = vunpack.c.h.b16 %v3643
        %v3957 = vunpack.c.l.b16 %v3644
        %v3958 = vunpack.c.h.b16 %v3644
        %v3959 = vunpack.c.l.b16 %v3645
        %v3960 = vunpack.c.h.b16 %v3645
        %v3961 = vunpack.c.l.b16 %v3646
        %v3962 = vunpack.c.h.b16 %v3646
        %v3963 = vunpack.c.l.b16 %v3647
        %v3964 = vunpack.c.h.b16 %v3647
        %v3965 = vunpack.c.l.b16 %v3648
        %v3966 = vunpack.c.h.b16 %v3648
        %v3967 = vunpack.c.l.b16 %v3649
        %v3968 = vunpack.c.h.b16 %v3649
        %v3969 = vunpack.c.l.b16 %v3650
        %v3970 = vunpack.c.h.b16 %v3650
        %v3971 = vunpack.c.l.b16 %v3651
        %v3972 = vunpack.c.h.b16 %v3651
        %v3973 = vunpack.c.l.b16 %v3652
        %v3974 = vunpack.c.h.b16 %v3652
        %v3975 = vunpack.c.l.b16 %v3653
        %v3976 = vunpack.c.h.b16 %v3653
        %v3977 = vunpack.c.l.b16 %v3654
        %v3978 = vunpack.c.h.b16 %v3654
        %v3979 = vunpack.c.l.b16 %v3655
        %v3980 = vunpack.c.h.b16 %v3655
        %v3981 = vunpack.c.l.b16 %v3656
        %v3982 = vunpack.c.h.b16 %v3656
        %v3983 = vunpack.c.l.b16 %v3657
        %v3984 = vunpack.c.h.b16 %v3657
        %v3985 = vunpack.c.l.b16 %v3658
        %v3986 = vunpack.c.h.b16 %v3658
        %v3987 = vunpack.c.l.b16 %v3659
        %v3988 = vunpack.c.h.b16 %v3659
        %v3989 = vunpack.c.l.b16 %v3660
        %v3990 = vunpack.c.h.b16 %v3660
        %v3991 = vunpack.c.l.b16 %v3661
        %v3992 = vunpack.c.h.b16 %v3661
        %v3993 = vunpack.c.l.b16 %v3662
        %v3994 = vunpack.c.h.b16 %v3662
        %v3995 = vunpack.c.l.b16 %v3663
        %v3996 = vunpack.c.h.b16 %v3663
        %v3997 = vunpack.c.l.b16 %v3664
        %v3998 = vunpack.c.h.b16 %v3664
        %v3999 = vunpack.c.l.b16 %v3665
        %v4000 = vunpack.c.h.b16 %v3665
        %v4001 = vunpack.c.l.b16 %v3666
        %v4002 = vunpack.c.h.b16 %v3666
        %v4003 = vunpack.c.l.b16 %v3667
        %v4004 = vunpack.c.h.b16 %v3667
        %v4005 = vunpack.c.l.b16 %v3668
        %v4006 = vunpack.c.h.b16 %v3668
        %v4007 = vunpack.c.l.b16 %v3669
        %v4008 = vunpack.c.h.b16 %v3669
        %v4009 = vunpack.c.l.b16 %v3670
        %v4010 = vunpack.c.h.b16 %v3670
        %v4011 = vunpack.c.l.b16 %v3671
        %v4012 = vunpack.c.h.b16 %v3671
        %v4013 = vunpack.c.l.b16 %v3672
        %v4014 = vunpack.c.h.b16 %v3672
        %v4015 = vunpack.c.l.b16 %v3673
        %v4016 = vunpack.c.h.b16 %v3673
        %v4017 = vunpack.c.l.b16 %v3674
        %v4018 = vunpack.c.h.b16 %v3674
        %v4019 = vunpack.c.l.b16 %v3675
        %v4020 = vunpack.c.h.b16 %v3675
        %v4021 = vunpack.c.l.b16 %v3676
        %v4022 = vunpack.c.h.b16 %v3676
        %v4023 = vunpack.c.l.b16 %v3677
        %v4024 = vunpack.c.h.b16 %v3677
        %v4025 = vunpack.c.l.b16 %v3678
        %v4026 = vunpack.c.h.b16 %v3678
        %v4027 = vunpack.c.l.b16 %v3679
        %v4028 = vunpack.c.h.b16 %v3679
        %v4029 = vunpack.c.l.b16 %v3680
        %v4030 = vunpack.c.h.b16 %v3680
        %v4031 = vunpack.c.l.b16 %v3681
        %v4032 = vunpack.c.h.b16 %v3681
        %v4033 = vunpack.c.l.b16 %v3682
        %v4034 = vunpack.c.h.b16 %v3682
        %v4035 = vunpack.c.l.b16 %v3683
        %v4036 = vunpack.c.h.b16 %v3683
        %v4037 = vunpack.c.l.b16 %v3684
        %v4038 = vunpack.c.h.b16 %v3684
        %v4039 = vunpack.c.l.b16 %v3685
        %v4040 = vunpack.c.h.b16 %v3685
        %v4041 = vunpack.c.l.b16 %v3686
        %v4042 = vunpack.c.h.b16 %v3686
        %v4043 = vunpack.c.l.b16 %v3687
        %v4044 = vunpack.c.h.b16 %v3687
        %v4045 = vunpack.c.l.b16 %v3688
        %v4046 = vunpack.c.h.b16 %v3688
        %v4047 = vunpack.c.l.b16 %v3689
        %v4048 = vunpack.c.h.b16 %v3689
        %v4049 = vunpack.c.l.b16 %v3690
        %v4050 = vunpack.c.h.b16 %v3690
        %v4051 = vunpack.c.l.b16 %v3691
        %v4052 = vunpack.c.h.b16 %v3691
        %v4053 = vunpack.c.l.b16 %v3692
        %v4054 = vunpack.c.h.b16 %v3692
        %v4055 = vunpack.c.l.b16 %v3693
        %v4056 = vunpack.c.h.b16 %v3693
        %v4057 = vunpack.c.l.b16 %v3694
        %v4058 = vunpack.c.h.b16 %v3694
        %v4059 = vunpack.c.l.b16 %v3695
        %v4060 = vunpack.c.h.b16 %v3695
        %v4061 = vunpack.c.l.b16 %v3696
        %v4062 = vunpack.c.h.b16 %v3696
        %v4063 = vunpack.c.l.b16 %v3697
        %v4064 = vunpack.c.h.b16 %v3697
        %v4065 = vunpack.c.l.b16 %v3698
        %v4066 = vunpack.c.h.b16 %v3698
        %v4067 = vunpack.c.l.b16 %v3699
        %v4068 = vunpack.c.h.b16 %v3699
        %v4069 = vunpack.c.l.b16 %v3700
        %v4070 = vunpack.c.h.b16 %v3700
        %v4071 = vunpack.c.l.b16 %v3701
        %v4072 = vunpack.c.h.b16 %v3701
        %v4073 = vunpack.c.l.b16 %v3702
        %v4074 = vunpack.c.h.b16 %v3702
        %v4075 = vunpack.c.l.b16 %v3703
        %v4076 = vunpack.c.h.b16 %v3703
        %v4077 = vunpack.c.l.b16 %v3704
        %v4078 = vunpack.c.h.b16 %v3704
        %v4079 = vunpack.c.l.b16 %v3705
        %v4080 = vunpack.c.h.b16 %v3705
        %v4081 = vunpack.c.l.b16 %v3706
        %v4082 = vunpack.c.h.b16 %v3706
        %v4083 = vunpack.c.l.b16 %v3707
        %v4084 = vunpack.c.h.b16 %v3707
        %v4085 = vunpack.c.l.b16 %v3708
        %v4086 = vunpack.c.h.b16 %v3708
        %v4087 = vunpack.c.l.b16 %v3709
        %v4088 = vunpack.c.h.b16 %v3709
        %v4089 = vunpack.c.l.b16 %v3710
        %v4090 = vunpack.c.h.b16 %v3710
        %v4091 = vunpack.c.l.b16 %v3711
        %v4092 = vunpack.c.h.b16 %v3711
        %v4093 = vunpack.c.l.b16 %v3712
        %v4094 = vunpack.c.h.b16 %v3712
        %v4095 = vunpack.c.l.b16 %v3713
        %v4096 = vunpack.c.h.b16 %v3713
        %v4097 = vunpack.c.l.b16 %v3714
        %v4098 = vunpack.c.h.b16 %v3714
        %v4099 = vunpack.c.l.b16 %v3715
        %v4100 = vunpack.c.h.b16 %v3715
        %v4101 = vunpack.c.l.b16 %v3716
        %v4102 = vunpack.c.h.b16 %v3716
        %v4103 = vunpack.c.l.b16 %v3717
        %v4104 = vunpack.c.h.b16 %v3717
        %v4105 = vunpack.c.l.b16 %v3718
        %v4106 = vunpack.c.h.b16 %v3718
        %v4107 = vunpack.c.l.b16 %v3719
        %v4108 = vunpack.c.h.b16 %v3719
        %v4109 = vunpack.c.l.b16 %v3720
        %v4110 = vunpack.c.h.b16 %v3720
        %v4111 = vunpack.c.l.b16 %v3721
        %v4112 = vunpack.c.h.b16 %v3721
        %v4113 = vunpack.c.l.b16 %v3722
        %v4114 = vunpack.c.h.b16 %v3722
        %v4115 = vunpack.c.l.b16 %v3723
        %v4116 = vunpack.c.h.b16 %v3723
        %v4117 = vunpack.c.l.b16 %v3724
        %v4118 = vunpack.c.h.b16 %v3724
        %v4119 = vunpack.c.l.b16 %v3725
        %v4120 = vunpack.c.h.b16 %v3725
        %v4121 = vunpack.c.l.b16 %v3726
        %v4122 = vunpack.c.h.b16 %v3726
        %v4123 = vunpack.c.l.b16 %v3727
        %v4124 = vunpack.c.h.b16 %v3727
        %v4125 = vunpack.c.l.b16 %v3728
        %v4126 = vunpack.c.h.b16 %v3728
        %v4127 = vunpack.c.l.b16 %v3729
        %v4128 = vunpack.c.h.b16 %v3729
        %v4129 = vunpack.c.l.b16 %v3730
        %v4130 = vunpack.c.h.b16 %v3730
        %v4131 = vunpack.c.l.b16 %v3731
        %v4132 = vunpack.c.h.b16 %v3731
        %v4133 = vunpack.c.l.b16 %v3732
        %v4134 = vunpack.c.h.b16 %v3732
        %v4135 = vunpack.c.l.b16 %v3733
        %v4136 = vunpack.c.h.b16 %v3733
        %v4137 = vunpack.c.l.b16 %v3734
        %v4138 = vunpack.c.h.b16 %v3734
        %v4139 = vunpack.c.l.b16 %v3735
        %v4140 = vunpack.c.h.b16 %v3735
        %v4141 = vunpack.c.l.b16 %v3736
        %v4142 = vunpack.c.h.b16 %v3736
        %v4143 = vpack.c.b16 %v3891, %v3887
        %v4144 = vpack.c.b16 %v3892, %v3888
        %v4145 = vpack.c.b16 %v3893, %v3889
        %v4146 = vpack.c.b16 %v3894, %v3890
        %v4147 = vpack.c.b16 %v3899, %v3895
        %v4148 = vpack.c.b16 %v3900, %v3896
        %v4149 = vpack.c.b16 %v3901, %v3897
        %v4150 = vpack.c.b16 %v3902, %v3898
        %v4151 = vpack.c.b16 %v3907, %v3903
        %v4152 = vpack.c.b16 %v3908, %v3904
        %v4153 = vpack.c.b16 %v3909, %v3905
        %v4154 = vpack.c.b16 %v3910, %v3906
        %v4155 = vpack.c.b16 %v3915, %v3911
        %v4156 = vpack.c.b16 %v3916, %v3912
        %v4157 = vpack.c.b16 %v3917, %v3913
        %v4158 = vpack.c.b16 %v3918, %v3914
        %v4159 = vpack.c.b16 %v3923, %v3919
        %v4160 = vpack.c.b16 %v3924, %v3920
        %v4161 = vpack.c.b16 %v3925, %v3921
        %v4162 = vpack.c.b16 %v3926, %v3922
        %v4163 = vpack.c.b16 %v3931, %v3927
        %v4164 = vpack.c.b16 %v3932, %v3928
        %v4165 = vpack.c.b16 %v3933, %v3929
        %v4166 = vpack.c.b16 %v3934, %v3930
        %v4167 = vpack.c.b16 %v3939, %v3935
        %v4168 = vpack.c.b16 %v3940, %v3936
        %v4169 = vpack.c.b16 %v3941, %v3937
        %v4170 = vpack.c.b16 %v3942, %v3938
        %v4171 = vpack.c.b16 %v3947, %v3943
        %v4172 = vpack.c.b16 %v3948, %v3944
        %v4173 = vpack.c.b16 %v3949, %v3945
        %v4174 = vpack.c.b16 %v3950, %v3946
        %v4175 = vpack.c.b16 %v3955, %v3951
        %v4176 = vpack.c.b16 %v3956, %v3952
        %v4177 = vpack.c.b16 %v3957, %v3953
        %v4178 = vpack.c.b16 %v3958, %v3954
        %v4179 = vpack.c.b16 %v3963, %v3959
        %v4180 = vpack.c.b16 %v3964, %v3960
        %v4181 = vpack.c.b16 %v3965, %v3961
        %v4182 = vpack.c.b16 %v3966, %v3962
        %v4183 = vpack.c.b16 %v3971, %v3967
        %v4184 = vpack.c.b16 %v3972, %v3968
        %v4185 = vpack.c.b16 %v3973, %v3969
        %v4186 = vpack.c.b16 %v3974, %v3970
        %v4187 = vpack.c.b16 %v3979, %v3975
        %v4188 = vpack.c.b16 %v3980, %v3976
        %v4189 = vpack.c.b16 %v3981, %v3977
        %v4190 = vpack.c.b16 %v3982, %v3978
        %v4191 = vpack.c.b16 %v3987, %v3983
        %v4192 = vpack.c.b16 %v3988, %v3984
        %v4193 = vpack.c.b16 %v3989, %v3985
        %v4194 = vpack.c.b16 %v3990, %v3986
        %v4195 = vpack.c.b16 %v3995, %v3991
        %v4196 = vpack.c.b16 %v3996, %v3992
        %v4197 = vpack.c.b16 %v3997, %v3993
        %v4198 = vpack.c.b16 %v3998, %v3994
        %v4199 = vpack.c.b16 %v4003, %v3999
        %v4200 = vpack.c.b16 %v4004, %v4000
        %v4201 = vpack.c.b16 %v4005, %v4001
        %v4202 = vpack.c.b16 %v4006, %v4002
        %v4203 = vpack.c.b16 %v4011, %v4007
        %v4204 = vpack.c.b16 %v4012, %v4008
        %v4205 = vpack.c.b16 %v4013, %v4009
        %v4206 = vpack.c.b16 %v4014, %v4010
        %v4207 = vpack.c.b16 %v4019, %v4015
        %v4208 = vpack.c.b16 %v4020, %v4016
        %v4209 = vpack.c.b16 %v4021, %v4017
        %v4210 = vpack.c.b16 %v4022, %v4018
        %v4211 = vpack.c.b16 %v4027, %v4023
        %v4212 = vpack.c.b16 %v4028, %v4024
        %v4213 = vpack.c.b16 %v4029, %v4025
        %v4214 = vpack.c.b16 %v4030, %v4026
        %v4215 = vpack.c.b16 %v4035, %v4031
        %v4216 = vpack.c.b16 %v4036, %v4032
        %v4217 = vpack.c.b16 %v4037, %v4033
        %v4218 = vpack.c.b16 %v4038, %v4034
        %v4219 = vpack.c.b16 %v4043, %v4039
        %v4220 = vpack.c.b16 %v4044, %v4040
        %v4221 = vpack.c.b16 %v4045, %v4041
        %v4222 = vpack.c.b16 %v4046, %v4042
        %v4223 = vpack.c.b16 %v4051, %v4047
        %v4224 = vpack.c.b16 %v4052, %v4048
        %v4225 = vpack.c.b16 %v4053, %v4049
        %v4226 = vpack.c.b16 %v4054, %v4050
        %v4227 = vpack.c.b16 %v4059, %v4055
        %v4228 = vpack.c.b16 %v4060, %v4056
        %v4229 = vpack.c.b16 %v4061, %v4057
        %v4230 = vpack.c.b16 %v4062, %v4058
        %v4231 = vpack.c.b16 %v4067, %v4063
        %v4232 = vpack.c.b16 %v4068, %v4064
        %v4233 = vpack.c.b16 %v4069, %v4065
        %v4234 = vpack.c.b16 %v4070, %v4066
        %v4235 = vpack.c.b16 %v4075, %v4071
        %v4236 = vpack.c.b16 %v4076, %v4072
        %v4237 = vpack.c.b16 %v4077, %v4073
        %v4238 = vpack.c.b16 %v4078, %v4074
        %v4239 = vpack.c.b16 %v4083, %v4079
        %v4240 = vpack.c.b16 %v4084, %v4080
        %v4241 = vpack.c.b16 %v4085, %v4081
        %v4242 = vpack.c.b16 %v4086, %v4082
        %v4243 = vpack.c.b16 %v4091, %v4087
        %v4244 = vpack.c.b16 %v4092, %v4088
        %v4245 = vpack.c.b16 %v4093, %v4089
        %v4246 = vpack.c.b16 %v4094, %v4090
        %v4247 = vpack.c.b16 %v4099, %v4095
        %v4248 = vpack.c.b16 %v4100, %v4096
        %v4249 = vpack.c.b16 %v4101, %v4097
        %v4250 = vpack.c.b16 %v4102, %v4098
        %v4251 = vpack.c.b16 %v4107, %v4103
        %v4252 = vpack.c.b16 %v4108, %v4104
        %v4253 = vpack.c.b16 %v4109, %v4105
        %v4254 = vpack.c.b16 %v4110, %v4106
        %v4255 = vpack.c.b16 %v4115, %v4111
        %v4256 = vpack.c.b16 %v4116, %v4112
        %v4257 = vpack.c.b16 %v4117, %v4113
        %v4258 = vpack.c.b16 %v4118, %v4114
        %v4259 = vpack.c.b16 %v4123, %v4119
        %v4260 = vpack.c.b16 %v4124, %v4120
        %v4261 = vpack.c.b16 %v4125, %v4121
        %v4262 = vpack.c.b16 %v4126, %v4122
        %v4263 = vpack.c.b16 %v4131, %v4127
        %v4264 = vpack.c.b16 %v4132, %v4128
        %v4265 = vpack.c.b16 %v4133, %v4129
        %v4266 = vpack.c.b16 %v4134, %v4130
        %v4267 = vpack.c.b16 %v4139, %v4135
        %v4268 = vpack.c.b16 %v4140, %v4136
        %v4269 = vpack.c.b16 %v4141, %v4137
        %v4270 = vpack.c.b16 %v4142, %v4138
        %4399 = vmatprep.subr.bf16.mxu0 %v4144
        %4400 = vmatpush1.bf16.msra.mxu0 %v4143
        %4401 = vmatprep.subr.bf16.mxu0 %v4148
        %4402 = vmatpush1.bf16.msra.mxu0 %v4147
        %4403 = vmatprep.subr.bf16.mxu0 %v4152
        %4404 = vmatpush1.bf16.msra.mxu0 %v4151
        %4405 = vmatprep.subr.bf16.mxu0 %v4156
        %4406 = vmatpush1.bf16.msra.mxu0 %v4155
        %4407 = vmatprep.subr.bf16.mxu0 %v4160
        %4408 = vmatpush1.bf16.msra.mxu0 %v4159
        %4409 = vmatprep.subr.bf16.mxu0 %v4164
        %4410 = vmatpush1.bf16.msra.mxu0 %v4163
        %4411 = vmatprep.subr.bf16.mxu0 %v4168
        %4412 = vmatpush1.bf16.msra.mxu0 %v4167
        %4413 = vmatprep.subr.bf16.mxu0 %v4172
        %4414 = vmatpush1.bf16.msra.mxu0 %v4171
        %4415 = vmatprep.subr.bf16.mxu0 %v4176
        %4416 = vmatpush1.bf16.msra.mxu0 %v4175
        %4417 = vmatprep.subr.bf16.mxu0 %v4180
        %4418 = vmatpush1.bf16.msra.mxu0 %v4179
        %4419 = vmatprep.subr.bf16.mxu0 %v4184
        %4420 = vmatpush1.bf16.msra.mxu0 %v4183
        %4421 = vmatprep.subr.bf16.mxu0 %v4188
        %4422 = vmatpush1.bf16.msra.mxu0 %v4187
        %4423 = vmatprep.subr.bf16.mxu0 %v4192
        %4424 = vmatpush1.bf16.msra.mxu0 %v4191
        %4425 = vmatprep.subr.bf16.mxu0 %v4196
        %4426 = vmatpush1.bf16.msra.mxu0 %v4195
        %4427 = vmatprep.subr.bf16.mxu0 %v4200
        %4428 = vmatpush1.bf16.msra.mxu0 %v4199
        %4429 = vmatprep.subr.bf16.mxu0 %v4204
        %4430 = vmatpush1.bf16.msra.mxu0 %v4203
        %4431 = vmatprep.mubr.bf16.mxu0 %v3606
        %4432 = vmatmul.mubr.bf16.gmra.mrb[0].mxu0 %v3605
        %v4433 = vpop.f32.mrb[0].mxu0
        %v4434 = vadd.f32 %v3742, %v4433
        %v4435 = vpop.f32.mrb[0].mxu0
        %v4436 = vadd.f32 %v3746, %v4435
        %v4437 = vpop.f32.mrb[0].mxu0
        %v4438 = vpop.f32.mrb[0].mxu0
        %4439 = vdwg.mxu0
        %4440 = vmatprep.subr.bf16.mxu0 %v4208
        %4441 = vmatpush1.bf16.msra.mxu0 %v4207
        %4442 = vmatprep.subr.bf16.mxu0 %v4212
        %4443 = vmatpush1.bf16.msra.mxu0 %v4211
        %4444 = vmatprep.subr.bf16.mxu0 %v4216
        %4445 = vmatpush1.bf16.msra.mxu0 %v4215
        %4446 = vmatprep.subr.bf16.mxu0 %v4220
        %4447 = vmatpush1.bf16.msra.mxu0 %v4219
        %4448 = vmatprep.subr.bf16.mxu0 %v4224
        %4449 = vmatpush1.bf16.msra.mxu0 %v4223
        %4450 = vmatprep.subr.bf16.mxu0 %v4228
        %4451 = vmatpush1.bf16.msra.mxu0 %v4227
        %4452 = vmatprep.subr.bf16.mxu0 %v4232
        %4453 = vmatpush1.bf16.msra.mxu0 %v4231
        %4454 = vmatprep.subr.bf16.mxu0 %v4236
        %4455 = vmatpush1.bf16.msra.mxu0 %v4235
        %4456 = vmatprep.subr.bf16.mxu0 %v4240
        %4457 = vmatpush1.bf16.msra.mxu0 %v4239
        %4458 = vmatprep.subr.bf16.mxu0 %v4244
        %4459 = vmatpush1.bf16.msra.mxu0 %v4243
        %4460 = vmatprep.subr.bf16.mxu0 %v4248
        %4461 = vmatpush1.bf16.msra.mxu0 %v4247
        %4462 = vmatprep.subr.bf16.mxu0 %v4252
        %4463 = vmatpush1.bf16.msra.mxu0 %v4251
        %4464 = vmatprep.subr.bf16.mxu0 %v4256
        %4465 = vmatpush1.bf16.msra.mxu0 %v4255
        %4466 = vmatprep.subr.bf16.mxu0 %v4260
        %4467 = vmatpush1.bf16.msra.mxu0 %v4259
        %4468 = vmatprep.subr.bf16.mxu0 %v4264
        %4469 = vmatpush1.bf16.msra.mxu0 %v4263
        %4470 = vmatprep.subr.bf16.mxu0 %v4268
        %4471 = vmatpush1.bf16.msra.mxu0 %v4267
        %4472 = vmatprep.mubr.bf16.mxu0 %v3608
        %4473 = vmatmul.mubr.bf16.gmra.mrb[0].mxu0 %v3607
        %v4474 = vpop.f32.mrb[0].mxu0
        %v4475 = vadd.f32 %v4434, %v4474
        %v4476 = vpop.f32.mrb[0].mxu0
        %v4477 = vadd.f32 %v4436, %v4476
        %v4478 = vpop.f32.mrb[0].mxu0
        %v4479 = vpop.f32.mrb[0].mxu0
        %4480 = vdwg.mxu0
        %4481 = vmatprep.subr.bf16.mxu0 %v4146
        %4482 = vmatpush1.bf16.msra.mxu0 %v4145
        %4483 = vmatprep.subr.bf16.mxu0 %v4150
        %4484 = vmatpush1.bf16.msra.mxu0 %v4149
        %4485 = vmatprep.subr.bf16.mxu0 %v4154
        %4486 = vmatpush1.bf16.msra.mxu0 %v4153
        %4487 = vmatprep.subr.bf16.mxu0 %v4158
        %4488 = vmatpush1.bf16.msra.mxu0 %v4157
        %4489 = vmatprep.subr.bf16.mxu0 %v4162
        %4490 = vmatpush1.bf16.msra.mxu0 %v4161
        %4491 = vmatprep.subr.bf16.mxu0 %v4166
        %4492 = vmatpush1.bf16.msra.mxu0 %v4165
        %4493 = vmatprep.subr.bf16.mxu0 %v4170
        %4494 = vmatpush1.bf16.msra.mxu0 %v4169
        %4495 = vmatprep.subr.bf16.mxu0 %v4174
        %4496 = vmatpush1.bf16.msra.mxu0 %v4173
        %4497 = vmatprep.subr.bf16.mxu0 %v4178
        %4498 = vmatpush1.bf16.msra.mxu0 %v4177
        %4499 = vmatprep.subr.bf16.mxu0 %v4182
        %4500 = vmatpush1.bf16.msra.mxu0 %v4181
        %4501 = vmatprep.subr.bf16.mxu0 %v4186
        %4502 = vmatpush1.bf16.msra.mxu0 %v4185
        %4503 = vmatprep.subr.bf16.mxu0 %v4190
        %4504 = vmatpush1.bf16.msra.mxu0 %v4189
        %4505 = vmatprep.subr.bf16.mxu0 %v4194
        %4506 = vmatpush1.bf16.msra.mxu0 %v4193
        %4507 = vmatprep.subr.bf16.mxu0 %v4198
        %4508 = vmatpush1.bf16.msra.mxu0 %v4197
        %4509 = vmatprep.subr.bf16.mxu0 %v4202
        %4510 = vmatpush1.bf16.msra.mxu0 %v4201
        %4511 = vmatprep.subr.bf16.mxu0 %v4206
        %4512 = vmatpush1.bf16.msra.mxu0 %v4205
        %4513 = vmatprep.mubr.bf16.mxu0 %v3606
        %4514 = vmatmul.mubr.bf16.gmra.mrb[0].mxu0 %v3605
        %v4515 = vpop.f32.mrb[0].mxu0
        %v4516 = vadd.f32 %v3750, %v4515
        %v4517 = vpop.f32.mrb[0].mxu0
        %v4518 = vadd.f32 %v3754, %v4517
        %v4519 = vpop.f32.mrb[0].mxu0
        %v4520 = vpop.f32.mrb[0].mxu0
        %4521 = vdwg.mxu0
        %4522 = vmatprep.subr.bf16.mxu0 %v4210
        %4523 = vmatpush1.bf16.msra.mxu0 %v4209
        %4524 = vmatprep.subr.bf16.mxu0 %v4214
        %4525 = vmatpush1.bf16.msra.mxu0 %v4213
        %4526 = vmatprep.subr.bf16.mxu0 %v4218
        %4527 = vmatpush1.bf16.msra.mxu0 %v4217
        %4528 = vmatprep.subr.bf16.mxu0 %v4222
        %4529 = vmatpush1.bf16.msra.mxu0 %v4221
        %4530 = vmatprep.subr.bf16.mxu0 %v4226
        %4531 = vmatpush1.bf16.msra.mxu0 %v4225
        %4532 = vmatprep.subr.bf16.mxu0 %v4230
        %4533 = vmatpush1.bf16.msra.mxu0 %v4229
        %4534 = vmatprep.subr.bf16.mxu0 %v4234
        %4535 = vmatpush1.bf16.msra.mxu0 %v4233
        %4536 = vmatprep.subr.bf16.mxu0 %v4238
        %4537 = vmatpush1.bf16.msra.mxu0 %v4237
        %4538 = vmatprep.subr.bf16.mxu0 %v4242
        %4539 = vmatpush1.bf16.msra.mxu0 %v4241
        %4540 = vmatprep.subr.bf16.mxu0 %v4246
        %4541 = vmatpush1.bf16.msra.mxu0 %v4245
        %4542 = vmatprep.subr.bf16.mxu0 %v4250
        %4543 = vmatpush1.bf16.msra.mxu0 %v4249
        %4544 = vmatprep.subr.bf16.mxu0 %v4254
        %4545 = vmatpush1.bf16.msra.mxu0 %v4253
        %4546 = vmatprep.subr.bf16.mxu0 %v4258
        %4547 = vmatpush1.bf16.msra.mxu0 %v4257
        %4548 = vmatprep.subr.bf16.mxu0 %v4262
        %4549 = vmatpush1.bf16.msra.mxu0 %v4261
        %4550 = vmatprep.subr.bf16.mxu0 %v4266
        %4551 = vmatpush1.bf16.msra.mxu0 %v4265
        %4552 = vmatprep.subr.bf16.mxu0 %v4270
        %4553 = vmatpush1.bf16.msra.mxu0 %v4269
        %4554 = vmatprep.mubr.bf16.mxu0 %v3608
        %4555 = vmatmul.mubr.bf16.gmra.mrb[0].mxu0 %v3607
        %v4556 = vpop.f32.mrb[0].mxu0
        %v4557 = vadd.f32 %v4516, %v4556
        %v4558 = vpop.f32.mrb[0].mxu0
        %v4559 = vadd.f32 %v4518, %v4558
        %v4560 = vpop.f32.mrb[0].mxu0
        %v4561 = vpop.f32.mrb[0].mxu0
        %4562 = vdwg.mxu0
        %s4563 = sld [smem:[#allocation2]]
        %vm4564 = vcmp.ge.f32.partialorder %v4475, 0.0
        %vm4565 = vcmp.ge.f32.partialorder %v4477, 0.0
        %vm4566 = vcmp.ge.f32.partialorder %v4557, 0.0
        %vm4567 = vcmp.ge.f32.partialorder %v4559, 0.0
        %v4568 = vstv %s4563
        %v4569 = vmul.f32 %v4568, %v4475
        %v4570 = vmul.f32 %v4568, %v4477
        %v4571 = vmul.f32 %v4568, %v4557
        %v4572 = vmul.f32 %v4568, %v4559
        %v4573 = vsel %vm4564, %v4475, %v4569
        %v4574 = vsel %vm4565, %v4477, %v4570
        %v4575 = vsel %vm4566, %v4557, %v4571
        %v4576 = vsel %vm4567, %v4559, %v4572
        %v4577 = vld [vmem:[%s11] sm:$0xf]
        %v4578 = vld [vmem:[%s12] sm:$0xf]
        %v4579 = vadd.f32 %v4573, %v4574
        %v4580 = vadd.f32 %v4579, %v4575
        %v4581 = vadd.f32 %v4580, %v4576
        %4582 = vadd.xlane.f32.xlu0 %v4581
        %v4583 = vpop.xlane.xlu0 %4582
        %v4584 = vrcp.pop 512.0
        %v4585 = vmul.f32 %v4583, %v4584
        %v4586 = vmul.f32 %v4573, %v4573
        %v4587 = vmul.f32 %v4574, %v4574
        %v4588 = vmul.f32 %v4575, %v4575
        %v4589 = vmul.f32 %v4576, %v4576
        %v4590 = vadd.f32 %v4586, %v4587
        %v4591 = vadd.f32 %v4590, %v4588
        %v4592 = vadd.f32 %v4591, %v4589
        %4593 = vadd.xlane.f32.xlu0 %v4592
        %v4594 = vpop.xlane.xlu0 %4593
        %v4595 = vmul.f32 %v4594, %v4584
        %v4596 = vmul.f32 %v4585, %v4585
        %v4597 = vsub.f32 %v4595, %v4596
        %v4598 = vmax.f32 %v4597, 0.0
        %v4599 = vsub.f32 %v4573, %v4585
        %v4600 = vsub.f32 %v4574, %v4585
        %v4601 = vsub.f32 %v4575, %v4585
        %v4602 = vsub.f32 %v4576, %v4585
        %v4603 = vadd.f32 %v4598, 1e-05
        %v4604 = vrsqrt.pop %v4603
        %v4605 = vmul.f32 %v4599, %v4604
        %v4606 = vmul.f32 %v4600, %v4604
        %v4607 = vmul.f32 %v4601, %v4604
        %v4608 = vmul.f32 %v4602, %v4604
        %v4610 = vlaneseq
        %v4611 = vshrl.u32 %v4610, 7
        %v4612 = vsub.s32 0, %v4611
        %v4613 = vrot.slane %v4577, %v4612
        %v4614 = vlaneseq
        %v4615 = vshrl.u32 %v4614, 7
        %v4616 = vsub.s32 1, %v4615
        %v4617 = vrot.slane %v4577, %v4616
        %v4618 = vlaneseq
        %v4619 = vshrl.u32 %v4618, 7
        %v4620 = vsub.s32 2, %v4619
        %v4621 = vrot.slane %v4577, %v4620
        %v4622 = vlaneseq
        %v4623 = vshrl.u32 %v4622, 7
        %v4624 = vsub.s32 3, %v4623
        %v4625 = vrot.slane %v4577, %v4624
        %v4630 = vmul.f32 %v4605, %v4613
        %v4631 = vmul.f32 %v4606, %v4617
        %v4632 = vmul.f32 %v4607, %v4621
        %v4633 = vmul.f32 %v4608, %v4625
        %v4635 = vlaneseq
        %v4636 = vshrl.u32 %v4635, 7
        %v4637 = vsub.s32 0, %v4636
        %v4638 = vrot.slane %v4578, %v4637
        %v4639 = vlaneseq
        %v4640 = vshrl.u32 %v4639, 7
        %v4641 = vsub.s32 1, %v4640
        %v4642 = vrot.slane %v4578, %v4641
        %v4643 = vlaneseq
        %v4644 = vshrl.u32 %v4643, 7
        %v4645 = vsub.s32 2, %v4644
        %v4646 = vrot.slane %v4578, %v4645
        %v4647 = vlaneseq
        %v4648 = vshrl.u32 %v4647, 7
        %v4649 = vsub.s32 3, %v4648
        %v4650 = vrot.slane %v4578, %v4649
        %v4655 = vadd.f32 %v4630, %v4638
        %v4656 = vadd.f32 %v4631, %v4642
        %v4657 = vadd.f32 %v4632, %v4646
        %v4658 = vadd.f32 %v4633, %v4650
        %v4659 = vadd.f32 %v4655, %v3597
        %v4660 = vadd.f32 %v4656, %v3598
        %v4661 = vadd.f32 %v4657, %v3599
        %v4662 = vadd.f32 %v4658, %v3600
        %v4663 = vld [vmem:[%s13] sm:$0xf]
        %v4664 = vld [vmem:[%s14] sm:$0xf]
        %v4665 = vadd.f32 %v4659, %v4660
        %v4666 = vadd.f32 %v4665, %v4661
        %v4667 = vadd.f32 %v4666, %v4662
        %4668 = vadd.xlane.f32.xlu0 %v4667
        %v4669 = vpop.xlane.xlu0 %4668
        %v4670 = vmul.f32 %v4669, %v4584
        %v4671 = vmul.f32 %v4659, %v4659
        %v4672 = vmul.f32 %v4660, %v4660
        %v4673 = vmul.f32 %v4661, %v4661
        %v4674 = vmul.f32 %v4662, %v4662
        %v4675 = vadd.f32 %v4671, %v4672
        %v4676 = vadd.f32 %v4675, %v4673
        %v4677 = vadd.f32 %v4676, %v4674
        %4678 = vadd.xlane.f32.xlu0 %v4677
        %v4679 = vpop.xlane.xlu0 %4678
        %v4680 = vmul.f32 %v4679, %v4584
        %v4681 = vmul.f32 %v4670, %v4670
        %v4682 = vsub.f32 %v4680, %v4681
        %v4683 = vmax.f32 %v4682, 0.0
        %v4684 = vsub.f32 %v4659, %v4670
        %v4685 = vsub.f32 %v4660, %v4670
        %v4686 = vsub.f32 %v4661, %v4670
        %v4687 = vsub.f32 %v4662, %v4670
        %v4688 = vadd.f32 %v4683, 1e-05
        %v4689 = vrsqrt.pop %v4688
        %v4690 = vmul.f32 %v4684, %v4689
        %v4691 = vmul.f32 %v4685, %v4689
        %v4692 = vmul.f32 %v4686, %v4689
        %v4693 = vmul.f32 %v4687, %v4689
        %v4695 = vlaneseq
        %v4696 = vshrl.u32 %v4695, 7
        %v4697 = vsub.s32 0, %v4696
        %v4698 = vrot.slane %v4663, %v4697
        %v4699 = vlaneseq
        %v4700 = vshrl.u32 %v4699, 7
        %v4701 = vsub.s32 1, %v4700
        %v4702 = vrot.slane %v4663, %v4701
        %v4703 = vlaneseq
        %v4704 = vshrl.u32 %v4703, 7
        %v4705 = vsub.s32 2, %v4704
        %v4706 = vrot.slane %v4663, %v4705
        %v4707 = vlaneseq
        %v4708 = vshrl.u32 %v4707, 7
        %v4709 = vsub.s32 3, %v4708
        %v4710 = vrot.slane %v4663, %v4709
        %v4715 = vmul.f32 %v4690, %v4698
        %v4716 = vmul.f32 %v4691, %v4702
        %v4717 = vmul.f32 %v4692, %v4706
        %v4718 = vmul.f32 %v4693, %v4710
        %v4720 = vlaneseq
        %v4721 = vshrl.u32 %v4720, 7
        %v4722 = vsub.s32 0, %v4721
        %v4723 = vrot.slane %v4664, %v4722
        %v4724 = vlaneseq
        %v4725 = vshrl.u32 %v4724, 7
        %v4726 = vsub.s32 1, %v4725
        %v4727 = vrot.slane %v4664, %v4726
        %v4728 = vlaneseq
        %v4729 = vshrl.u32 %v4728, 7
        %v4730 = vsub.s32 2, %v4729
        %v4731 = vrot.slane %v4664, %v4730
        %v4732 = vlaneseq
        %v4733 = vshrl.u32 %v4732, 7
        %v4734 = vsub.s32 3, %v4733
        %v4735 = vrot.slane %v4664, %v4734
        %v4740 = vadd.f32 %v4715, %v4723
        %v4741 = vadd.f32 %v4716, %v4727
        %v4742 = vadd.f32 %v4717, %v4731
        %v4743 = vadd.f32 %v4718, %v4735
        %v4744 = vpack.c.bf16 %v4740, %v4740
        %v4745 = vpack.c.bf16 %v4741, %v4741
        %v4746 = vpack.c.bf16 %v4742, %v4742
        %v4747 = vpack.c.bf16 %v4743, %v4743
        %v4752 = vunpack.c.l.b16 %v4744
        %v4753 = vunpack.c.l.b16 %v4745
        %v4754 = vunpack.c.l.b16 %v4746
        %v4755 = vunpack.c.l.b16 %v4747
        %v4756 = vpack.c.b16 %v4753, %v4752
        %v4757 = vpack.c.b16 %v4755, %v4754
        %4760 = vst [vmem:[%s673] sm:$0xff] %v4756
        %4761 = vst [vmem:[%s673 + $0x8] sm:$0xff] %v4757
        %4762 = vst [vmem:[%s680] sm:$0xff] %v3597
        %4763 = vst [vmem:[%s680 + $0x8] sm:$0xff] %v3598
        %4764 = vst [vmem:[%s680 + $0x10] sm:$0xff] %v3599
        %4765 = vst [vmem:[%s680 + $0x18] sm:$0xff] %v3600
        %s4766 = sand.u32 %s381, 1
        %s4767 = scalar_lea.sflag [#allocation5], %s4766
        %s4768 = sand.u32 %s381, 1
        %s4769 = smul.addr %s4768, 16
        %s4770 = scalar_lea.vmem [#allocation15], %s4769
        %s4771 = sand.u32 %s407, 1
        %s4772 = scalar_lea.sflag [#allocation17], %s4771
        %s4773 = sand.u32 %s407, 1
        %s4774 = smul.addr %s4773, 32
        %s4775 = scalar_lea.vmem [#allocation16], %s4774
        // Predicated region
        $region109: #{_gsfusion_call.1} parent=79 // pred_check
          %p4776 = pneg %p391
        $region110: #{_gsfusion_call.1} parent=79 // pred_check_branch
          %4778 = sbr.rel (%p4776) target = $region112
        $region111: #{_gsfusion_call.1} parent=79 // pred_region
          %s4780 = ssub.s32 256, 256
          %4781 = vsyncadd %s4767, %s4780
          %s4782 = smul.addr %s43, 4
          %s4783 = smul.addr %s4782, 64
          %s4784 = scalar_lea.hbm %s15, %s4783
          %s4786 = sshll.u32 %s4770, 4
          %s4787 = int_to_ptr.vmem [resolvable:$true] %s4786
          %4789 = dma.vmem_to_hbm [thread:$0]  %s4787, 256, %s4784, %s4767
        $region112: #{_gsfusion_call.1} parent=79 // pred_fallthru
          _
        // Predicated region
        $region113: #{_gsfusion_call.1} parent=79 // pred_check
          %p4790 = pneg %p417
        $region114: #{_gsfusion_call.1} parent=79 // pred_check_branch
          %4792 = sbr.rel (%p4790) target = $region116
        $region115: #{_gsfusion_call.1} parent=79 // pred_region
          %s4794 = ssub.s32 512, 512
          %4795 = vsyncadd %s4772, %s4794
          %s4796 = smul.addr %s43, 4
          %s4797 = smul.addr %s4796, 128
          %s4798 = scalar_lea.hbm %s16, %s4797
          %s4800 = sshll.u32 %s4775, 4
          %s4801 = int_to_ptr.vmem [resolvable:$true] %s4800
          %4803 = dma.vmem_to_hbm [thread:$0]  %s4801, 512, %s4798, %s4772
        $region116: #{_gsfusion_call.1} parent=79 // pred_fallthru
          _
      $region80: #{_gsfusion_call.1} parent=5 // pred_fallthru
        _
      %p4804 = scmp.le.s32.totalorder 2, %s38
      // Predicated region
      $region117: #{_gsfusion_call.1} parent=5 // pred_check
        %p4805 = pneg %p4804
      $region118: #{_gsfusion_call.1} parent=5 // pred_check_branch
        %4807 = sbr.rel (%p4805) target = $region120
      $region119: #{_gsfusion_call.1} parent=5 // pred_region
        %s4808 = ssub.s32 %s38, 2
        // Predicated region
        $region121: #{_gsfusion_call.1} parent=119 // pred_check
          %p4809 = pneg %p397
        $region122: #{_gsfusion_call.1} parent=119 // pred_check_branch
          %4811 = sbr.rel (%p4809) target = $region124
        $region123: #{_gsfusion_call.1} parent=119 // pred_region
          %s4812 = sand.u32 %s382, 1
          %s4813 = scalar_lea.sflag [#allocation5], %s4812
          %s4814 = sand.u32 %s382, 1
          %s4815 = smul.addr %s4814, 16
          %s4816 = scalar_lea.vmem [#allocation15], %s4815
          %4817 = dma.done %s4813, 256
        $region124: #{_gsfusion_call.1} parent=119 // pred_fallthru
          _
        // Predicated region
        $region125: #{_gsfusion_call.1} parent=119 // pred_check
          %p4818 = pneg %p423
        $region126: #{_gsfusion_call.1} parent=119 // pred_check_branch
          %4820 = sbr.rel (%p4818) target = $region128
        $region127: #{_gsfusion_call.1} parent=119 // pred_region
          %s4821 = sand.u32 %s408, 1
          %s4822 = scalar_lea.sflag [#allocation17], %s4821
          %s4823 = sand.u32 %s408, 1
          %s4824 = smul.addr %s4823, 32
          %s4825 = scalar_lea.vmem [#allocation16], %s4824
          %4826 = dma.done %s4822, 512
        $region128: #{_gsfusion_call.1} parent=119 // pred_fallthru
          _
      $region120: #{_gsfusion_call.1} parent=5 // pred_fallthru
        _
    $region6: #{_gsfusion_call.1} parent=1 // loop_footer
      %s42 = sadd.s32 1, %s38
    $region7: #{_gsfusion_call.1} parent=1 // loop_footer_branch
      %37 = sbr.rel target = $region3
    $region8: #{_gsfusion_call.1} parent=1 // loop_exit
      _
    %4827 = vsyncpa [#allocation4], 1
    %s4828 = scalar_lea.sflag [#allocation4], 1
    %4829 = vsyncpa %s4828, 1
    %4830 = vsyncpa [#allocation7], 1
    %s4831 = scalar_lea.sflag [#allocation7], 1
    %4832 = vsyncpa %s4831, 1
    %4833 = vsyncpa [#allocation10], 1
    %4834 = vsyncpa [#allocation13], 1
    %4835 = vsyncpa [#allocation5], 1
    %s4836 = scalar_lea.sflag [#allocation5], 1
    %4837 = vsyncpa %s4836, 1
    %4838 = vsyncpa [#allocation17], 1
    %s4839 = scalar_lea.sflag [#allocation17], 1
    %4840 = vsyncpa %s4839, 1

</llo_original>
